<compile_context>
chip_gen: v7x
topology: tpu7x:2x2x1
jax: 0.10.0
libtpu: 0.0.40
codegen_flags: <defaults>
</compile_context>

<pallas_src>
import functools

import jax
import jax.numpy as jnp
from jax.experimental import pallas as pl
from jax.experimental.pallas import tpu as pltpu

DIM = 32                      # model dim
EXPANSION = 2
INNER = DIM * EXPANSION       # 64
K = 31                        # depthwise kernel size
PAD = (K - 1) // 2            # get_padding(31) = 15
LN_EPS = 1e-5
BN_EPS = 1e-5


def _conformer_conv_kernel(x_ref, ln_g_ref, ln_b_ref, w1t_ref, b1_ref,
                           dw_w_ref, dw_b_ref, bn_s_ref, bn_sh_ref,
                           w2t_ref, b2_ref, o_ref, upad_ref, *, n):
    """One batch element per grid step, (channels, sequence) layout, fp32."""
    x = x_ref[...]                                    # (DIM, n)

    # ---- LayerNorm over the channel (sublane) axis ----
    mean = jnp.mean(x, axis=0, keepdims=True)         # (1, n)
    var = jnp.mean((x - mean) ** 2, axis=0, keepdims=True)
    xn = (x - mean) * jax.lax.rsqrt(var + LN_EPS)
    xn = xn * ln_g_ref[...] + ln_b_ref[...]           # (DIM,1) bcast over lanes

    # ---- pointwise conv1 as ONE fused matmul + GLU ----
    # (2*INNER, DIM) @ (DIM, n) -> (128, n); value/gate are aligned sublane
    # slices (rows 0:64 / 64:128), so no lane slicing and half the MXU pushes.
    h = jnp.dot(w1t_ref[...], xn,
                preferred_element_type=jnp.float32) + b1_ref[...]
    u = h[:INNER, :] * jax.nn.sigmoid(h[INNER:, :])   # (INNER, n)

    # ---- depthwise conv, kernel K, 'same' padding, groups=INNER ----
    # u is written once into a lane-padded scratch; each tap is a full-width
    # 2-D lane-shifted slice (XLU work) * one (INNER, 1) column of the weight.
    zhalo = jnp.zeros((INNER, PAD), jnp.float32)
    upad_ref[:, 0:PAD] = zhalo
    upad_ref[:, PAD + n:PAD + n + PAD] = zhalo
    upad_ref[:, PAD:PAD + n] = u

    dw = dw_w_ref[...]                                # (INNER, K), loaded once
    acc = jnp.zeros((INNER, n), jnp.float32)
    for k in range(K):                                # static unroll, 31 taps
        acc = acc + upad_ref[:, k:k + n] * dw[:, k:k + 1]
    y = acc + dw_b_ref[...]                           # (INNER, n)

    # ---- BatchNorm1d (inference mode, folded scale/shift) + SiLU ----
    y = y * bn_s_ref[...] + bn_sh_ref[...]
    y = y * jax.nn.sigmoid(y)                         # SiLU

    # ---- pointwise conv2 (INNER -> DIM); Dropout(p=0.0) is the identity ----
    o_ref[...] = (jnp.dot(w2t_ref[...], y, preferred_element_type=jnp.float32)
                  + b2_ref[...])


def conformer_conv_module(x, ln_g, ln_b, w1, b1, dw_w, dw_b, bn_s, bn_sh,
                          w2, b2):
    B, N, D = x.shape
    assert D == DIM
    npad = N + 2 * PAD                                # padded depthwise lanes

    # Lane-dense layout: channels on sublanes, sequence on lanes.
    xt = jnp.transpose(x, (0, 2, 1)).reshape(B * D, N)

    # Trace-time (XLA-side) re-layout of the small parameter tensors.
    ln_g_t, ln_b_t = ln_g.T, ln_b.T                   # (D, 1)
    w1t, b1t = w1.T, b1.T                             # (2*INNER, D), (2*INNER, 1)
    dw_w_t, dw_b_t = dw_w.T, dw_b.T                   # (INNER, K), (INNER, 1)
    bn_s_t, bn_sh_t = bn_s.T, bn_sh.T                 # (INNER, 1)
    w2t, b2t = w2.T, b2.T                             # (D, INNER), (D, 1)

    full = lambda b: (0, 0)

    flops = B * N * (2 * D * 2 * INNER                # conv1 (fused GLU halves)
                     + 2 * K * INNER                  # depthwise taps (mul+add)
                     + 2 * INNER * D                  # conv2
                     + 6 * D + 8 * INNER)             # LN / GLU / BN / SiLU
    transcendentals = B * N * (2 * INNER + 1)         # two sigmoids + rsqrt
    bytes_accessed = 4 * (2 * B * N * D
                          + D * 2 * INNER + 2 * INNER
                          + K * INNER + 3 * INNER
                          + INNER * D + D)

    out = pl.pallas_call(
        functools.partial(_conformer_conv_kernel, n=N),
        out_shape=jax.ShapeDtypeStruct((B * D, N), jnp.float32),
        grid=(B,),
        in_specs=[
            pl.BlockSpec((D, N), lambda b: (b, 0)),          # x (one batch elt)
            pl.BlockSpec((D, 1), full),                      # ln gamma
            pl.BlockSpec((D, 1), full),                      # ln beta
            pl.BlockSpec((2 * INNER, D), full),              # conv1 W^T (fused)
            pl.BlockSpec((2 * INNER, 1), full),              # conv1 bias
            pl.BlockSpec((INNER, K), full),                  # depthwise weight
            pl.BlockSpec((INNER, 1), full),                  # depthwise bias
            pl.BlockSpec((INNER, 1), full),                  # bn scale (folded)
            pl.BlockSpec((INNER, 1), full),                  # bn shift (folded)
            pl.BlockSpec((D, INNER), full),                  # conv2 W^T
            pl.BlockSpec((D, 1), full),                      # conv2 bias
        ],
        out_specs=pl.BlockSpec((D, N), lambda b: (b, 0)),
        scratch_shapes=[pltpu.VMEM((INNER, npad), jnp.float32)],
        compiler_params=pltpu.CompilerParams(
            dimension_semantics=("parallel",),       # batch elements independent
            vmem_limit_bytes=32 * 1024 * 1024),
        cost_estimate=pl.CostEstimate(flops=flops,
                                      transcendentals=transcendentals,
                                      bytes_accessed=bytes_accessed),
    )(xt, ln_g_t, ln_b_t, w1t, b1t, dw_w_t, dw_b_t, bn_s_t, bn_sh_t, w2t, b2t)
    return out.reshape(B, D, N).transpose(0, 2, 1)


def reference(x, ln_g, ln_b, w1, b1, dw_w, dw_b, bn_s, bn_sh, w2, b2):
    """Plain-JAX reference of the same forward pass (channels-last)."""
    mean = x.mean(-1, keepdims=True)
    var = ((x - mean) ** 2).mean(-1, keepdims=True)
    xn = (x - mean) / jnp.sqrt(var + LN_EPS) * ln_g + ln_b
    h = xn @ w1 + b1
    u = h[..., :INNER] * jax.nn.sigmoid(h[..., INNER:])
    upad = jnp.pad(u, ((0, 0), (PAD, PAD), (0, 0)))
    n = x.shape[1]
    y = sum(upad[:, k:k + n, :] * dw_w[k] for k in range(K)) + dw_b
    y = y * bn_s + bn_sh
    y = y * jax.nn.sigmoid(y)
    return y @ w2 + b2


def make_params(key):
    ks = jax.random.split(key, 8)
    # LayerNorm: gamma=1, beta=0 (PyTorch default init)
    ln_g = jnp.ones((1, DIM), jnp.float32)
    ln_b = jnp.zeros((1, DIM), jnp.float32)
    # pointwise conv1: fan_in = DIM
    w1 = jax.random.normal(ks[0], (DIM, 2 * INNER), jnp.float32) / jnp.sqrt(DIM)
    b1 = jax.random.normal(ks[1], (1, 2 * INNER), jnp.float32) * 0.05
    # depthwise conv: fan_in = K (groups=INNER)
    dw_w = jax.random.normal(ks[2], (K, INNER), jnp.float32) / jnp.sqrt(K)
    dw_b = jax.random.normal(ks[3], (1, INNER), jnp.float32) * 0.05
    # BatchNorm (inference): running_mean=0, running_var=1 at init
    bn_gamma = 1.0 + 0.1 * jax.random.normal(ks[4], (1, INNER), jnp.float32)
    bn_beta = 0.05 * jax.random.normal(ks[5], (1, INNER), jnp.float32)
    run_mean = jnp.zeros((1, INNER), jnp.float32)
    run_var = jnp.ones((1, INNER), jnp.float32)
    bn_s = bn_gamma / jnp.sqrt(run_var + BN_EPS)
    bn_sh = bn_beta - run_mean * bn_s
    # pointwise conv2: fan_in = INNER
    w2 = jax.random.normal(ks[6], (INNER, DIM), jnp.float32) / jnp.sqrt(INNER)
    b2 = jax.random.normal(ks[7], (1, DIM), jnp.float32) * 0.05
    return (ln_g, ln_b, w1, b1, dw_w, dw_b, bn_s, bn_sh, w2, b2)


if __name__ == "__main__":
    key = jax.random.PRNGKey(0)
    kx, kp = jax.random.split(key)
    B, N = 2, 16
    x = jax.random.normal(kx, (B, N, DIM), jnp.float32)   # (batch, seq, dim)
    params = make_params(kp)

    out = jax.block_until_ready(conformer_conv_module(x, *params))

    ref = reference(x, *params)
    assert out.shape == (B, N, DIM)
    assert jnp.allclose(out, ref, rtol=1e-4, atol=1e-4), (
        f"max abs err {jnp.max(jnp.abs(out - ref))}")
    print("KERNEL_OK")
</pallas_src>

<mosaic_0001>
module attributes {stable_mosaic.version = 11 : i64} {
  func.func @_conformer_conv_kernel(%arg0: i32, %arg1: memref<32x16xf32, #tpu.memory_space<vmem>>, %arg2: memref<32x1xf32, #tpu.memory_space<vmem>>, %arg3: memref<32x1xf32, #tpu.memory_space<vmem>>, %arg4: memref<128x32xf32, #tpu.memory_space<vmem>>, %arg5: memref<128x1xf32, #tpu.memory_space<vmem>>, %arg6: memref<64x31xf32, #tpu.memory_space<vmem>>, %arg7: memref<64x1xf32, #tpu.memory_space<vmem>>, %arg8: memref<64x1xf32, #tpu.memory_space<vmem>>, %arg9: memref<64x1xf32, #tpu.memory_space<vmem>>, %arg10: memref<32x64xf32, #tpu.memory_space<vmem>>, %arg11: memref<32x1xf32, #tpu.memory_space<vmem>>, %arg12: memref<32x16xf32, #tpu.memory_space<vmem>>, %arg13: memref<64x46xf32, #tpu.memory_space<vmem>>) attributes {dimension_semantics = [#tpu.dimension_semantics<parallel>], iteration_bounds = array<i64: 2>, scalar_prefetch = 0 : i64, scratch_operands = 1 : i64, tpu.core_type = #tpu.core_type<tc>, window_params = [{transform_indices = @transform_0, window_bounds = array<i64: 32, 16>}, {pipeline_mode = #tpu.pipeline_mode<synchronous>, transform_indices = @transform_1, window_bounds = array<i64: 32, 1>}, {pipeline_mode = #tpu.pipeline_mode<synchronous>, transform_indices = @transform_2, window_bounds = array<i64: 32, 1>}, {pipeline_mode = #tpu.pipeline_mode<synchronous>, transform_indices = @transform_3, window_bounds = array<i64: 128, 32>}, {pipeline_mode = #tpu.pipeline_mode<synchronous>, transform_indices = @transform_4, window_bounds = array<i64: 128, 1>}, {pipeline_mode = #tpu.pipeline_mode<synchronous>, transform_indices = @transform_5, window_bounds = array<i64: 64, 31>}, {pipeline_mode = #tpu.pipeline_mode<synchronous>, transform_indices = @transform_6, window_bounds = array<i64: 64, 1>}, {pipeline_mode = #tpu.pipeline_mode<synchronous>, transform_indices = @transform_7, window_bounds = array<i64: 64, 1>}, {pipeline_mode = #tpu.pipeline_mode<synchronous>, transform_indices = @transform_8, window_bounds = array<i64: 64, 1>}, {pipeline_mode = #tpu.pipeline_mode<synchronous>, transform_indices = @transform_9, window_bounds = array<i64: 32, 64>}, {pipeline_mode = #tpu.pipeline_mode<synchronous>, transform_indices = @transform_10, window_bounds = array<i64: 32, 1>}, {transform_indices = @transform_11, window_bounds = array<i64: 32, 16>}]} {
    %c0 = arith.constant 0 : index
    %c0_0 = arith.constant 0 : index
    %0 = vector.load %arg1[%c0, %c0_0] : memref<32x16xf32, #tpu.memory_space<vmem>>, vector<32x16xf32>
    %cst = arith.constant dense<0.000000e+00> : vector<16xf32>
    %1 = vector.multi_reduction <add>, %0, %cst [0] : vector<32x16xf32> to vector<16xf32>
    %2 = vector.shape_cast %1 : vector<16xf32> to vector<1x16xf32>
    %cst_1 = arith.constant 3.200000e+01 : f32
    %3 = vector.broadcast %cst_1 : f32 to vector<1x16xf32>
    %4 = arith.divf %2, %3 : vector<1x16xf32>
    %5 = vector.broadcast %4 : vector<1x16xf32> to vector<32x16xf32>
    %6 = arith.subf %0, %5 : vector<32x16xf32>
    %7 = arith.mulf %6, %6 : vector<32x16xf32>
    %cst_2 = arith.constant dense<0.000000e+00> : vector<16xf32>
    %8 = vector.multi_reduction <add>, %7, %cst_2 [0] : vector<32x16xf32> to vector<16xf32>
    %9 = vector.shape_cast %8 : vector<16xf32> to vector<1x16xf32>
    %cst_3 = arith.constant 3.200000e+01 : f32
    %10 = vector.broadcast %cst_3 : f32 to vector<1x16xf32>
    %11 = arith.divf %9, %10 : vector<1x16xf32>
    %12 = vector.broadcast %4 : vector<1x16xf32> to vector<32x16xf32>
    %13 = arith.subf %0, %12 : vector<32x16xf32>
    %cst_4 = arith.constant 9.99999974E-6 : f32
    %14 = vector.broadcast %cst_4 : f32 to vector<1x16xf32>
    %15 = arith.addf %11, %14 : vector<1x16xf32>
    %16 = math.rsqrt %15 : vector<1x16xf32>
    %17 = vector.broadcast %16 : vector<1x16xf32> to vector<32x16xf32>
    %18 = arith.mulf %13, %17 : vector<32x16xf32>
    %c0_5 = arith.constant 0 : index
    %c0_6 = arith.constant 0 : index
    %19 = vector.load %arg2[%c0_5, %c0_6] : memref<32x1xf32, #tpu.memory_space<vmem>>, vector<32x1xf32>
    %20 = vector.broadcast %19 : vector<32x1xf32> to vector<32x16xf32>
    %21 = arith.mulf %18, %20 : vector<32x16xf32>
    %c0_7 = arith.constant 0 : index
    %c0_8 = arith.constant 0 : index
    %22 = vector.load %arg3[%c0_7, %c0_8] : memref<32x1xf32, #tpu.memory_space<vmem>>, vector<32x1xf32>
    %23 = vector.broadcast %22 : vector<32x1xf32> to vector<32x16xf32>
    %24 = arith.addf %21, %23 : vector<32x16xf32>
    %c0_9 = arith.constant 0 : index
    %c0_10 = arith.constant 0 : index
    %25 = vector.load %arg4[%c0_9, %c0_10] : memref<128x32xf32, #tpu.memory_space<vmem>>, vector<128x32xf32>
    %cst_11 = arith.constant dense<0.000000e+00> : vector<128x16xf32>
    %26 = tpu.matmul %25, %24, %cst_11 {dimension_numbers = #tpu.dot_dimension_numbers<[1], [0], [0], [1], [0, 0, 1, 1], [], []>} : vector<128x32xf32>, vector<32x16xf32>, vector<128x16xf32> -> vector<128x16xf32>
    %c0_12 = arith.constant 0 : index
    %c0_13 = arith.constant 0 : index
    %27 = vector.load %arg5[%c0_12, %c0_13] : memref<128x1xf32, #tpu.memory_space<vmem>>, vector<128x1xf32>
    %28 = vector.broadcast %27 : vector<128x1xf32> to vector<128x16xf32>
    %29 = arith.addf %26, %28 : vector<128x16xf32>
    %30 = vector.extract_strided_slice %29 {offsets = [0, 0], sizes = [64, 16], strides = [1, 1]} : vector<128x16xf32> to vector<64x16xf32>
    %31 = vector.extract_strided_slice %29 {offsets = [64, 0], sizes = [64, 16], strides = [1, 1]} : vector<128x16xf32> to vector<64x16xf32>
    %32 = arith.negf %31 : vector<64x16xf32>
    %33 = math.exp %32 : vector<64x16xf32>
    %cst_14 = arith.constant 1.000000e+00 : f32
    %34 = vector.broadcast %cst_14 : f32 to vector<64x16xf32>
    %35 = arith.addf %34, %33 : vector<64x16xf32>
    %36 = arith.divf %34, %35 : vector<64x16xf32>
    %37 = arith.mulf %30, %36 : vector<64x16xf32>
    %cst_15 = arith.constant 0.000000e+00 : f32
    %38 = vector.broadcast %cst_15 : f32 to vector<64x15xf32>
    %c0_16 = arith.constant 0 : index
    %c0_17 = arith.constant 0 : index
    %39 = vector.load %arg13[%c0_16, %c0_17] : memref<64x46xf32, #tpu.memory_space<vmem>>, vector<64x15xf32>
    tpu.vector_store %arg13[%c0_16, %c0_17], %38 {strides = array<i32>} : memref<64x46xf32, #tpu.memory_space<vmem>>, vector<64x15xf32>,
    %c0_18 = arith.constant 0 : index
    %c31 = arith.constant 31 : index
    %40 = vector.load %arg13[%c0_18, %c31] : memref<64x46xf32, #tpu.memory_space<vmem>>, vector<64x15xf32>
    tpu.vector_store %arg13[%c0_18, %c31], %38 {strides = array<i32>} : memref<64x46xf32, #tpu.memory_space<vmem>>, vector<64x15xf32>,
    %c0_19 = arith.constant 0 : index
    %c15 = arith.constant 15 : index
    %41 = vector.load %arg13[%c0_19, %c15] : memref<64x46xf32, #tpu.memory_space<vmem>>, vector<64x16xf32>
    tpu.vector_store %arg13[%c0_19, %c15], %37 {strides = array<i32>} : memref<64x46xf32, #tpu.memory_space<vmem>>, vector<64x16xf32>,
    %c0_20 = arith.constant 0 : index
    %c0_21 = arith.constant 0 : index
    %42 = vector.load %arg6[%c0_20, %c0_21] : memref<64x31xf32, #tpu.memory_space<vmem>>, vector<64x31xf32>
    %cst_22 = arith.constant 0.000000e+00 : f32
    %43 = vector.broadcast %cst_22 : f32 to vector<64x16xf32>
    %c0_23 = arith.constant 0 : index
    %c0_24 = arith.constant 0 : index
    %44 = vector.load %arg13[%c0_23, %c0_24] : memref<64x46xf32, #tpu.memory_space<vmem>>, vector<64x16xf32>
    %45 = vector.extract_strided_slice %42 {offsets = [0, 0], sizes = [64, 1], strides = [1, 1]} : vector<64x31xf32> to vector<64x1xf32>
    %46 = vector.broadcast %45 : vector<64x1xf32> to vector<64x16xf32>
    %47 = arith.mulf %44, %46 : vector<64x16xf32>
    %48 = arith.addf %43, %47 : vector<64x16xf32>
    %c0_25 = arith.constant 0 : index
    %c1 = arith.constant 1 : index
    %49 = vector.load %arg13[%c0_25, %c1] : memref<64x46xf32, #tpu.memory_space<vmem>>, vector<64x16xf32>
    %50 = vector.extract_strided_slice %42 {offsets = [0, 1], sizes = [64, 1], strides = [1, 1]} : vector<64x31xf32> to vector<64x1xf32>
    %51 = vector.broadcast %50 : vector<64x1xf32> to vector<64x16xf32>
    %52 = arith.mulf %49, %51 : vector<64x16xf32>
    %53 = arith.addf %48, %52 : vector<64x16xf32>
    %c0_26 = arith.constant 0 : index
    %c2 = arith.constant 2 : index
    %54 = vector.load %arg13[%c0_26, %c2] : memref<64x46xf32, #tpu.memory_space<vmem>>, vector<64x16xf32>
    %55 = vector.extract_strided_slice %42 {offsets = [0, 2], sizes = [64, 1], strides = [1, 1]} : vector<64x31xf32> to vector<64x1xf32>
    %56 = vector.broadcast %55 : vector<64x1xf32> to vector<64x16xf32>
    %57 = arith.mulf %54, %56 : vector<64x16xf32>
    %58 = arith.addf %53, %57 : vector<64x16xf32>
    %c0_27 = arith.constant 0 : index
    %c3 = arith.constant 3 : index
    %59 = vector.load %arg13[%c0_27, %c3] : memref<64x46xf32, #tpu.memory_space<vmem>>, vector<64x16xf32>
    %60 = vector.extract_strided_slice %42 {offsets = [0, 3], sizes = [64, 1], strides = [1, 1]} : vector<64x31xf32> to vector<64x1xf32>
    %61 = vector.broadcast %60 : vector<64x1xf32> to vector<64x16xf32>
    %62 = arith.mulf %59, %61 : vector<64x16xf32>
    %63 = arith.addf %58, %62 : vector<64x16xf32>
    %c0_28 = arith.constant 0 : index
    %c4 = arith.constant 4 : index
    %64 = vector.load %arg13[%c0_28, %c4] : memref<64x46xf32, #tpu.memory_space<vmem>>, vector<64x16xf32>
    %65 = vector.extract_strided_slice %42 {offsets = [0, 4], sizes = [64, 1], strides = [1, 1]} : vector<64x31xf32> to vector<64x1xf32>
    %66 = vector.broadcast %65 : vector<64x1xf32> to vector<64x16xf32>
    %67 = arith.mulf %64, %66 : vector<64x16xf32>
    %68 = arith.addf %63, %67 : vector<64x16xf32>
    %c0_29 = arith.constant 0 : index
    %c5 = arith.constant 5 : index
    %69 = vector.load %arg13[%c0_29, %c5] : memref<64x46xf32, #tpu.memory_space<vmem>>, vector<64x16xf32>
    %70 = vector.extract_strided_slice %42 {offsets = [0, 5], sizes = [64, 1], strides = [1, 1]} : vector<64x31xf32> to vector<64x1xf32>
    %71 = vector.broadcast %70 : vector<64x1xf32> to vector<64x16xf32>
    %72 = arith.mulf %69, %71 : vector<64x16xf32>
    %73 = arith.addf %68, %72 : vector<64x16xf32>
    %c0_30 = arith.constant 0 : index
    %c6 = arith.constant 6 : index
    %74 = vector.load %arg13[%c0_30, %c6] : memref<64x46xf32, #tpu.memory_space<vmem>>, vector<64x16xf32>
    %75 = vector.extract_strided_slice %42 {offsets = [0, 6], sizes = [64, 1], strides = [1, 1]} : vector<64x31xf32> to vector<64x1xf32>
    %76 = vector.broadcast %75 : vector<64x1xf32> to vector<64x16xf32>
    %77 = arith.mulf %74, %76 : vector<64x16xf32>
    %78 = arith.addf %73, %77 : vector<64x16xf32>
    %c0_31 = arith.constant 0 : index
    %c7 = arith.constant 7 : index
    %79 = vector.load %arg13[%c0_31, %c7] : memref<64x46xf32, #tpu.memory_space<vmem>>, vector<64x16xf32>
    %80 = vector.extract_strided_slice %42 {offsets = [0, 7], sizes = [64, 1], strides = [1, 1]} : vector<64x31xf32> to vector<64x1xf32>
    %81 = vector.broadcast %80 : vector<64x1xf32> to vector<64x16xf32>
    %82 = arith.mulf %79, %81 : vector<64x16xf32>
    %83 = arith.addf %78, %82 : vector<64x16xf32>
    %c0_32 = arith.constant 0 : index
    %c8 = arith.constant 8 : index
    %84 = vector.load %arg13[%c0_32, %c8] : memref<64x46xf32, #tpu.memory_space<vmem>>, vector<64x16xf32>
    %85 = vector.extract_strided_slice %42 {offsets = [0, 8], sizes = [64, 1], strides = [1, 1]} : vector<64x31xf32> to vector<64x1xf32>
    %86 = vector.broadcast %85 : vector<64x1xf32> to vector<64x16xf32>
    %87 = arith.mulf %84, %86 : vector<64x16xf32>
    %88 = arith.addf %83, %87 : vector<64x16xf32>
    %c0_33 = arith.constant 0 : index
    %c9 = arith.constant 9 : index
    %89 = vector.load %arg13[%c0_33, %c9] : memref<64x46xf32, #tpu.memory_space<vmem>>, vector<64x16xf32>
    %90 = vector.extract_strided_slice %42 {offsets = [0, 9], sizes = [64, 1], strides = [1, 1]} : vector<64x31xf32> to vector<64x1xf32>
    %91 = vector.broadcast %90 : vector<64x1xf32> to vector<64x16xf32>
    %92 = arith.mulf %89, %91 : vector<64x16xf32>
    %93 = arith.addf %88, %92 : vector<64x16xf32>
    %c0_34 = arith.constant 0 : index
    %c10 = arith.constant 10 : index
    %94 = vector.load %arg13[%c0_34, %c10] : memref<64x46xf32, #tpu.memory_space<vmem>>, vector<64x16xf32>
    %95 = vector.extract_strided_slice %42 {offsets = [0, 10], sizes = [64, 1], strides = [1, 1]} : vector<64x31xf32> to vector<64x1xf32>
    %96 = vector.broadcast %95 : vector<64x1xf32> to vector<64x16xf32>
    %97 = arith.mulf %94, %96 : vector<64x16xf32>
    %98 = arith.addf %93, %97 : vector<64x16xf32>
    %c0_35 = arith.constant 0 : index
    %c11 = arith.constant 11 : index
    %99 = vector.load %arg13[%c0_35, %c11] : memref<64x46xf32, #tpu.memory_space<vmem>>, vector<64x16xf32>
    %100 = vector.extract_strided_slice %42 {offsets = [0, 11], sizes = [64, 1], strides = [1, 1]} : vector<64x31xf32> to vector<64x1xf32>
    %101 = vector.broadcast %100 : vector<64x1xf32> to vector<64x16xf32>
    %102 = arith.mulf %99, %101 : vector<64x16xf32>
    %103 = arith.addf %98, %102 : vector<64x16xf32>
    %c0_36 = arith.constant 0 : index
    %c12 = arith.constant 12 : index
    %104 = vector.load %arg13[%c0_36, %c12] : memref<64x46xf32, #tpu.memory_space<vmem>>, vector<64x16xf32>
    %105 = vector.extract_strided_slice %42 {offsets = [0, 12], sizes = [64, 1], strides = [1, 1]} : vector<64x31xf32> to vector<64x1xf32>
    %106 = vector.broadcast %105 : vector<64x1xf32> to vector<64x16xf32>
    %107 = arith.mulf %104, %106 : vector<64x16xf32>
    %108 = arith.addf %103, %107 : vector<64x16xf32>
    %c0_37 = arith.constant 0 : index
    %c13 = arith.constant 13 : index
    %109 = vector.load %arg13[%c0_37, %c13] : memref<64x46xf32, #tpu.memory_space<vmem>>, vector<64x16xf32>
    %110 = vector.extract_strided_slice %42 {offsets = [0, 13], sizes = [64, 1], strides = [1, 1]} : vector<64x31xf32> to vector<64x1xf32>
    %111 = vector.broadcast %110 : vector<64x1xf32> to vector<64x16xf32>
    %112 = arith.mulf %109, %111 : vector<64x16xf32>
    %113 = arith.addf %108, %112 : vector<64x16xf32>
    %c0_38 = arith.constant 0 : index
    %c14 = arith.constant 14 : index
    %114 = vector.load %arg13[%c0_38, %c14] : memref<64x46xf32, #tpu.memory_space<vmem>>, vector<64x16xf32>
    %115 = vector.extract_strided_slice %42 {offsets = [0, 14], sizes = [64, 1], strides = [1, 1]} : vector<64x31xf32> to vector<64x1xf32>
    %116 = vector.broadcast %115 : vector<64x1xf32> to vector<64x16xf32>
    %117 = arith.mulf %114, %116 : vector<64x16xf32>
    %118 = arith.addf %113, %117 : vector<64x16xf32>
    %c0_39 = arith.constant 0 : index
    %c15_40 = arith.constant 15 : index
    %119 = vector.load %arg13[%c0_39, %c15_40] : memref<64x46xf32, #tpu.memory_space<vmem>>, vector<64x16xf32>
    %120 = vector.extract_strided_slice %42 {offsets = [0, 15], sizes = [64, 1], strides = [1, 1]} : vector<64x31xf32> to vector<64x1xf32>
    %121 = vector.broadcast %120 : vector<64x1xf32> to vector<64x16xf32>
    %122 = arith.mulf %119, %121 : vector<64x16xf32>
    %123 = arith.addf %118, %122 : vector<64x16xf32>
    %c0_41 = arith.constant 0 : index
    %c16 = arith.constant 16 : index
    %124 = vector.load %arg13[%c0_41, %c16] : memref<64x46xf32, #tpu.memory_space<vmem>>, vector<64x16xf32>
    %125 = vector.extract_strided_slice %42 {offsets = [0, 16], sizes = [64, 1], strides = [1, 1]} : vector<64x31xf32> to vector<64x1xf32>
    %126 = vector.broadcast %125 : vector<64x1xf32> to vector<64x16xf32>
    %127 = arith.mulf %124, %126 : vector<64x16xf32>
    %128 = arith.addf %123, %127 : vector<64x16xf32>
    %c0_42 = arith.constant 0 : index
    %c17 = arith.constant 17 : index
    %129 = vector.load %arg13[%c0_42, %c17] : memref<64x46xf32, #tpu.memory_space<vmem>>, vector<64x16xf32>
    %130 = vector.extract_strided_slice %42 {offsets = [0, 17], sizes = [64, 1], strides = [1, 1]} : vector<64x31xf32> to vector<64x1xf32>
    %131 = vector.broadcast %130 : vector<64x1xf32> to vector<64x16xf32>
    %132 = arith.mulf %129, %131 : vector<64x16xf32>
    %133 = arith.addf %128, %132 : vector<64x16xf32>
    %c0_43 = arith.constant 0 : index
    %c18 = arith.constant 18 : index
    %134 = vector.load %arg13[%c0_43, %c18] : memref<64x46xf32, #tpu.memory_space<vmem>>, vector<64x16xf32>
    %135 = vector.extract_strided_slice %42 {offsets = [0, 18], sizes = [64, 1], strides = [1, 1]} : vector<64x31xf32> to vector<64x1xf32>
    %136 = vector.broadcast %135 : vector<64x1xf32> to vector<64x16xf32>
    %137 = arith.mulf %134, %136 : vector<64x16xf32>
    %138 = arith.addf %133, %137 : vector<64x16xf32>
    %c0_44 = arith.constant 0 : index
    %c19 = arith.constant 19 : index
    %139 = vector.load %arg13[%c0_44, %c19] : memref<64x46xf32, #tpu.memory_space<vmem>>, vector<64x16xf32>
    %140 = vector.extract_strided_slice %42 {offsets = [0, 19], sizes = [64, 1], strides = [1, 1]} : vector<64x31xf32> to vector<64x1xf32>
    %141 = vector.broadcast %140 : vector<64x1xf32> to vector<64x16xf32>
    %142 = arith.mulf %139, %141 : vector<64x16xf32>
    %143 = arith.addf %138, %142 : vector<64x16xf32>
    %c0_45 = arith.constant 0 : index
    %c20 = arith.constant 20 : index
    %144 = vector.load %arg13[%c0_45, %c20] : memref<64x46xf32, #tpu.memory_space<vmem>>, vector<64x16xf32>
    %145 = vector.extract_strided_slice %42 {offsets = [0, 20], sizes = [64, 1], strides = [1, 1]} : vector<64x31xf32> to vector<64x1xf32>
    %146 = vector.broadcast %145 : vector<64x1xf32> to vector<64x16xf32>
    %147 = arith.mulf %144, %146 : vector<64x16xf32>
    %148 = arith.addf %143, %147 : vector<64x16xf32>
    %c0_46 = arith.constant 0 : index
    %c21 = arith.constant 21 : index
    %149 = vector.load %arg13[%c0_46, %c21] : memref<64x46xf32, #tpu.memory_space<vmem>>, vector<64x16xf32>
    %150 = vector.extract_strided_slice %42 {offsets = [0, 21], sizes = [64, 1], strides = [1, 1]} : vector<64x31xf32> to vector<64x1xf32>
    %151 = vector.broadcast %150 : vector<64x1xf32> to vector<64x16xf32>
    %152 = arith.mulf %149, %151 : vector<64x16xf32>
    %153 = arith.addf %148, %152 : vector<64x16xf32>
    %c0_47 = arith.constant 0 : index
    %c22 = arith.constant 22 : index
    %154 = vector.load %arg13[%c0_47, %c22] : memref<64x46xf32, #tpu.memory_space<vmem>>, vector<64x16xf32>
    %155 = vector.extract_strided_slice %42 {offsets = [0, 22], sizes = [64, 1], strides = [1, 1]} : vector<64x31xf32> to vector<64x1xf32>
    %156 = vector.broadcast %155 : vector<64x1xf32> to vector<64x16xf32>
    %157 = arith.mulf %154, %156 : vector<64x16xf32>
    %158 = arith.addf %153, %157 : vector<64x16xf32>
    %c0_48 = arith.constant 0 : index
    %c23 = arith.constant 23 : index
    %159 = vector.load %arg13[%c0_48, %c23] : memref<64x46xf32, #tpu.memory_space<vmem>>, vector<64x16xf32>
    %160 = vector.extract_strided_slice %42 {offsets = [0, 23], sizes = [64, 1], strides = [1, 1]} : vector<64x31xf32> to vector<64x1xf32>
    %161 = vector.broadcast %160 : vector<64x1xf32> to vector<64x16xf32>
    %162 = arith.mulf %159, %161 : vector<64x16xf32>
    %163 = arith.addf %158, %162 : vector<64x16xf32>
    %c0_49 = arith.constant 0 : index
    %c24 = arith.constant 24 : index
    %164 = vector.load %arg13[%c0_49, %c24] : memref<64x46xf32, #tpu.memory_space<vmem>>, vector<64x16xf32>
    %165 = vector.extract_strided_slice %42 {offsets = [0, 24], sizes = [64, 1], strides = [1, 1]} : vector<64x31xf32> to vector<64x1xf32>
    %166 = vector.broadcast %165 : vector<64x1xf32> to vector<64x16xf32>
    %167 = arith.mulf %164, %166 : vector<64x16xf32>
    %168 = arith.addf %163, %167 : vector<64x16xf32>
    %c0_50 = arith.constant 0 : index
    %c25 = arith.constant 25 : index
    %169 = vector.load %arg13[%c0_50, %c25] : memref<64x46xf32, #tpu.memory_space<vmem>>, vector<64x16xf32>
    %170 = vector.extract_strided_slice %42 {offsets = [0, 25], sizes = [64, 1], strides = [1, 1]} : vector<64x31xf32> to vector<64x1xf32>
    %171 = vector.broadcast %170 : vector<64x1xf32> to vector<64x16xf32>
    %172 = arith.mulf %169, %171 : vector<64x16xf32>
    %173 = arith.addf %168, %172 : vector<64x16xf32>
    %c0_51 = arith.constant 0 : index
    %c26 = arith.constant 26 : index
    %174 = vector.load %arg13[%c0_51, %c26] : memref<64x46xf32, #tpu.memory_space<vmem>>, vector<64x16xf32>
    %175 = vector.extract_strided_slice %42 {offsets = [0, 26], sizes = [64, 1], strides = [1, 1]} : vector<64x31xf32> to vector<64x1xf32>
    %176 = vector.broadcast %175 : vector<64x1xf32> to vector<64x16xf32>
    %177 = arith.mulf %174, %176 : vector<64x16xf32>
    %178 = arith.addf %173, %177 : vector<64x16xf32>
    %c0_52 = arith.constant 0 : index
    %c27 = arith.constant 27 : index
    %179 = vector.load %arg13[%c0_52, %c27] : memref<64x46xf32, #tpu.memory_space<vmem>>, vector<64x16xf32>
    %180 = vector.extract_strided_slice %42 {offsets = [0, 27], sizes = [64, 1], strides = [1, 1]} : vector<64x31xf32> to vector<64x1xf32>
    %181 = vector.broadcast %180 : vector<64x1xf32> to vector<64x16xf32>
    %182 = arith.mulf %179, %181 : vector<64x16xf32>
    %183 = arith.addf %178, %182 : vector<64x16xf32>
    %c0_53 = arith.constant 0 : index
    %c28 = arith.constant 28 : index
    %184 = vector.load %arg13[%c0_53, %c28] : memref<64x46xf32, #tpu.memory_space<vmem>>, vector<64x16xf32>
    %185 = vector.extract_strided_slice %42 {offsets = [0, 28], sizes = [64, 1], strides = [1, 1]} : vector<64x31xf32> to vector<64x1xf32>
    %186 = vector.broadcast %185 : vector<64x1xf32> to vector<64x16xf32>
    %187 = arith.mulf %184, %186 : vector<64x16xf32>
    %188 = arith.addf %183, %187 : vector<64x16xf32>
    %c0_54 = arith.constant 0 : index
    %c29 = arith.constant 29 : index
    %189 = vector.load %arg13[%c0_54, %c29] : memref<64x46xf32, #tpu.memory_space<vmem>>, vector<64x16xf32>
    %190 = vector.extract_strided_slice %42 {offsets = [0, 29], sizes = [64, 1], strides = [1, 1]} : vector<64x31xf32> to vector<64x1xf32>
    %191 = vector.broadcast %190 : vector<64x1xf32> to vector<64x16xf32>
    %192 = arith.mulf %189, %191 : vector<64x16xf32>
    %193 = arith.addf %188, %192 : vector<64x16xf32>
    %c0_55 = arith.constant 0 : index
    %c30 = arith.constant 30 : index
    %194 = vector.load %arg13[%c0_55, %c30] : memref<64x46xf32, #tpu.memory_space<vmem>>, vector<64x16xf32>
    %195 = vector.extract_strided_slice %42 {offsets = [0, 30], sizes = [64, 1], strides = [1, 1]} : vector<64x31xf32> to vector<64x1xf32>
    %196 = vector.broadcast %195 : vector<64x1xf32> to vector<64x16xf32>
    %197 = arith.mulf %194, %196 : vector<64x16xf32>
    %198 = arith.addf %193, %197 : vector<64x16xf32>
    %c0_56 = arith.constant 0 : index
    %c0_57 = arith.constant 0 : index
    %199 = vector.load %arg7[%c0_56, %c0_57] : memref<64x1xf32, #tpu.memory_space<vmem>>, vector<64x1xf32>
    %200 = vector.broadcast %199 : vector<64x1xf32> to vector<64x16xf32>
    %201 = arith.addf %198, %200 : vector<64x16xf32>
    %c0_58 = arith.constant 0 : index
    %c0_59 = arith.constant 0 : index
    %202 = vector.load %arg8[%c0_58, %c0_59] : memref<64x1xf32, #tpu.memory_space<vmem>>, vector<64x1xf32>
    %203 = vector.broadcast %202 : vector<64x1xf32> to vector<64x16xf32>
    %204 = arith.mulf %201, %203 : vector<64x16xf32>
    %c0_60 = arith.constant 0 : index
    %c0_61 = arith.constant 0 : index
    %205 = vector.load %arg9[%c0_60, %c0_61] : memref<64x1xf32, #tpu.memory_space<vmem>>, vector<64x1xf32>
    %206 = vector.broadcast %205 : vector<64x1xf32> to vector<64x16xf32>
    %207 = arith.addf %204, %206 : vector<64x16xf32>
    %208 = arith.negf %207 : vector<64x16xf32>
    %209 = math.exp %208 : vector<64x16xf32>
    %cst_62 = arith.constant 1.000000e+00 : f32
    %210 = vector.broadcast %cst_62 : f32 to vector<64x16xf32>
    %211 = arith.addf %210, %209 : vector<64x16xf32>
    %212 = arith.divf %210, %211 : vector<64x16xf32>
    %213 = arith.mulf %207, %212 : vector<64x16xf32>
    %c0_63 = arith.constant 0 : index
    %c0_64 = arith.constant 0 : index
    %214 = vector.load %arg10[%c0_63, %c0_64] : memref<32x64xf32, #tpu.memory_space<vmem>>, vector<32x64xf32>
    %cst_65 = arith.constant dense<0.000000e+00> : vector<32x16xf32>
    %215 = tpu.matmul %214, %213, %cst_65 {dimension_numbers = #tpu.dot_dimension_numbers<[1], [0], [0], [1], [0, 0, 1, 1], [], []>} : vector<32x64xf32>, vector<64x16xf32>, vector<32x16xf32> -> vector<32x16xf32>
    %c0_66 = arith.constant 0 : index
    %c0_67 = arith.constant 0 : index
    %216 = vector.load %arg11[%c0_66, %c0_67] : memref<32x1xf32, #tpu.memory_space<vmem>>, vector<32x1xf32>
    %217 = vector.broadcast %216 : vector<32x1xf32> to vector<32x16xf32>
    %218 = arith.addf %215, %217 : vector<32x16xf32>
    %c0_68 = arith.constant 0 : index
    %c0_69 = arith.constant 0 : index
    %219 = vector.load %arg12[%c0_68, %c0_69] : memref<32x16xf32, #tpu.memory_space<vmem>>, vector<32x16xf32>
    tpu.vector_store %arg12[%c0_68, %c0_69], %218 {strides = array<i32>} : memref<32x16xf32, #tpu.memory_space<vmem>>, vector<32x16xf32>,
    return
  }
  func.func @transform_0(%arg0: i32) -> (i32, i32) {
    %c0_i32 = arith.constant 0 : i32
    %c0_i32_0 = arith.constant 0 : i32
    return %arg0, %c0_i32 : i32, i32
  }
  func.func @transform_1(%arg0: i32) -> (i32, i32) {
    %c0_i32 = arith.constant 0 : i32
    %c0_i32_0 = arith.constant 0 : i32
    %c0_i32_1 = arith.constant 0 : i32
    return %c0_i32, %c0_i32_0 : i32, i32
  }
  func.func @transform_2(%arg0: i32) -> (i32, i32) {
    %c0_i32 = arith.constant 0 : i32
    %c0_i32_0 = arith.constant 0 : i32
    %c0_i32_1 = arith.constant 0 : i32
    return %c0_i32, %c0_i32_0 : i32, i32
  }
  func.func @transform_3(%arg0: i32) -> (i32, i32) {
    %c0_i32 = arith.constant 0 : i32
    %c0_i32_0 = arith.constant 0 : i32
    %c0_i32_1 = arith.constant 0 : i32
    return %c0_i32, %c0_i32_0 : i32, i32
  }
  func.func @transform_4(%arg0: i32) -> (i32, i32) {
    %c0_i32 = arith.constant 0 : i32
    %c0_i32_0 = arith.constant 0 : i32
    %c0_i32_1 = arith.constant 0 : i32
    return %c0_i32, %c0_i32_0 : i32, i32
  }
  func.func @transform_5(%arg0: i32) -> (i32, i32) {
    %c0_i32 = arith.constant 0 : i32
    %c0_i32_0 = arith.constant 0 : i32
    %c0_i32_1 = arith.constant 0 : i32
    return %c0_i32, %c0_i32_0 : i32, i32
  }
  func.func @transform_6(%arg0: i32) -> (i32, i32) {
    %c0_i32 = arith.constant 0 : i32
    %c0_i32_0 = arith.constant 0 : i32
    %c0_i32_1 = arith.constant 0 : i32
    return %c0_i32, %c0_i32_0 : i32, i32
  }
  func.func @transform_7(%arg0: i32) -> (i32, i32) {
    %c0_i32 = arith.constant 0 : i32
    %c0_i32_0 = arith.constant 0 : i32
    %c0_i32_1 = arith.constant 0 : i32
    return %c0_i32, %c0_i32_0 : i32, i32
  }
  func.func @transform_8(%arg0: i32) -> (i32, i32) {
    %c0_i32 = arith.constant 0 : i32
    %c0_i32_0 = arith.constant 0 : i32
    %c0_i32_1 = arith.constant 0 : i32
    return %c0_i32, %c0_i32_0 : i32, i32
  }
  func.func @transform_9(%arg0: i32) -> (i32, i32) {
    %c0_i32 = arith.constant 0 : i32
    %c0_i32_0 = arith.constant 0 : i32
    %c0_i32_1 = arith.constant 0 : i32
    return %c0_i32, %c0_i32_0 : i32, i32
  }
  func.func @transform_10(%arg0: i32) -> (i32, i32) {
    %c0_i32 = arith.constant 0 : i32
    %c0_i32_0 = arith.constant 0 : i32
    %c0_i32_1 = arith.constant 0 : i32
    return %c0_i32, %c0_i32_0 : i32, i32
  }
  func.func @transform_11(%arg0: i32) -> (i32, i32) {
    %c0_i32 = arith.constant 0 : i32
    %c0_i32_0 = arith.constant 0 : i32
    return %arg0, %c0_i32 : i32, i32
  }
}

</mosaic_0001>

<llo_original>
// kernel: tpu_custom_call.1
$region0: #{tpu_custom_call.1}
  #allocation0 [shape = 'u32[]', space=smem, size = 0x4, offset = 0x4, fixed_abs, tag = 'smem constant byte address 0x4 - core index']
  #allocation1 [shape = 'u32[144,128]{1,0:T(1,128)}', space=vmem, size = 0x12000, scoped, tag = 'internal scratch']
  #allocation2 [shape = 'f32[64,46]{1,0:T(8,128)}', space=vmem, size = 0x8000, scoped, tag = 'scratch operand']
  %s0 = inlined_call_operand.vmem [shape: f32[64,16], index: 0, kind: input, shape index: {}]
  %s1 = inlined_call_operand.vmem [shape: f32[32,1], index: 1, kind: input, shape index: {}]
  %s2 = inlined_call_operand.vmem [shape: f32[32,1], index: 2, kind: input, shape index: {}]
  %s3 = inlined_call_operand.vmem [shape: f32[128,32], index: 3, kind: input, shape index: {}]
  %s4 = inlined_call_operand.vmem [shape: f32[128,1], index: 4, kind: input, shape index: {}]
  %s5 = inlined_call_operand.vmem [shape: f32[64,31], index: 5, kind: input, shape index: {}]
  %s6 = inlined_call_operand.vmem [shape: f32[64,1], index: 6, kind: input, shape index: {}]
  %s7 = inlined_call_operand.vmem [shape: f32[64,1], index: 7, kind: input, shape index: {}]
  %s8 = inlined_call_operand.vmem [shape: f32[64,1], index: 8, kind: input, shape index: {}]
  %s9 = inlined_call_operand.vmem [shape: f32[32,64], index: 9, kind: input, shape index: {}]
  %s10 = inlined_call_operand.vmem [shape: f32[32,1], index: 10, kind: input, shape index: {}]
  %s11 = inlined_call_operand.vmem [shape: f32[64,16], index: 11, kind: output, shape index: {}]
  %s12 = sld [smem:[#allocation0]]
  $region77: #{tpu_custom_call.1} parent=0
    _
  %s14 = ssub.s32 1, %s12
  %s15 = scalar_select 0, %s14, %s12
  loop: start=0, step=1, limit=4
  $region2: #{tpu_custom_call.1} parent=0 // loop_pre_header
    _
  $region3: #{tpu_custom_call.1} parent=0 // loop_header
    %s17 = sphi 0, %s21
    %p18 = scmp.ge.s32.totalorder %s17, 4
    %s27 = sphi 0, %s29
    %s30 = sphi 0, %s27
    %s31 = sphi 0, %s30
    %s47 = sphi 0, %s31
    %s51 = sphi 0, %s51
    %s53 = sphi 0, %s51
    %s54 = sphi 0, %s53
    %s68 = sphi 0, %s54
    %s72 = sphi 0, %s72
    %s74 = sphi 0, %s72
    %s75 = sphi 0, %s74
    %s89 = sphi 0, %s75
    %s93 = sphi 0, %s93
    %s95 = sphi 0, %s93
    %s96 = sphi 0, %s95
    %s110 = sphi 0, %s96
    %s114 = sphi 0, %s114
    %s116 = sphi 0, %s114
    %s117 = sphi 0, %s116
    %s131 = sphi 0, %s117
    %s135 = sphi 0, %s135
    %s137 = sphi 0, %s135
    %s138 = sphi 0, %s137
    %s152 = sphi 0, %s138
    %s156 = sphi 0, %s156
    %s158 = sphi 0, %s156
    %s159 = sphi 0, %s158
    %s173 = sphi 0, %s159
    %s177 = sphi 0, %s177
    %s179 = sphi 0, %s177
    %s180 = sphi 0, %s179
    %s194 = sphi 0, %s180
    %s198 = sphi 0, %s198
    %s200 = sphi 0, %s198
    %s201 = sphi 0, %s200
    %s215 = sphi 0, %s201
    %s219 = sphi 0, %s219
    %s221 = sphi 0, %s219
    %s222 = sphi 0, %s221
    %s236 = sphi 0, %s222
    %s240 = sphi 0, %s240
    %s242 = sphi 0, %s240
    %s243 = sphi 0, %s242
    %s257 = sphi 0, %s243
    %s263 = sphi 0, %s265
    %s266 = sphi 0, %s263
    %s267 = sphi 0, %s266
    %s283 = sphi 0, %s267
  $region4: #{tpu_custom_call.1} parent=0 // loop_header_branch
    %20 = sbr.rel (%p18) target = $region8
  $region5: #{tpu_custom_call.1} parent=0 // loop_body
    %s22 = ssub.s32 %s17, 1
    %s23 = ssub.s32 %s17, 2
    %s24 = sadd.s32 %s17, 1
    %s25 = ssub.s32 %s17, %s24
    %p26 = scmp.eq.s32.totalorder %s25, 0
    %s28 = sadd.s32 %s27, 1
    %s29 = scalar_select %p26, %s27, %s28
    %p32 = pneg %p26
    %p33 = scmp.eq.s32.totalorder %s17, 1
    %p34 = por %p32, %p33
    %p35 = scmp.ne.s32.totalorder %s27, %s30
    %p36 = scmp.eq.s32.totalorder %s17, 0
    %p37 = por %p35, %p36
    %p38 = scmp.ne.s32.totalorder %s27, %s30
    %p39 = scmp.eq.s32.totalorder %s22, 1
    %p40 = por %p38, %p39
    %p41 = scmp.ne.s32.totalorder %s30, %s31
    %p42 = scmp.eq.s32.totalorder %s22, 0
    %p43 = por %p41, %p42
    %p44 = scmp.ne.s32.totalorder %s30, %s31
    %p45 = scmp.eq.s32.totalorder %s23, 1
    %p46 = por %p44, %p45
    %p48 = scmp.ne.s32.totalorder %s31, %s47
    %p49 = scmp.eq.s32.totalorder %s23, 0
    %p50 = por %p48, %p49
    %s52 = sadd.s32 %s51, 1
    %p55 = scmp.eq.s32.totalorder %s17, 1
    %p56 = scmp.ne.s32.totalorder %s51, %s53
    %p57 = scmp.eq.s32.totalorder %s17, 0
    %p58 = por %p56, %p57
    %p59 = scmp.ne.s32.totalorder %s51, %s53
    %p60 = scmp.eq.s32.totalorder %s22, 1
    %p61 = por %p59, %p60
    %p62 = scmp.ne.s32.totalorder %s53, %s54
    %p63 = scmp.eq.s32.totalorder %s22, 0
    %p64 = por %p62, %p63
    %p65 = scmp.ne.s32.totalorder %s53, %s54
    %p66 = scmp.eq.s32.totalorder %s23, 1
    %p67 = por %p65, %p66
    %p69 = scmp.ne.s32.totalorder %s54, %s68
    %p70 = scmp.eq.s32.totalorder %s23, 0
    %p71 = por %p69, %p70
    %s73 = sadd.s32 %s72, 1
    %p76 = scmp.eq.s32.totalorder %s17, 1
    %p77 = scmp.ne.s32.totalorder %s72, %s74
    %p78 = scmp.eq.s32.totalorder %s17, 0
    %p79 = por %p77, %p78
    %p80 = scmp.ne.s32.totalorder %s72, %s74
    %p81 = scmp.eq.s32.totalorder %s22, 1
    %p82 = por %p80, %p81
    %p83 = scmp.ne.s32.totalorder %s74, %s75
    %p84 = scmp.eq.s32.totalorder %s22, 0
    %p85 = por %p83, %p84
    %p86 = scmp.ne.s32.totalorder %s74, %s75
    %p87 = scmp.eq.s32.totalorder %s23, 1
    %p88 = por %p86, %p87
    %p90 = scmp.ne.s32.totalorder %s75, %s89
    %p91 = scmp.eq.s32.totalorder %s23, 0
    %p92 = por %p90, %p91
    %s94 = sadd.s32 %s93, 1
    %p97 = scmp.eq.s32.totalorder %s17, 1
    %p98 = scmp.ne.s32.totalorder %s93, %s95
    %p99 = scmp.eq.s32.totalorder %s17, 0
    %p100 = por %p98, %p99
    %p101 = scmp.ne.s32.totalorder %s93, %s95
    %p102 = scmp.eq.s32.totalorder %s22, 1
    %p103 = por %p101, %p102
    %p104 = scmp.ne.s32.totalorder %s95, %s96
    %p105 = scmp.eq.s32.totalorder %s22, 0
    %p106 = por %p104, %p105
    %p107 = scmp.ne.s32.totalorder %s95, %s96
    %p108 = scmp.eq.s32.totalorder %s23, 1
    %p109 = por %p107, %p108
    %p111 = scmp.ne.s32.totalorder %s96, %s110
    %p112 = scmp.eq.s32.totalorder %s23, 0
    %p113 = por %p111, %p112
    %s115 = sadd.s32 %s114, 1
    %p118 = scmp.eq.s32.totalorder %s17, 1
    %p119 = scmp.ne.s32.totalorder %s114, %s116
    %p120 = scmp.eq.s32.totalorder %s17, 0
    %p121 = por %p119, %p120
    %p122 = scmp.ne.s32.totalorder %s114, %s116
    %p123 = scmp.eq.s32.totalorder %s22, 1
    %p124 = por %p122, %p123
    %p125 = scmp.ne.s32.totalorder %s116, %s117
    %p126 = scmp.eq.s32.totalorder %s22, 0
    %p127 = por %p125, %p126
    %p128 = scmp.ne.s32.totalorder %s116, %s117
    %p129 = scmp.eq.s32.totalorder %s23, 1
    %p130 = por %p128, %p129
    %p132 = scmp.ne.s32.totalorder %s117, %s131
    %p133 = scmp.eq.s32.totalorder %s23, 0
    %p134 = por %p132, %p133
    %s136 = sadd.s32 %s135, 1
    %p139 = scmp.eq.s32.totalorder %s17, 1
    %p140 = scmp.ne.s32.totalorder %s135, %s137
    %p141 = scmp.eq.s32.totalorder %s17, 0
    %p142 = por %p140, %p141
    %p143 = scmp.ne.s32.totalorder %s135, %s137
    %p144 = scmp.eq.s32.totalorder %s22, 1
    %p145 = por %p143, %p144
    %p146 = scmp.ne.s32.totalorder %s137, %s138
    %p147 = scmp.eq.s32.totalorder %s22, 0
    %p148 = por %p146, %p147
    %p149 = scmp.ne.s32.totalorder %s137, %s138
    %p150 = scmp.eq.s32.totalorder %s23, 1
    %p151 = por %p149, %p150
    %p153 = scmp.ne.s32.totalorder %s138, %s152
    %p154 = scmp.eq.s32.totalorder %s23, 0
    %p155 = por %p153, %p154
    %s157 = sadd.s32 %s156, 1
    %p160 = scmp.eq.s32.totalorder %s17, 1
    %p161 = scmp.ne.s32.totalorder %s156, %s158
    %p162 = scmp.eq.s32.totalorder %s17, 0
    %p163 = por %p161, %p162
    %p164 = scmp.ne.s32.totalorder %s156, %s158
    %p165 = scmp.eq.s32.totalorder %s22, 1
    %p166 = por %p164, %p165
    %p167 = scmp.ne.s32.totalorder %s158, %s159
    %p168 = scmp.eq.s32.totalorder %s22, 0
    %p169 = por %p167, %p168
    %p170 = scmp.ne.s32.totalorder %s158, %s159
    %p171 = scmp.eq.s32.totalorder %s23, 1
    %p172 = por %p170, %p171
    %p174 = scmp.ne.s32.totalorder %s159, %s173
    %p175 = scmp.eq.s32.totalorder %s23, 0
    %p176 = por %p174, %p175
    %s178 = sadd.s32 %s177, 1
    %p181 = scmp.eq.s32.totalorder %s17, 1
    %p182 = scmp.ne.s32.totalorder %s177, %s179
    %p183 = scmp.eq.s32.totalorder %s17, 0
    %p184 = por %p182, %p183
    %p185 = scmp.ne.s32.totalorder %s177, %s179
    %p186 = scmp.eq.s32.totalorder %s22, 1
    %p187 = por %p185, %p186
    %p188 = scmp.ne.s32.totalorder %s179, %s180
    %p189 = scmp.eq.s32.totalorder %s22, 0
    %p190 = por %p188, %p189
    %p191 = scmp.ne.s32.totalorder %s179, %s180
    %p192 = scmp.eq.s32.totalorder %s23, 1
    %p193 = por %p191, %p192
    %p195 = scmp.ne.s32.totalorder %s180, %s194
    %p196 = scmp.eq.s32.totalorder %s23, 0
    %p197 = por %p195, %p196
    %s199 = sadd.s32 %s198, 1
    %p202 = scmp.eq.s32.totalorder %s17, 1
    %p203 = scmp.ne.s32.totalorder %s198, %s200
    %p204 = scmp.eq.s32.totalorder %s17, 0
    %p205 = por %p203, %p204
    %p206 = scmp.ne.s32.totalorder %s198, %s200
    %p207 = scmp.eq.s32.totalorder %s22, 1
    %p208 = por %p206, %p207
    %p209 = scmp.ne.s32.totalorder %s200, %s201
    %p210 = scmp.eq.s32.totalorder %s22, 0
    %p211 = por %p209, %p210
    %p212 = scmp.ne.s32.totalorder %s200, %s201
    %p213 = scmp.eq.s32.totalorder %s23, 1
    %p214 = por %p212, %p213
    %p216 = scmp.ne.s32.totalorder %s201, %s215
    %p217 = scmp.eq.s32.totalorder %s23, 0
    %p218 = por %p216, %p217
    %s220 = sadd.s32 %s219, 1
    %p223 = scmp.eq.s32.totalorder %s17, 1
    %p224 = scmp.ne.s32.totalorder %s219, %s221
    %p225 = scmp.eq.s32.totalorder %s17, 0
    %p226 = por %p224, %p225
    %p227 = scmp.ne.s32.totalorder %s219, %s221
    %p228 = scmp.eq.s32.totalorder %s22, 1
    %p229 = por %p227, %p228
    %p230 = scmp.ne.s32.totalorder %s221, %s222
    %p231 = scmp.eq.s32.totalorder %s22, 0
    %p232 = por %p230, %p231
    %p233 = scmp.ne.s32.totalorder %s221, %s222
    %p234 = scmp.eq.s32.totalorder %s23, 1
    %p235 = por %p233, %p234
    %p237 = scmp.ne.s32.totalorder %s222, %s236
    %p238 = scmp.eq.s32.totalorder %s23, 0
    %p239 = por %p237, %p238
    %s241 = sadd.s32 %s240, 1
    %p244 = scmp.eq.s32.totalorder %s17, 1
    %p245 = scmp.ne.s32.totalorder %s240, %s242
    %p246 = scmp.eq.s32.totalorder %s17, 0
    %p247 = por %p245, %p246
    %p248 = scmp.ne.s32.totalorder %s240, %s242
    %p249 = scmp.eq.s32.totalorder %s22, 1
    %p250 = por %p248, %p249
    %p251 = scmp.ne.s32.totalorder %s242, %s243
    %p252 = scmp.eq.s32.totalorder %s22, 0
    %p253 = por %p251, %p252
    %p254 = scmp.ne.s32.totalorder %s242, %s243
    %p255 = scmp.eq.s32.totalorder %s23, 1
    %p256 = por %p254, %p255
    %p258 = scmp.ne.s32.totalorder %s243, %s257
    %p259 = scmp.eq.s32.totalorder %s23, 0
    %p260 = por %p258, %p259
    %s261 = ssub.s32 %s17, %s24
    %p262 = scmp.eq.s32.totalorder %s261, 0
    %s264 = sadd.s32 %s263, 1
    %s265 = scalar_select %p262, %s263, %s264
    %p268 = pneg %p262
    %p269 = scmp.eq.s32.totalorder %s17, 1
    %p270 = por %p268, %p269
    %p271 = scmp.ne.s32.totalorder %s263, %s266
    %p272 = scmp.eq.s32.totalorder %s17, 0
    %p273 = por %p271, %p272
    %p274 = scmp.ne.s32.totalorder %s263, %s266
    %p275 = scmp.eq.s32.totalorder %s22, 1
    %p276 = por %p274, %p275
    %p277 = scmp.ne.s32.totalorder %s266, %s267
    %p278 = scmp.eq.s32.totalorder %s22, 0
    %p279 = por %p277, %p278
    %p280 = scmp.ne.s32.totalorder %s266, %s267
    %p281 = scmp.eq.s32.totalorder %s23, 1
    %p282 = por %p280, %p281
    %p284 = scmp.ne.s32.totalorder %s267, %s283
    %p285 = scmp.eq.s32.totalorder %s23, 0
    %p286 = por %p284, %p285
    %p287 = scmp.le.s32.totalorder 1, %s17
    %p288 = scmp.lt.s32.totalorder %s17, 3
    %p289 = pnand %p287, %p288
    %p290 = pneg %p289
    // Predicated region
    $region9: #{tpu_custom_call.1} parent=5 // pred_check
      _
    $region10: #{tpu_custom_call.1} parent=5 // pred_check_branch
      %292 = sbr.rel (%p289) target = $region12
    $region11: #{tpu_custom_call.1} parent=5 // pred_region
      %s293 = ssub.s32 %s17, 1
      // Predicated region
      $region13: #{tpu_custom_call.1} parent=11 // pred_check
        %p294 = pneg %p64
      $region14: #{tpu_custom_call.1} parent=11 // pred_check_branch
        %296 = sbr.rel (%p294) target = $region16
      $region15: #{tpu_custom_call.1} parent=11 // pred_region
        _
      $region16: #{tpu_custom_call.1} parent=11 // pred_fallthru
        _
      // Predicated region
      $region17: #{tpu_custom_call.1} parent=11 // pred_check
        %p297 = pneg %p85
      $region18: #{tpu_custom_call.1} parent=11 // pred_check_branch
        %299 = sbr.rel (%p297) target = $region20
      $region19: #{tpu_custom_call.1} parent=11 // pred_region
        _
      $region20: #{tpu_custom_call.1} parent=11 // pred_fallthru
        _
      // Predicated region
      $region21: #{tpu_custom_call.1} parent=11 // pred_check
        %p300 = pneg %p106
      $region22: #{tpu_custom_call.1} parent=11 // pred_check_branch
        %302 = sbr.rel (%p300) target = $region24
      $region23: #{tpu_custom_call.1} parent=11 // pred_region
        _
      $region24: #{tpu_custom_call.1} parent=11 // pred_fallthru
        _
      // Predicated region
      $region25: #{tpu_custom_call.1} parent=11 // pred_check
        %p303 = pneg %p127
      $region26: #{tpu_custom_call.1} parent=11 // pred_check_branch
        %305 = sbr.rel (%p303) target = $region28
      $region27: #{tpu_custom_call.1} parent=11 // pred_region
        _
      $region28: #{tpu_custom_call.1} parent=11 // pred_fallthru
        _
      // Predicated region
      $region29: #{tpu_custom_call.1} parent=11 // pred_check
        %p306 = pneg %p148
      $region30: #{tpu_custom_call.1} parent=11 // pred_check_branch
        %308 = sbr.rel (%p306) target = $region32
      $region31: #{tpu_custom_call.1} parent=11 // pred_region
        _
      $region32: #{tpu_custom_call.1} parent=11 // pred_fallthru
        _
      // Predicated region
      $region33: #{tpu_custom_call.1} parent=11 // pred_check
        %p309 = pneg %p169
      $region34: #{tpu_custom_call.1} parent=11 // pred_check_branch
        %311 = sbr.rel (%p309) target = $region36
      $region35: #{tpu_custom_call.1} parent=11 // pred_region
        _
      $region36: #{tpu_custom_call.1} parent=11 // pred_fallthru
        _
      // Predicated region
      $region37: #{tpu_custom_call.1} parent=11 // pred_check
        %p312 = pneg %p190
      $region38: #{tpu_custom_call.1} parent=11 // pred_check_branch
        %314 = sbr.rel (%p312) target = $region40
      $region39: #{tpu_custom_call.1} parent=11 // pred_region
        _
      $region40: #{tpu_custom_call.1} parent=11 // pred_fallthru
        _
      // Predicated region
      $region41: #{tpu_custom_call.1} parent=11 // pred_check
        %p315 = pneg %p211
      $region42: #{tpu_custom_call.1} parent=11 // pred_check_branch
        %317 = sbr.rel (%p315) target = $region44
      $region43: #{tpu_custom_call.1} parent=11 // pred_region
        _
      $region44: #{tpu_custom_call.1} parent=11 // pred_fallthru
        _
      // Predicated region
      $region45: #{tpu_custom_call.1} parent=11 // pred_check
        %p318 = pneg %p232
      $region46: #{tpu_custom_call.1} parent=11 // pred_check_branch
        %320 = sbr.rel (%p318) target = $region48
      $region47: #{tpu_custom_call.1} parent=11 // pred_region
        _
      $region48: #{tpu_custom_call.1} parent=11 // pred_fallthru
        _
      // Predicated region
      $region49: #{tpu_custom_call.1} parent=11 // pred_check
        %p321 = pneg %p253
      $region50: #{tpu_custom_call.1} parent=11 // pred_check_branch
        %323 = sbr.rel (%p321) target = $region52
      $region51: #{tpu_custom_call.1} parent=11 // pred_region
        _
      $region52: #{tpu_custom_call.1} parent=11 // pred_fallthru
        _
    $region12: #{tpu_custom_call.1} parent=5 // pred_fallthru
      _
    %p324 = scmp.lt.s32.totalorder %s17, 2
    // Predicated region
    $region53: #{tpu_custom_call.1} parent=5 // pred_check
      %p325 = pneg %p324
    $region54: #{tpu_custom_call.1} parent=5 // pred_check_branch
      %327 = sbr.rel (%p325) target = $region56
    $region55: #{tpu_custom_call.1} parent=5 // pred_region
      // Predicated region
      $region57: #{tpu_custom_call.1} parent=55 // pred_check
        %p328 = pneg %p37
      $region58: #{tpu_custom_call.1} parent=55 // pred_check_branch
        %330 = sbr.rel (%p328) target = $region60
      $region59: #{tpu_custom_call.1} parent=55 // pred_region
        %s331 = smul.u32 4, %s17
        %p332 = scmp.lt.s32.totalorder %s331, 7
        %s333 = scalar_select %p332, %s331, 7
        %s334 = smul.addr %s333, 8
        %s335 = scalar_lea.vmem %s0, %s334
        %s336 = smul.u32 4, %s17
      $region60: #{tpu_custom_call.1} parent=55 // pred_fallthru
        _
    $region56: #{tpu_custom_call.1} parent=5 // pred_fallthru
      _
    %p337 = scmp.le.s32.totalorder 1, %s17
    %p338 = scmp.lt.s32.totalorder %s17, 3
    %p339 = pnand %p337, %p338
    %p340 = pneg %p339
    // Predicated region
    $region61: #{tpu_custom_call.1} parent=5 // pred_check
      _
    $region62: #{tpu_custom_call.1} parent=5 // pred_check_branch
      %342 = sbr.rel (%p339) target = $region64
    $region63: #{tpu_custom_call.1} parent=5 // pred_region
      %s343 = ssub.s32 %s17, 1
      %s344 = smul.u32 4, %s22
      %p345 = scmp.lt.s32.totalorder %s344, 7
      %s346 = scalar_select %p345, %s344, 7
      %s347 = smul.addr %s346, 8
      %s348 = scalar_lea.vmem %s0, %s347
      %p349 = pneg %p43
      %p350 = pneg %p40
      %p351 = pneg %p64
      %p352 = pneg %p61
      %p353 = pneg %p85
      %p354 = pneg %p82
      %p355 = pneg %p106
      %p356 = pneg %p103
      %p357 = pneg %p127
      %p358 = pneg %p124
      %p359 = pneg %p148
      %p360 = pneg %p145
      %p361 = pneg %p169
      %p362 = pneg %p166
      %p363 = pneg %p190
      %p364 = pneg %p187
      %p365 = pneg %p211
      %p366 = pneg %p208
      %p367 = pneg %p232
      %p368 = pneg %p229
      %p369 = pneg %p253
      %p370 = pneg %p250
      %p371 = pneg %p279
      %p372 = pneg %p276
      %s373 = smul.u32 4, %s22
      %p374 = scmp.lt.s32.totalorder %s373, 7
      %s375 = scalar_select %p374, %s373, 7
      %s376 = smul.addr %s375, 8
      %s377 = scalar_lea.vmem %s11, %s376
      %s378 = smul.u32 4, %s22
      %p379 = scmp.lt.s32.totalorder %s378, 7
      %s380 = scalar_select %p379, %s378, 7
      %s381 = smul.addr %s380, 8
      %s382 = scalar_lea.vmem %s0, %s381
      %s383 = smul.u32 4, %s22
      %s384 = smul.u32 4, %s22
      %p385 = scmp.lt.s32.totalorder %s384, 7
      %s386 = scalar_select %p385, %s384, 7
      %s387 = smul.addr %s386, 8
      %s388 = scalar_lea.vmem %s11, %s387
      %s389 = smul.u32 4, %s22
      %v390 = vld [vmem:[%s382] sm:$0xff]
      %v391 = vld [vmem:[%s382 + $0x8] sm:$0xff]
      %v392 = vld [vmem:[%s382 + $0x10] sm:$0xff]
      %v393 = vld [vmem:[%s382 + $0x18] sm:$0xff]
      %vm394 = vcmask 130048
      %v395 = vsel %vm394, %v390, 0.0
      %v396 = vsel %vm394, %v391, 0.0
      %v397 = vadd.f32 %v395, %v396
      %v398 = vsel %vm394, %v392, 0.0
      %v399 = vadd.f32 %v397, %v398
      %v400 = vsel %vm394, %v393, 0.0
      %v401 = vadd.f32 %v399, %v400
      %v402 = vrot.slane %v401, 4
      %v403 = vadd.f32 %v401, %v402
      %v404 = vrot.slane %v403, 2
      %v405 = vadd.f32 %v403, %v404
      %v406 = vrot.slane %v405, 1
      %v407 = vadd.f32 %v405, %v406
      %v408 = vrcp.pop 32.0
      %v409 = vmul.f32 %v407, %v408
      %v410 = vsub.f32 %v390, %v409
      %v411 = vsub.f32 %v391, %v409
      %v412 = vsub.f32 %v392, %v409
      %v413 = vsub.f32 %v393, %v409
      %v414 = vmul.f32 %v410, %v410
      %v415 = vmul.f32 %v411, %v411
      %v416 = vmul.f32 %v412, %v412
      %v417 = vmul.f32 %v413, %v413
      %v418 = vsel %vm394, %v414, 0.0
      %v419 = vsel %vm394, %v415, 0.0
      %v420 = vadd.f32 %v418, %v419
      %v421 = vsel %vm394, %v416, 0.0
      %v422 = vadd.f32 %v420, %v421
      %v423 = vsel %vm394, %v417, 0.0
      %v424 = vadd.f32 %v422, %v423
      %v425 = vrot.slane %v424, 4
      %v426 = vadd.f32 %v424, %v425
      %v427 = vrot.slane %v426, 2
      %v428 = vadd.f32 %v426, %v427
      %v429 = vrot.slane %v428, 1
      %v430 = vadd.f32 %v428, %v429
      %v431 = vmul.f32 %v430, %v408
      %v432 = vadd.f32 %v431, 1e-05
      %v433 = vrsqrt.pop %v432
      %v434 = vmul.f32 %v410, %v433
      %v435 = vmul.f32 %v411, %v433
      %v436 = vmul.f32 %v412, %v433
      %v437 = vmul.f32 %v413, %v433
      %v438 = vld [vmem:[%s1] sm:$0xff]
      %v439 = vld [vmem:[%s1 + $0x8] sm:$0xff]
      %v440 = vld [vmem:[%s1 + $0x10] sm:$0xff]
      %v441 = vld [vmem:[%s1 + $0x18] sm:$0xff]
      %443 = vset.pattern.permute.xlu0 0
      %444 = vperm.xlu0 %443, %v438
      %v445 = vpop.permute.xlu0 %444
      %448 = vset.pattern.permute.xlu0 0
      %449 = vperm.xlu0 %448, %v439
      %v450 = vpop.permute.xlu0 %449
      %453 = vset.pattern.permute.xlu0 0
      %454 = vperm.xlu0 %453, %v440
      %v455 = vpop.permute.xlu0 %454
      %458 = vset.pattern.permute.xlu0 0
      %459 = vperm.xlu0 %458, %v441
      %v460 = vpop.permute.xlu0 %459
      %v462 = vmul.f32 %v434, %v445
      %v463 = vmul.f32 %v435, %v450
      %v464 = vmul.f32 %v436, %v455
      %v465 = vmul.f32 %v437, %v460
      %v466 = vld [vmem:[%s2] sm:$0xff]
      %v467 = vld [vmem:[%s2 + $0x8] sm:$0xff]
      %v468 = vld [vmem:[%s2 + $0x10] sm:$0xff]
      %v469 = vld [vmem:[%s2 + $0x18] sm:$0xff]
      %471 = vset.pattern.permute.xlu0 0
      %472 = vperm.xlu0 %471, %v466
      %v473 = vpop.permute.xlu0 %472
      %476 = vset.pattern.permute.xlu0 0
      %477 = vperm.xlu0 %476, %v467
      %v478 = vpop.permute.xlu0 %477
      %481 = vset.pattern.permute.xlu0 0
      %482 = vperm.xlu0 %481, %v468
      %v483 = vpop.permute.xlu0 %482
      %486 = vset.pattern.permute.xlu0 0
      %487 = vperm.xlu0 %486, %v469
      %v488 = vpop.permute.xlu0 %487
      %v490 = vadd.f32 %v462, %v473
      %v491 = vadd.f32 %v463, %v478
      %v492 = vadd.f32 %v464, %v483
      %v493 = vadd.f32 %v465, %v488
      %v494 = vld [vmem:[%s3] sm:$0xff]
      %v495 = vld [vmem:[%s3 + $0x8] sm:$0xff]
      %v496 = vld [vmem:[%s3 + $0x10] sm:$0xff]
      %v497 = vld [vmem:[%s3 + $0x18] sm:$0xff]
      %v498 = vld [vmem:[%s3 + $0x20] sm:$0xff]
      %v499 = vld [vmem:[%s3 + $0x28] sm:$0xff]
      %v500 = vld [vmem:[%s3 + $0x30] sm:$0xff]
      %v501 = vld [vmem:[%s3 + $0x38] sm:$0xff]
      %v502 = vld [vmem:[%s3 + $0x40] sm:$0xff]
      %v503 = vld [vmem:[%s3 + $0x48] sm:$0xff]
      %v504 = vld [vmem:[%s3 + $0x50] sm:$0xff]
      %v505 = vld [vmem:[%s3 + $0x58] sm:$0xff]
      %v506 = vld [vmem:[%s3 + $0x60] sm:$0xff]
      %v507 = vld [vmem:[%s3 + $0x68] sm:$0xff]
      %v508 = vld [vmem:[%s3 + $0x70] sm:$0xff]
      %v509 = vld [vmem:[%s3 + $0x78] sm:$0xff]
      %v510 = vld [vmem:[%s4] sm:$0xff]
      %v511 = vld [vmem:[%s4 + $0x8] sm:$0xff]
      %v512 = vld [vmem:[%s4 + $0x10] sm:$0xff]
      %v513 = vld [vmem:[%s4 + $0x18] sm:$0xff]
      %v514 = vld [vmem:[%s4 + $0x20] sm:$0xff]
      %v515 = vld [vmem:[%s4 + $0x28] sm:$0xff]
      %v516 = vld [vmem:[%s4 + $0x30] sm:$0xff]
      %v517 = vld [vmem:[%s4 + $0x38] sm:$0xff]
      %v518 = vld [vmem:[%s4 + $0x40] sm:$0xff]
      %v519 = vld [vmem:[%s4 + $0x48] sm:$0xff]
      %v520 = vld [vmem:[%s4 + $0x50] sm:$0xff]
      %v521 = vld [vmem:[%s4 + $0x58] sm:$0xff]
      %v522 = vld [vmem:[%s4 + $0x60] sm:$0xff]
      %v523 = vld [vmem:[%s4 + $0x68] sm:$0xff]
      %v524 = vld [vmem:[%s4 + $0x70] sm:$0xff]
      %v525 = vld [vmem:[%s4 + $0x78] sm:$0xff]
      %527 = vset.pattern.permute.xlu0 0
      %528 = vperm.xlu0 %527, %v510
      %v529 = vpop.permute.xlu0 %528
      %532 = vset.pattern.permute.xlu0 0
      %533 = vperm.xlu0 %532, %v511
      %v534 = vpop.permute.xlu0 %533
      %537 = vset.pattern.permute.xlu0 0
      %538 = vperm.xlu0 %537, %v512
      %v539 = vpop.permute.xlu0 %538
      %542 = vset.pattern.permute.xlu0 0
      %543 = vperm.xlu0 %542, %v513
      %v544 = vpop.permute.xlu0 %543
      %547 = vset.pattern.permute.xlu0 0
      %548 = vperm.xlu0 %547, %v514
      %v549 = vpop.permute.xlu0 %548
      %552 = vset.pattern.permute.xlu0 0
      %553 = vperm.xlu0 %552, %v515
      %v554 = vpop.permute.xlu0 %553
      %557 = vset.pattern.permute.xlu0 0
      %558 = vperm.xlu0 %557, %v516
      %v559 = vpop.permute.xlu0 %558
      %562 = vset.pattern.permute.xlu0 0
      %563 = vperm.xlu0 %562, %v517
      %v564 = vpop.permute.xlu0 %563
      %567 = vset.pattern.permute.xlu0 0
      %568 = vperm.xlu0 %567, %v518
      %v569 = vpop.permute.xlu0 %568
      %572 = vset.pattern.permute.xlu0 0
      %573 = vperm.xlu0 %572, %v519
      %v574 = vpop.permute.xlu0 %573
      %577 = vset.pattern.permute.xlu0 0
      %578 = vperm.xlu0 %577, %v520
      %v579 = vpop.permute.xlu0 %578
      %582 = vset.pattern.permute.xlu0 0
      %583 = vperm.xlu0 %582, %v521
      %v584 = vpop.permute.xlu0 %583
      %587 = vset.pattern.permute.xlu0 0
      %588 = vperm.xlu0 %587, %v522
      %v589 = vpop.permute.xlu0 %588
      %592 = vset.pattern.permute.xlu0 0
      %593 = vperm.xlu0 %592, %v523
      %v594 = vpop.permute.xlu0 %593
      %597 = vset.pattern.permute.xlu0 0
      %598 = vperm.xlu0 %597, %v524
      %v599 = vpop.permute.xlu0 %598
      %602 = vset.pattern.permute.xlu0 0
      %603 = vperm.xlu0 %602, %v525
      %v604 = vpop.permute.xlu0 %603
      %vm606 = vcmask 261120
      %v608 = vsel %vm606, %v494, 0
      %v611 = vsel %vm606, %v495, 0
      %v614 = vsel %vm606, %v496, 0
      %v617 = vsel %vm606, %v497, 0
      %v620 = vsel %vm606, %v498, 0
      %v623 = vsel %vm606, %v499, 0
      %v626 = vsel %vm606, %v500, 0
      %v629 = vsel %vm606, %v501, 0
      %v632 = vsel %vm606, %v502, 0
      %v635 = vsel %vm606, %v503, 0
      %v638 = vsel %vm606, %v504, 0
      %v641 = vsel %vm606, %v505, 0
      %v644 = vsel %vm606, %v506, 0
      %v647 = vsel %vm606, %v507, 0
      %v650 = vsel %vm606, %v508, 0
      %v653 = vsel %vm606, %v509, 0
      %655 = vmatprep.subr.mxu0 0.0
      %656 = vmatpush1.msra.mxu0 %v490
      %657 = vmatprep.subr.mxu0 0.0
      %658 = vmatpush1.msra.mxu0 %v491
      %659 = vmatprep.subr.mxu0 0.0
      %660 = vmatpush1.msra.mxu0 %v492
      %661 = vmatprep.subr.mxu0 0.0
      %662 = vmatpush1.msra.mxu0 %v493
      %663 = vmatprep.subr.mxu0 0.0
      %664 = vmatpush1.msra.mxu0 0.0
      %665 = vmatprep.subr.mxu0 0.0
      %666 = vmatpush1.msra.mxu0 0.0
      %667 = vmatprep.subr.mxu0 0.0
      %668 = vmatpush1.msra.mxu0 0.0
      %669 = vmatprep.subr.mxu0 0.0
      %670 = vmatpush1.msra.mxu0 0.0
      %671 = vmatprep.subr.mxu0 0.0
      %672 = vmatpush1.msra.mxu0 0.0
      %673 = vmatprep.subr.mxu0 0.0
      %674 = vmatpush1.msra.mxu0 0.0
      %675 = vmatprep.subr.mxu0 0.0
      %676 = vmatpush1.msra.mxu0 0.0
      %677 = vmatprep.subr.mxu0 0.0
      %678 = vmatpush1.msra.mxu0 0.0
      %679 = vmatprep.subr.mxu0 0.0
      %680 = vmatpush1.msra.mxu0 0.0
      %681 = vmatprep.subr.mxu0 0.0
      %682 = vmatpush1.msra.mxu0 0.0
      %683 = vmatprep.subr.mxu0 0.0
      %684 = vmatpush1.msra.mxu0 0.0
      %685 = vmatprep.subr.mxu0 0.0
      %686 = vmatpush1.msra.mxu0 0.0
      %687 = vmatprep.subr.mxu0 0.0
      %688 = vmatpush1.msra.mxu0 0.0
      %689 = vmatprep.subr.mxu0 0.0
      %690 = vmatpush1.msra.mxu0 0.0
      %691 = vmatprep.subr.mxu0 0.0
      %692 = vmatpush1.msra.mxu0 0.0
      %693 = vmatprep.subr.mxu0 0.0
      %694 = vmatpush1.msra.mxu0 0.0
      %695 = vmatprep.subr.mxu0 0.0
      %696 = vmatpush1.msra.mxu0 0.0
      %697 = vmatprep.subr.mxu0 0.0
      %698 = vmatpush1.msra.mxu0 0.0
      %699 = vmatprep.subr.mxu0 0.0
      %700 = vmatpush1.msra.mxu0 0.0
      %701 = vmatprep.subr.mxu0 0.0
      %702 = vmatpush1.msra.mxu0 0.0
      %703 = vmatprep.subr.mxu0 0.0
      %704 = vmatpush1.msra.mxu0 0.0
      %705 = vmatprep.subr.mxu0 0.0
      %706 = vmatpush1.msra.mxu0 0.0
      %707 = vmatprep.subr.mxu0 0.0
      %708 = vmatpush1.msra.mxu0 0.0
      %709 = vmatprep.subr.mxu0 0.0
      %710 = vmatpush1.msra.mxu0 0.0
      %711 = vmatprep.subr.mxu0 0.0
      %712 = vmatpush1.msra.mxu0 0.0
      %713 = vmatprep.subr.mxu0 0.0
      %714 = vmatpush1.msra.mxu0 0.0
      %715 = vmatprep.subr.mxu0 0.0
      %716 = vmatpush1.msra.mxu0 0.0
      %717 = vmatprep.subr.mxu0 0.0
      %718 = vmatpush1.msra.mxu0 0.0
      %719 = vmatprep.mubr.f32.mxu0 0.0
      %720 = vmatmul.mubr.f32.gmra.mrb[0].mxu0 %v608
      %v721 = vpop.f32.mrb[0].mxu0
      %v722 = vadd.f32 %v529, %v721
      %v723 = vpop.f32.mrb[0].mxu0
      %724 = vmatprep.mubr.f32.mxu0 0.0
      %725 = vmatmul.mubr.f32.gmra.mrb[0].mxu0 %v611
      %v726 = vpop.f32.mrb[0].mxu0
      %v727 = vadd.f32 %v534, %v726
      %v728 = vpop.f32.mrb[0].mxu0
      %729 = vmatprep.mubr.f32.mxu0 0.0
      %730 = vmatmul.mubr.f32.gmra.mrb[0].mxu0 %v614
      %v731 = vpop.f32.mrb[0].mxu0
      %v732 = vadd.f32 %v539, %v731
      %v733 = vpop.f32.mrb[0].mxu0
      %734 = vmatprep.mubr.f32.mxu0 0.0
      %735 = vmatmul.mubr.f32.gmra.mrb[0].mxu0 %v617
      %v736 = vpop.f32.mrb[0].mxu0
      %v737 = vadd.f32 %v544, %v736
      %v738 = vpop.f32.mrb[0].mxu0
      %739 = vmatprep.mubr.f32.mxu0 0.0
      %740 = vmatmul.mubr.f32.gmra.mrb[0].mxu0 %v620
      %v741 = vpop.f32.mrb[0].mxu0
      %v742 = vadd.f32 %v549, %v741
      %v743 = vpop.f32.mrb[0].mxu0
      %744 = vmatprep.mubr.f32.mxu0 0.0
      %745 = vmatmul.mubr.f32.gmra.mrb[0].mxu0 %v623
      %v746 = vpop.f32.mrb[0].mxu0
      %v747 = vadd.f32 %v554, %v746
      %v748 = vpop.f32.mrb[0].mxu0
      %749 = vmatprep.mubr.f32.mxu0 0.0
      %750 = vmatmul.mubr.f32.gmra.mrb[0].mxu0 %v626
      %v751 = vpop.f32.mrb[0].mxu0
      %v752 = vadd.f32 %v559, %v751
      %v753 = vpop.f32.mrb[0].mxu0
      %754 = vmatprep.mubr.f32.mxu0 0.0
      %755 = vmatmul.mubr.f32.gmra.mrb[0].mxu0 %v629
      %v756 = vpop.f32.mrb[0].mxu0
      %v757 = vadd.f32 %v564, %v756
      %v758 = vpop.f32.mrb[0].mxu0
      %759 = vmatprep.mubr.f32.mxu0 0.0
      %760 = vmatmul.mubr.f32.gmra.mrb[0].mxu0 %v632
      %v761 = vpop.f32.mrb[0].mxu0
      %v762 = vadd.f32 %v569, %v761
      %v763 = vpop.f32.mrb[0].mxu0
      %764 = vmatprep.mubr.f32.mxu0 0.0
      %765 = vmatmul.mubr.f32.gmra.mrb[0].mxu0 %v635
      %v766 = vpop.f32.mrb[0].mxu0
      %v767 = vadd.f32 %v574, %v766
      %v768 = vpop.f32.mrb[0].mxu0
      %769 = vmatprep.mubr.f32.mxu0 0.0
      %770 = vmatmul.mubr.f32.gmra.mrb[0].mxu0 %v638
      %v771 = vpop.f32.mrb[0].mxu0
      %v772 = vadd.f32 %v579, %v771
      %v773 = vpop.f32.mrb[0].mxu0
      %774 = vmatprep.mubr.f32.mxu0 0.0
      %775 = vmatmul.mubr.f32.gmra.mrb[0].mxu0 %v641
      %v776 = vpop.f32.mrb[0].mxu0
      %v777 = vadd.f32 %v584, %v776
      %v778 = vpop.f32.mrb[0].mxu0
      %779 = vmatprep.mubr.f32.mxu0 0.0
      %780 = vmatmul.mubr.f32.gmra.mrb[0].mxu0 %v644
      %v781 = vpop.f32.mrb[0].mxu0
      %v782 = vadd.f32 %v589, %v781
      %v783 = vpop.f32.mrb[0].mxu0
      %784 = vmatprep.mubr.f32.mxu0 0.0
      %785 = vmatmul.mubr.f32.gmra.mrb[0].mxu0 %v647
      %v786 = vpop.f32.mrb[0].mxu0
      %v787 = vadd.f32 %v594, %v786
      %v788 = vpop.f32.mrb[0].mxu0
      %789 = vmatprep.mubr.f32.mxu0 0.0
      %790 = vmatmul.mubr.f32.gmra.mrb[0].mxu0 %v650
      %v791 = vpop.f32.mrb[0].mxu0
      %v792 = vadd.f32 %v599, %v791
      %v793 = vpop.f32.mrb[0].mxu0
      %794 = vmatprep.mubr.f32.mxu0 0.0
      %795 = vmatmul.mubr.f32.gmra.mrb[0].mxu0 %v653
      %v796 = vpop.f32.mrb[0].mxu0
      %v797 = vadd.f32 %v604, %v796
      %v798 = vpop.f32.mrb[0].mxu0
      %799 = vdwg.mxu0
      %v800 = vxor.u32 %v762, 2147483648
      %v801 = vxor.u32 %v767, 2147483648
      %v802 = vxor.u32 %v772, 2147483648
      %v803 = vxor.u32 %v777, 2147483648
      %v804 = vxor.u32 %v782, 2147483648
      %v805 = vxor.u32 %v787, 2147483648
      %v806 = vxor.u32 %v792, 2147483648
      %v807 = vxor.u32 %v797, 2147483648
      %v808 = vmul.f32 %v800, 1.442695
      %v809 = vpow.pop %v808
      %v810 = vmul.f32 %v801, 1.442695
      %v811 = vpow.pop %v810
      %v812 = vmul.f32 %v802, 1.442695
      %v813 = vpow.pop %v812
      %v814 = vmul.f32 %v803, 1.442695
      %v815 = vpow.pop %v814
      %v816 = vmul.f32 %v804, 1.442695
      %v817 = vpow.pop %v816
      %v818 = vmul.f32 %v805, 1.442695
      %v819 = vpow.pop %v818
      %v820 = vmul.f32 %v806, 1.442695
      %v821 = vpow.pop %v820
      %v822 = vmul.f32 %v807, 1.442695
      %v823 = vpow.pop %v822
      %v824 = vadd.f32 %v809, 1.0
      %v825 = vadd.f32 %v811, 1.0
      %v826 = vadd.f32 %v813, 1.0
      %v827 = vadd.f32 %v815, 1.0
      %v828 = vadd.f32 %v817, 1.0
      %v829 = vadd.f32 %v819, 1.0
      %v830 = vadd.f32 %v821, 1.0
      %v831 = vadd.f32 %v823, 1.0
      %v832 = vrcp.pop %v824
      %v833 = vmul.f32 1.0, %v832
      %v834 = vrcp.pop %v825
      %v835 = vmul.f32 1.0, %v834
      %v836 = vrcp.pop %v826
      %v837 = vmul.f32 1.0, %v836
      %v838 = vrcp.pop %v827
      %v839 = vmul.f32 1.0, %v838
      %v840 = vrcp.pop %v828
      %v841 = vmul.f32 1.0, %v840
      %v842 = vrcp.pop %v829
      %v843 = vmul.f32 1.0, %v842
      %v844 = vrcp.pop %v830
      %v845 = vmul.f32 1.0, %v844
      %v846 = vrcp.pop %v831
      %v847 = vmul.f32 1.0, %v846
      %v848 = vmul.f32 %v722, %v833
      %v849 = vmul.f32 %v727, %v835
      %v850 = vmul.f32 %v732, %v837
      %v851 = vmul.f32 %v737, %v839
      %v852 = vmul.f32 %v742, %v841
      %v853 = vmul.f32 %v747, %v843
      %v854 = vmul.f32 %v752, %v845
      %v855 = vmul.f32 %v757, %v847
      %vm856 = vcmask 121856
      %857 = vst.msk [vmem:[#allocation2] sm:$0xff] %vm856, 0.0
      %858 = vst.msk [vmem:[#allocation2 + $0x8] sm:$0xff] %vm856, 0.0
      %859 = vst.msk [vmem:[#allocation2 + $0x10] sm:$0xff] %vm856, 0.0
      %860 = vst.msk [vmem:[#allocation2 + $0x18] sm:$0xff] %vm856, 0.0
      %861 = vst.msk [vmem:[#allocation2 + $0x20] sm:$0xff] %vm856, 0.0
      %862 = vst.msk [vmem:[#allocation2 + $0x28] sm:$0xff] %vm856, 0.0
      %863 = vst.msk [vmem:[#allocation2 + $0x30] sm:$0xff] %vm856, 0.0
      %864 = vst.msk [vmem:[#allocation2 + $0x38] sm:$0xff] %vm856, 0.0
      %vm865 = vcmask 376056
      %866 = vst.msk [vmem:[#allocation2] sm:$0xff] %vm865, 0.0
      %867 = vst.msk [vmem:[#allocation2 + $0x8] sm:$0xff] %vm865, 0.0
      %868 = vst.msk [vmem:[#allocation2 + $0x10] sm:$0xff] %vm865, 0.0
      %869 = vst.msk [vmem:[#allocation2 + $0x18] sm:$0xff] %vm865, 0.0
      %870 = vst.msk [vmem:[#allocation2 + $0x20] sm:$0xff] %vm865, 0.0
      %871 = vst.msk [vmem:[#allocation2 + $0x28] sm:$0xff] %vm865, 0.0
      %872 = vst.msk [vmem:[#allocation2 + $0x30] sm:$0xff] %vm865, 0.0
      %873 = vst.msk [vmem:[#allocation2 + $0x38] sm:$0xff] %vm865, 0.0
      %882 = vrot.lane.b32.xlu0 %v848, 15
      %v883 = vpop.permute.xlu0 %882
      %884 = vrot.lane.b32.xlu0 %v849, 15
      %v885 = vpop.permute.xlu0 %884
      %886 = vrot.lane.b32.xlu0 %v850, 15
      %v887 = vpop.permute.xlu0 %886
      %888 = vrot.lane.b32.xlu0 %v851, 15
      %v889 = vpop.permute.xlu0 %888
      %890 = vrot.lane.b32.xlu0 %v852, 15
      %v891 = vpop.permute.xlu0 %890
      %892 = vrot.lane.b32.xlu0 %v853, 15
      %v893 = vpop.permute.xlu0 %892
      %894 = vrot.lane.b32.xlu0 %v854, 15
      %v895 = vpop.permute.xlu0 %894
      %896 = vrot.lane.b32.xlu0 %v855, 15
      %v897 = vpop.permute.xlu0 %896
      %vm906 = vcmask 253048
      %907 = vst.msk [vmem:[#allocation2] sm:$0xff] %vm906, %v883
      %908 = vst.msk [vmem:[#allocation2 + $0x8] sm:$0xff] %vm906, %v885
      %909 = vst.msk [vmem:[#allocation2 + $0x10] sm:$0xff] %vm906, %v887
      %910 = vst.msk [vmem:[#allocation2 + $0x18] sm:$0xff] %vm906, %v889
      %911 = vst.msk [vmem:[#allocation2 + $0x20] sm:$0xff] %vm906, %v891
      %912 = vst.msk [vmem:[#allocation2 + $0x28] sm:$0xff] %vm906, %v893
      %913 = vst.msk [vmem:[#allocation2 + $0x30] sm:$0xff] %vm906, %v895
      %914 = vst.msk [vmem:[#allocation2 + $0x38] sm:$0xff] %vm906, %v897
      %v915 = vld [vmem:[%s5] sm:$0xff]
      %v916 = vld [vmem:[%s5 + $0x8] sm:$0xff]
      %v917 = vld [vmem:[%s5 + $0x10] sm:$0xff]
      %v918 = vld [vmem:[%s5 + $0x18] sm:$0xff]
      %v919 = vld [vmem:[%s5 + $0x20] sm:$0xff]
      %v920 = vld [vmem:[%s5 + $0x28] sm:$0xff]
      %v921 = vld [vmem:[%s5 + $0x30] sm:$0xff]
      %v922 = vld [vmem:[%s5 + $0x38] sm:$0xff]
      %v923 = vld [vmem:[#allocation2] sm:$0xff]
      %v924 = vld [vmem:[#allocation2 + $0x8] sm:$0xff]
      %v925 = vld [vmem:[#allocation2 + $0x10] sm:$0xff]
      %v926 = vld [vmem:[#allocation2 + $0x18] sm:$0xff]
      %v927 = vld [vmem:[#allocation2 + $0x20] sm:$0xff]
      %v928 = vld [vmem:[#allocation2 + $0x28] sm:$0xff]
      %v929 = vld [vmem:[#allocation2 + $0x30] sm:$0xff]
      %v930 = vld [vmem:[#allocation2 + $0x38] sm:$0xff]
      %932 = vset.pattern.permute.xlu0 0
      %933 = vperm.xlu0 %932, %v915
      %v934 = vpop.permute.xlu0 %933
      %937 = vset.pattern.permute.xlu0 0
      %938 = vperm.xlu0 %937, %v916
      %v939 = vpop.permute.xlu0 %938
      %942 = vset.pattern.permute.xlu0 0
      %943 = vperm.xlu0 %942, %v917
      %v944 = vpop.permute.xlu0 %943
      %947 = vset.pattern.permute.xlu0 0
      %948 = vperm.xlu0 %947, %v918
      %v949 = vpop.permute.xlu0 %948
      %952 = vset.pattern.permute.xlu0 0
      %953 = vperm.xlu0 %952, %v919
      %v954 = vpop.permute.xlu0 %953
      %957 = vset.pattern.permute.xlu0 0
      %958 = vperm.xlu0 %957, %v920
      %v959 = vpop.permute.xlu0 %958
      %962 = vset.pattern.permute.xlu0 0
      %963 = vperm.xlu0 %962, %v921
      %v964 = vpop.permute.xlu0 %963
      %967 = vset.pattern.permute.xlu0 0
      %968 = vperm.xlu0 %967, %v922
      %v969 = vpop.permute.xlu0 %968
      %v971 = vmul.f32 %v923, %v934
      %v972 = vmul.f32 %v924, %v939
      %v973 = vmul.f32 %v925, %v944
      %v974 = vmul.f32 %v926, %v949
      %v975 = vmul.f32 %v927, %v954
      %v976 = vmul.f32 %v928, %v959
      %v977 = vmul.f32 %v929, %v964
      %v978 = vmul.f32 %v930, %v969
      %v979 = vadd.f32 %v971, 0.0
      %v980 = vadd.f32 %v972, 0.0
      %v981 = vadd.f32 %v973, 0.0
      %v982 = vadd.f32 %v974, 0.0
      %v983 = vadd.f32 %v975, 0.0
      %v984 = vadd.f32 %v976, 0.0
      %v985 = vadd.f32 %v977, 0.0
      %v986 = vadd.f32 %v978, 0.0
      %987 = vset.pattern.permute.xlu0 1
      %988 = vperm.xlu0 %987, %v915
      %v989 = vpop.permute.xlu0 %988
      %991 = vset.pattern.permute.xlu0 1
      %992 = vperm.xlu0 %991, %v916
      %v993 = vpop.permute.xlu0 %992
      %995 = vset.pattern.permute.xlu0 1
      %996 = vperm.xlu0 %995, %v917
      %v997 = vpop.permute.xlu0 %996
      %999 = vset.pattern.permute.xlu0 1
      %1000 = vperm.xlu0 %999, %v918
      %v1001 = vpop.permute.xlu0 %1000
      %1003 = vset.pattern.permute.xlu0 1
      %1004 = vperm.xlu0 %1003, %v919
      %v1005 = vpop.permute.xlu0 %1004
      %1007 = vset.pattern.permute.xlu0 1
      %1008 = vperm.xlu0 %1007, %v920
      %v1009 = vpop.permute.xlu0 %1008
      %1011 = vset.pattern.permute.xlu0 1
      %1012 = vperm.xlu0 %1011, %v921
      %v1013 = vpop.permute.xlu0 %1012
      %1015 = vset.pattern.permute.xlu0 1
      %1016 = vperm.xlu0 %1015, %v922
      %v1017 = vpop.permute.xlu0 %1016
      %v1019 = vmul.f32 %v923, %v989
      %v1020 = vmul.f32 %v924, %v993
      %v1021 = vmul.f32 %v925, %v997
      %v1022 = vmul.f32 %v926, %v1001
      %v1023 = vmul.f32 %v927, %v1005
      %v1024 = vmul.f32 %v928, %v1009
      %v1025 = vmul.f32 %v929, %v1013
      %v1026 = vmul.f32 %v930, %v1017
      %1035 = vrot.lane.b32.xlu0 %v1019, 127
      %v1036 = vpop.permute.xlu0 %1035
      %1037 = vrot.lane.b32.xlu0 %v1020, 127
      %v1038 = vpop.permute.xlu0 %1037
      %1039 = vrot.lane.b32.xlu0 %v1021, 127
      %v1040 = vpop.permute.xlu0 %1039
      %1041 = vrot.lane.b32.xlu0 %v1022, 127
      %v1042 = vpop.permute.xlu0 %1041
      %1043 = vrot.lane.b32.xlu0 %v1023, 127
      %v1044 = vpop.permute.xlu0 %1043
      %1045 = vrot.lane.b32.xlu0 %v1024, 127
      %v1046 = vpop.permute.xlu0 %1045
      %1047 = vrot.lane.b32.xlu0 %v1025, 127
      %v1048 = vpop.permute.xlu0 %1047
      %1049 = vrot.lane.b32.xlu0 %v1026, 127
      %v1050 = vpop.permute.xlu0 %1049
      %v1059 = vadd.f32 %v979, %v1036
      %v1060 = vadd.f32 %v980, %v1038
      %v1061 = vadd.f32 %v981, %v1040
      %v1062 = vadd.f32 %v982, %v1042
      %v1063 = vadd.f32 %v983, %v1044
      %v1064 = vadd.f32 %v984, %v1046
      %v1065 = vadd.f32 %v985, %v1048
      %v1066 = vadd.f32 %v986, %v1050
      %1067 = vset.pattern.permute.xlu0 2
      %1068 = vperm.xlu0 %1067, %v915
      %v1069 = vpop.permute.xlu0 %1068
      %1071 = vset.pattern.permute.xlu0 2
      %1072 = vperm.xlu0 %1071, %v916
      %v1073 = vpop.permute.xlu0 %1072
      %1075 = vset.pattern.permute.xlu0 2
      %1076 = vperm.xlu0 %1075, %v917
      %v1077 = vpop.permute.xlu0 %1076
      %1079 = vset.pattern.permute.xlu0 2
      %1080 = vperm.xlu0 %1079, %v918
      %v1081 = vpop.permute.xlu0 %1080
      %1083 = vset.pattern.permute.xlu0 2
      %1084 = vperm.xlu0 %1083, %v919
      %v1085 = vpop.permute.xlu0 %1084
      %1087 = vset.pattern.permute.xlu0 2
      %1088 = vperm.xlu0 %1087, %v920
      %v1089 = vpop.permute.xlu0 %1088
      %1091 = vset.pattern.permute.xlu0 2
      %1092 = vperm.xlu0 %1091, %v921
      %v1093 = vpop.permute.xlu0 %1092
      %1095 = vset.pattern.permute.xlu0 2
      %1096 = vperm.xlu0 %1095, %v922
      %v1097 = vpop.permute.xlu0 %1096
      %v1099 = vmul.f32 %v923, %v1069
      %v1100 = vmul.f32 %v924, %v1073
      %v1101 = vmul.f32 %v925, %v1077
      %v1102 = vmul.f32 %v926, %v1081
      %v1103 = vmul.f32 %v927, %v1085
      %v1104 = vmul.f32 %v928, %v1089
      %v1105 = vmul.f32 %v929, %v1093
      %v1106 = vmul.f32 %v930, %v1097
      %1115 = vrot.lane.b32.xlu0 %v1099, 126
      %v1116 = vpop.permute.xlu0 %1115
      %1117 = vrot.lane.b32.xlu0 %v1100, 126
      %v1118 = vpop.permute.xlu0 %1117
      %1119 = vrot.lane.b32.xlu0 %v1101, 126
      %v1120 = vpop.permute.xlu0 %1119
      %1121 = vrot.lane.b32.xlu0 %v1102, 126
      %v1122 = vpop.permute.xlu0 %1121
      %1123 = vrot.lane.b32.xlu0 %v1103, 126
      %v1124 = vpop.permute.xlu0 %1123
      %1125 = vrot.lane.b32.xlu0 %v1104, 126
      %v1126 = vpop.permute.xlu0 %1125
      %1127 = vrot.lane.b32.xlu0 %v1105, 126
      %v1128 = vpop.permute.xlu0 %1127
      %1129 = vrot.lane.b32.xlu0 %v1106, 126
      %v1130 = vpop.permute.xlu0 %1129
      %v1139 = vadd.f32 %v1059, %v1116
      %v1140 = vadd.f32 %v1060, %v1118
      %v1141 = vadd.f32 %v1061, %v1120
      %v1142 = vadd.f32 %v1062, %v1122
      %v1143 = vadd.f32 %v1063, %v1124
      %v1144 = vadd.f32 %v1064, %v1126
      %v1145 = vadd.f32 %v1065, %v1128
      %v1146 = vadd.f32 %v1066, %v1130
      %1147 = vset.pattern.permute.xlu0 3
      %1148 = vperm.xlu0 %1147, %v915
      %v1149 = vpop.permute.xlu0 %1148
      %1151 = vset.pattern.permute.xlu0 3
      %1152 = vperm.xlu0 %1151, %v916
      %v1153 = vpop.permute.xlu0 %1152
      %1155 = vset.pattern.permute.xlu0 3
      %1156 = vperm.xlu0 %1155, %v917
      %v1157 = vpop.permute.xlu0 %1156
      %1159 = vset.pattern.permute.xlu0 3
      %1160 = vperm.xlu0 %1159, %v918
      %v1161 = vpop.permute.xlu0 %1160
      %1163 = vset.pattern.permute.xlu0 3
      %1164 = vperm.xlu0 %1163, %v919
      %v1165 = vpop.permute.xlu0 %1164
      %1167 = vset.pattern.permute.xlu0 3
      %1168 = vperm.xlu0 %1167, %v920
      %v1169 = vpop.permute.xlu0 %1168
      %1171 = vset.pattern.permute.xlu0 3
      %1172 = vperm.xlu0 %1171, %v921
      %v1173 = vpop.permute.xlu0 %1172
      %1175 = vset.pattern.permute.xlu0 3
      %1176 = vperm.xlu0 %1175, %v922
      %v1177 = vpop.permute.xlu0 %1176
      %v1179 = vmul.f32 %v923, %v1149
      %v1180 = vmul.f32 %v924, %v1153
      %v1181 = vmul.f32 %v925, %v1157
      %v1182 = vmul.f32 %v926, %v1161
      %v1183 = vmul.f32 %v927, %v1165
      %v1184 = vmul.f32 %v928, %v1169
      %v1185 = vmul.f32 %v929, %v1173
      %v1186 = vmul.f32 %v930, %v1177
      %1195 = vrot.lane.b32.xlu0 %v1179, 125
      %v1196 = vpop.permute.xlu0 %1195
      %1197 = vrot.lane.b32.xlu0 %v1180, 125
      %v1198 = vpop.permute.xlu0 %1197
      %1199 = vrot.lane.b32.xlu0 %v1181, 125
      %v1200 = vpop.permute.xlu0 %1199
      %1201 = vrot.lane.b32.xlu0 %v1182, 125
      %v1202 = vpop.permute.xlu0 %1201
      %1203 = vrot.lane.b32.xlu0 %v1183, 125
      %v1204 = vpop.permute.xlu0 %1203
      %1205 = vrot.lane.b32.xlu0 %v1184, 125
      %v1206 = vpop.permute.xlu0 %1205
      %1207 = vrot.lane.b32.xlu0 %v1185, 125
      %v1208 = vpop.permute.xlu0 %1207
      %1209 = vrot.lane.b32.xlu0 %v1186, 125
      %v1210 = vpop.permute.xlu0 %1209
      %v1219 = vadd.f32 %v1139, %v1196
      %v1220 = vadd.f32 %v1140, %v1198
      %v1221 = vadd.f32 %v1141, %v1200
      %v1222 = vadd.f32 %v1142, %v1202
      %v1223 = vadd.f32 %v1143, %v1204
      %v1224 = vadd.f32 %v1144, %v1206
      %v1225 = vadd.f32 %v1145, %v1208
      %v1226 = vadd.f32 %v1146, %v1210
      %1227 = vset.pattern.permute.xlu0 4
      %1228 = vperm.xlu0 %1227, %v915
      %v1229 = vpop.permute.xlu0 %1228
      %1231 = vset.pattern.permute.xlu0 4
      %1232 = vperm.xlu0 %1231, %v916
      %v1233 = vpop.permute.xlu0 %1232
      %1235 = vset.pattern.permute.xlu0 4
      %1236 = vperm.xlu0 %1235, %v917
      %v1237 = vpop.permute.xlu0 %1236
      %1239 = vset.pattern.permute.xlu0 4
      %1240 = vperm.xlu0 %1239, %v918
      %v1241 = vpop.permute.xlu0 %1240
      %1243 = vset.pattern.permute.xlu0 4
      %1244 = vperm.xlu0 %1243, %v919
      %v1245 = vpop.permute.xlu0 %1244
      %1247 = vset.pattern.permute.xlu0 4
      %1248 = vperm.xlu0 %1247, %v920
      %v1249 = vpop.permute.xlu0 %1248
      %1251 = vset.pattern.permute.xlu0 4
      %1252 = vperm.xlu0 %1251, %v921
      %v1253 = vpop.permute.xlu0 %1252
      %1255 = vset.pattern.permute.xlu0 4
      %1256 = vperm.xlu0 %1255, %v922
      %v1257 = vpop.permute.xlu0 %1256
      %v1259 = vmul.f32 %v923, %v1229
      %v1260 = vmul.f32 %v924, %v1233
      %v1261 = vmul.f32 %v925, %v1237
      %v1262 = vmul.f32 %v926, %v1241
      %v1263 = vmul.f32 %v927, %v1245
      %v1264 = vmul.f32 %v928, %v1249
      %v1265 = vmul.f32 %v929, %v1253
      %v1266 = vmul.f32 %v930, %v1257
      %1275 = vrot.lane.b32.xlu0 %v1259, 124
      %v1276 = vpop.permute.xlu0 %1275
      %1277 = vrot.lane.b32.xlu0 %v1260, 124
      %v1278 = vpop.permute.xlu0 %1277
      %1279 = vrot.lane.b32.xlu0 %v1261, 124
      %v1280 = vpop.permute.xlu0 %1279
      %1281 = vrot.lane.b32.xlu0 %v1262, 124
      %v1282 = vpop.permute.xlu0 %1281
      %1283 = vrot.lane.b32.xlu0 %v1263, 124
      %v1284 = vpop.permute.xlu0 %1283
      %1285 = vrot.lane.b32.xlu0 %v1264, 124
      %v1286 = vpop.permute.xlu0 %1285
      %1287 = vrot.lane.b32.xlu0 %v1265, 124
      %v1288 = vpop.permute.xlu0 %1287
      %1289 = vrot.lane.b32.xlu0 %v1266, 124
      %v1290 = vpop.permute.xlu0 %1289
      %v1299 = vadd.f32 %v1219, %v1276
      %v1300 = vadd.f32 %v1220, %v1278
      %v1301 = vadd.f32 %v1221, %v1280
      %v1302 = vadd.f32 %v1222, %v1282
      %v1303 = vadd.f32 %v1223, %v1284
      %v1304 = vadd.f32 %v1224, %v1286
      %v1305 = vadd.f32 %v1225, %v1288
      %v1306 = vadd.f32 %v1226, %v1290
      %1307 = vset.pattern.permute.xlu0 5
      %1308 = vperm.xlu0 %1307, %v915
      %v1309 = vpop.permute.xlu0 %1308
      %1311 = vset.pattern.permute.xlu0 5
      %1312 = vperm.xlu0 %1311, %v916
      %v1313 = vpop.permute.xlu0 %1312
      %1315 = vset.pattern.permute.xlu0 5
      %1316 = vperm.xlu0 %1315, %v917
      %v1317 = vpop.permute.xlu0 %1316
      %1319 = vset.pattern.permute.xlu0 5
      %1320 = vperm.xlu0 %1319, %v918
      %v1321 = vpop.permute.xlu0 %1320
      %1323 = vset.pattern.permute.xlu0 5
      %1324 = vperm.xlu0 %1323, %v919
      %v1325 = vpop.permute.xlu0 %1324
      %1327 = vset.pattern.permute.xlu0 5
      %1328 = vperm.xlu0 %1327, %v920
      %v1329 = vpop.permute.xlu0 %1328
      %1331 = vset.pattern.permute.xlu0 5
      %1332 = vperm.xlu0 %1331, %v921
      %v1333 = vpop.permute.xlu0 %1332
      %1335 = vset.pattern.permute.xlu0 5
      %1336 = vperm.xlu0 %1335, %v922
      %v1337 = vpop.permute.xlu0 %1336
      %v1339 = vmul.f32 %v923, %v1309
      %v1340 = vmul.f32 %v924, %v1313
      %v1341 = vmul.f32 %v925, %v1317
      %v1342 = vmul.f32 %v926, %v1321
      %v1343 = vmul.f32 %v927, %v1325
      %v1344 = vmul.f32 %v928, %v1329
      %v1345 = vmul.f32 %v929, %v1333
      %v1346 = vmul.f32 %v930, %v1337
      %1355 = vrot.lane.b32.xlu0 %v1339, 123
      %v1356 = vpop.permute.xlu0 %1355
      %1357 = vrot.lane.b32.xlu0 %v1340, 123
      %v1358 = vpop.permute.xlu0 %1357
      %1359 = vrot.lane.b32.xlu0 %v1341, 123
      %v1360 = vpop.permute.xlu0 %1359
      %1361 = vrot.lane.b32.xlu0 %v1342, 123
      %v1362 = vpop.permute.xlu0 %1361
      %1363 = vrot.lane.b32.xlu0 %v1343, 123
      %v1364 = vpop.permute.xlu0 %1363
      %1365 = vrot.lane.b32.xlu0 %v1344, 123
      %v1366 = vpop.permute.xlu0 %1365
      %1367 = vrot.lane.b32.xlu0 %v1345, 123
      %v1368 = vpop.permute.xlu0 %1367
      %1369 = vrot.lane.b32.xlu0 %v1346, 123
      %v1370 = vpop.permute.xlu0 %1369
      %v1379 = vadd.f32 %v1299, %v1356
      %v1380 = vadd.f32 %v1300, %v1358
      %v1381 = vadd.f32 %v1301, %v1360
      %v1382 = vadd.f32 %v1302, %v1362
      %v1383 = vadd.f32 %v1303, %v1364
      %v1384 = vadd.f32 %v1304, %v1366
      %v1385 = vadd.f32 %v1305, %v1368
      %v1386 = vadd.f32 %v1306, %v1370
      %1387 = vset.pattern.permute.xlu0 6
      %1388 = vperm.xlu0 %1387, %v915
      %v1389 = vpop.permute.xlu0 %1388
      %1391 = vset.pattern.permute.xlu0 6
      %1392 = vperm.xlu0 %1391, %v916
      %v1393 = vpop.permute.xlu0 %1392
      %1395 = vset.pattern.permute.xlu0 6
      %1396 = vperm.xlu0 %1395, %v917
      %v1397 = vpop.permute.xlu0 %1396
      %1399 = vset.pattern.permute.xlu0 6
      %1400 = vperm.xlu0 %1399, %v918
      %v1401 = vpop.permute.xlu0 %1400
      %1403 = vset.pattern.permute.xlu0 6
      %1404 = vperm.xlu0 %1403, %v919
      %v1405 = vpop.permute.xlu0 %1404
      %1407 = vset.pattern.permute.xlu0 6
      %1408 = vperm.xlu0 %1407, %v920
      %v1409 = vpop.permute.xlu0 %1408
      %1411 = vset.pattern.permute.xlu0 6
      %1412 = vperm.xlu0 %1411, %v921
      %v1413 = vpop.permute.xlu0 %1412
      %1415 = vset.pattern.permute.xlu0 6
      %1416 = vperm.xlu0 %1415, %v922
      %v1417 = vpop.permute.xlu0 %1416
      %v1419 = vmul.f32 %v923, %v1389
      %v1420 = vmul.f32 %v924, %v1393
      %v1421 = vmul.f32 %v925, %v1397
      %v1422 = vmul.f32 %v926, %v1401
      %v1423 = vmul.f32 %v927, %v1405
      %v1424 = vmul.f32 %v928, %v1409
      %v1425 = vmul.f32 %v929, %v1413
      %v1426 = vmul.f32 %v930, %v1417
      %1435 = vrot.lane.b32.xlu0 %v1419, 122
      %v1436 = vpop.permute.xlu0 %1435
      %1437 = vrot.lane.b32.xlu0 %v1420, 122
      %v1438 = vpop.permute.xlu0 %1437
      %1439 = vrot.lane.b32.xlu0 %v1421, 122
      %v1440 = vpop.permute.xlu0 %1439
      %1441 = vrot.lane.b32.xlu0 %v1422, 122
      %v1442 = vpop.permute.xlu0 %1441
      %1443 = vrot.lane.b32.xlu0 %v1423, 122
      %v1444 = vpop.permute.xlu0 %1443
      %1445 = vrot.lane.b32.xlu0 %v1424, 122
      %v1446 = vpop.permute.xlu0 %1445
      %1447 = vrot.lane.b32.xlu0 %v1425, 122
      %v1448 = vpop.permute.xlu0 %1447
      %1449 = vrot.lane.b32.xlu0 %v1426, 122
      %v1450 = vpop.permute.xlu0 %1449
      %v1459 = vadd.f32 %v1379, %v1436
      %v1460 = vadd.f32 %v1380, %v1438
      %v1461 = vadd.f32 %v1381, %v1440
      %v1462 = vadd.f32 %v1382, %v1442
      %v1463 = vadd.f32 %v1383, %v1444
      %v1464 = vadd.f32 %v1384, %v1446
      %v1465 = vadd.f32 %v1385, %v1448
      %v1466 = vadd.f32 %v1386, %v1450
      %1467 = vset.pattern.permute.xlu0 7
      %1468 = vperm.xlu0 %1467, %v915
      %v1469 = vpop.permute.xlu0 %1468
      %1471 = vset.pattern.permute.xlu0 7
      %1472 = vperm.xlu0 %1471, %v916
      %v1473 = vpop.permute.xlu0 %1472
      %1475 = vset.pattern.permute.xlu0 7
      %1476 = vperm.xlu0 %1475, %v917
      %v1477 = vpop.permute.xlu0 %1476
      %1479 = vset.pattern.permute.xlu0 7
      %1480 = vperm.xlu0 %1479, %v918
      %v1481 = vpop.permute.xlu0 %1480
      %1483 = vset.pattern.permute.xlu0 7
      %1484 = vperm.xlu0 %1483, %v919
      %v1485 = vpop.permute.xlu0 %1484
      %1487 = vset.pattern.permute.xlu0 7
      %1488 = vperm.xlu0 %1487, %v920
      %v1489 = vpop.permute.xlu0 %1488
      %1491 = vset.pattern.permute.xlu0 7
      %1492 = vperm.xlu0 %1491, %v921
      %v1493 = vpop.permute.xlu0 %1492
      %1495 = vset.pattern.permute.xlu0 7
      %1496 = vperm.xlu0 %1495, %v922
      %v1497 = vpop.permute.xlu0 %1496
      %v1499 = vmul.f32 %v923, %v1469
      %v1500 = vmul.f32 %v924, %v1473
      %v1501 = vmul.f32 %v925, %v1477
      %v1502 = vmul.f32 %v926, %v1481
      %v1503 = vmul.f32 %v927, %v1485
      %v1504 = vmul.f32 %v928, %v1489
      %v1505 = vmul.f32 %v929, %v1493
      %v1506 = vmul.f32 %v930, %v1497
      %1515 = vrot.lane.b32.xlu0 %v1499, 121
      %v1516 = vpop.permute.xlu0 %1515
      %1517 = vrot.lane.b32.xlu0 %v1500, 121
      %v1518 = vpop.permute.xlu0 %1517
      %1519 = vrot.lane.b32.xlu0 %v1501, 121
      %v1520 = vpop.permute.xlu0 %1519
      %1521 = vrot.lane.b32.xlu0 %v1502, 121
      %v1522 = vpop.permute.xlu0 %1521
      %1523 = vrot.lane.b32.xlu0 %v1503, 121
      %v1524 = vpop.permute.xlu0 %1523
      %1525 = vrot.lane.b32.xlu0 %v1504, 121
      %v1526 = vpop.permute.xlu0 %1525
      %1527 = vrot.lane.b32.xlu0 %v1505, 121
      %v1528 = vpop.permute.xlu0 %1527
      %1529 = vrot.lane.b32.xlu0 %v1506, 121
      %v1530 = vpop.permute.xlu0 %1529
      %v1539 = vadd.f32 %v1459, %v1516
      %v1540 = vadd.f32 %v1460, %v1518
      %v1541 = vadd.f32 %v1461, %v1520
      %v1542 = vadd.f32 %v1462, %v1522
      %v1543 = vadd.f32 %v1463, %v1524
      %v1544 = vadd.f32 %v1464, %v1526
      %v1545 = vadd.f32 %v1465, %v1528
      %v1546 = vadd.f32 %v1466, %v1530
      %1547 = vset.pattern.permute.xlu0 8
      %1548 = vperm.xlu0 %1547, %v915
      %v1549 = vpop.permute.xlu0 %1548
      %1551 = vset.pattern.permute.xlu0 8
      %1552 = vperm.xlu0 %1551, %v916
      %v1553 = vpop.permute.xlu0 %1552
      %1555 = vset.pattern.permute.xlu0 8
      %1556 = vperm.xlu0 %1555, %v917
      %v1557 = vpop.permute.xlu0 %1556
      %1559 = vset.pattern.permute.xlu0 8
      %1560 = vperm.xlu0 %1559, %v918
      %v1561 = vpop.permute.xlu0 %1560
      %1563 = vset.pattern.permute.xlu0 8
      %1564 = vperm.xlu0 %1563, %v919
      %v1565 = vpop.permute.xlu0 %1564
      %1567 = vset.pattern.permute.xlu0 8
      %1568 = vperm.xlu0 %1567, %v920
      %v1569 = vpop.permute.xlu0 %1568
      %1571 = vset.pattern.permute.xlu0 8
      %1572 = vperm.xlu0 %1571, %v921
      %v1573 = vpop.permute.xlu0 %1572
      %1575 = vset.pattern.permute.xlu0 8
      %1576 = vperm.xlu0 %1575, %v922
      %v1577 = vpop.permute.xlu0 %1576
      %v1579 = vmul.f32 %v923, %v1549
      %v1580 = vmul.f32 %v924, %v1553
      %v1581 = vmul.f32 %v925, %v1557
      %v1582 = vmul.f32 %v926, %v1561
      %v1583 = vmul.f32 %v927, %v1565
      %v1584 = vmul.f32 %v928, %v1569
      %v1585 = vmul.f32 %v929, %v1573
      %v1586 = vmul.f32 %v930, %v1577
      %1595 = vrot.lane.b32.xlu0 %v1579, 120
      %v1596 = vpop.permute.xlu0 %1595
      %1597 = vrot.lane.b32.xlu0 %v1580, 120
      %v1598 = vpop.permute.xlu0 %1597
      %1599 = vrot.lane.b32.xlu0 %v1581, 120
      %v1600 = vpop.permute.xlu0 %1599
      %1601 = vrot.lane.b32.xlu0 %v1582, 120
      %v1602 = vpop.permute.xlu0 %1601
      %1603 = vrot.lane.b32.xlu0 %v1583, 120
      %v1604 = vpop.permute.xlu0 %1603
      %1605 = vrot.lane.b32.xlu0 %v1584, 120
      %v1606 = vpop.permute.xlu0 %1605
      %1607 = vrot.lane.b32.xlu0 %v1585, 120
      %v1608 = vpop.permute.xlu0 %1607
      %1609 = vrot.lane.b32.xlu0 %v1586, 120
      %v1610 = vpop.permute.xlu0 %1609
      %v1619 = vadd.f32 %v1539, %v1596
      %v1620 = vadd.f32 %v1540, %v1598
      %v1621 = vadd.f32 %v1541, %v1600
      %v1622 = vadd.f32 %v1542, %v1602
      %v1623 = vadd.f32 %v1543, %v1604
      %v1624 = vadd.f32 %v1544, %v1606
      %v1625 = vadd.f32 %v1545, %v1608
      %v1626 = vadd.f32 %v1546, %v1610
      %1627 = vset.pattern.permute.xlu0 9
      %1628 = vperm.xlu0 %1627, %v915
      %v1629 = vpop.permute.xlu0 %1628
      %1631 = vset.pattern.permute.xlu0 9
      %1632 = vperm.xlu0 %1631, %v916
      %v1633 = vpop.permute.xlu0 %1632
      %1635 = vset.pattern.permute.xlu0 9
      %1636 = vperm.xlu0 %1635, %v917
      %v1637 = vpop.permute.xlu0 %1636
      %1639 = vset.pattern.permute.xlu0 9
      %1640 = vperm.xlu0 %1639, %v918
      %v1641 = vpop.permute.xlu0 %1640
      %1643 = vset.pattern.permute.xlu0 9
      %1644 = vperm.xlu0 %1643, %v919
      %v1645 = vpop.permute.xlu0 %1644
      %1647 = vset.pattern.permute.xlu0 9
      %1648 = vperm.xlu0 %1647, %v920
      %v1649 = vpop.permute.xlu0 %1648
      %1651 = vset.pattern.permute.xlu0 9
      %1652 = vperm.xlu0 %1651, %v921
      %v1653 = vpop.permute.xlu0 %1652
      %1655 = vset.pattern.permute.xlu0 9
      %1656 = vperm.xlu0 %1655, %v922
      %v1657 = vpop.permute.xlu0 %1656
      %v1659 = vmul.f32 %v923, %v1629
      %v1660 = vmul.f32 %v924, %v1633
      %v1661 = vmul.f32 %v925, %v1637
      %v1662 = vmul.f32 %v926, %v1641
      %v1663 = vmul.f32 %v927, %v1645
      %v1664 = vmul.f32 %v928, %v1649
      %v1665 = vmul.f32 %v929, %v1653
      %v1666 = vmul.f32 %v930, %v1657
      %1675 = vrot.lane.b32.xlu0 %v1659, 119
      %v1676 = vpop.permute.xlu0 %1675
      %1677 = vrot.lane.b32.xlu0 %v1660, 119
      %v1678 = vpop.permute.xlu0 %1677
      %1679 = vrot.lane.b32.xlu0 %v1661, 119
      %v1680 = vpop.permute.xlu0 %1679
      %1681 = vrot.lane.b32.xlu0 %v1662, 119
      %v1682 = vpop.permute.xlu0 %1681
      %1683 = vrot.lane.b32.xlu0 %v1663, 119
      %v1684 = vpop.permute.xlu0 %1683
      %1685 = vrot.lane.b32.xlu0 %v1664, 119
      %v1686 = vpop.permute.xlu0 %1685
      %1687 = vrot.lane.b32.xlu0 %v1665, 119
      %v1688 = vpop.permute.xlu0 %1687
      %1689 = vrot.lane.b32.xlu0 %v1666, 119
      %v1690 = vpop.permute.xlu0 %1689
      %v1699 = vadd.f32 %v1619, %v1676
      %v1700 = vadd.f32 %v1620, %v1678
      %v1701 = vadd.f32 %v1621, %v1680
      %v1702 = vadd.f32 %v1622, %v1682
      %v1703 = vadd.f32 %v1623, %v1684
      %v1704 = vadd.f32 %v1624, %v1686
      %v1705 = vadd.f32 %v1625, %v1688
      %v1706 = vadd.f32 %v1626, %v1690
      %1707 = vset.pattern.permute.xlu0 10
      %1708 = vperm.xlu0 %1707, %v915
      %v1709 = vpop.permute.xlu0 %1708
      %1711 = vset.pattern.permute.xlu0 10
      %1712 = vperm.xlu0 %1711, %v916
      %v1713 = vpop.permute.xlu0 %1712
      %1715 = vset.pattern.permute.xlu0 10
      %1716 = vperm.xlu0 %1715, %v917
      %v1717 = vpop.permute.xlu0 %1716
      %1719 = vset.pattern.permute.xlu0 10
      %1720 = vperm.xlu0 %1719, %v918
      %v1721 = vpop.permute.xlu0 %1720
      %1723 = vset.pattern.permute.xlu0 10
      %1724 = vperm.xlu0 %1723, %v919
      %v1725 = vpop.permute.xlu0 %1724
      %1727 = vset.pattern.permute.xlu0 10
      %1728 = vperm.xlu0 %1727, %v920
      %v1729 = vpop.permute.xlu0 %1728
      %1731 = vset.pattern.permute.xlu0 10
      %1732 = vperm.xlu0 %1731, %v921
      %v1733 = vpop.permute.xlu0 %1732
      %1735 = vset.pattern.permute.xlu0 10
      %1736 = vperm.xlu0 %1735, %v922
      %v1737 = vpop.permute.xlu0 %1736
      %v1739 = vmul.f32 %v923, %v1709
      %v1740 = vmul.f32 %v924, %v1713
      %v1741 = vmul.f32 %v925, %v1717
      %v1742 = vmul.f32 %v926, %v1721
      %v1743 = vmul.f32 %v927, %v1725
      %v1744 = vmul.f32 %v928, %v1729
      %v1745 = vmul.f32 %v929, %v1733
      %v1746 = vmul.f32 %v930, %v1737
      %1755 = vrot.lane.b32.xlu0 %v1739, 118
      %v1756 = vpop.permute.xlu0 %1755
      %1757 = vrot.lane.b32.xlu0 %v1740, 118
      %v1758 = vpop.permute.xlu0 %1757
      %1759 = vrot.lane.b32.xlu0 %v1741, 118
      %v1760 = vpop.permute.xlu0 %1759
      %1761 = vrot.lane.b32.xlu0 %v1742, 118
      %v1762 = vpop.permute.xlu0 %1761
      %1763 = vrot.lane.b32.xlu0 %v1743, 118
      %v1764 = vpop.permute.xlu0 %1763
      %1765 = vrot.lane.b32.xlu0 %v1744, 118
      %v1766 = vpop.permute.xlu0 %1765
      %1767 = vrot.lane.b32.xlu0 %v1745, 118
      %v1768 = vpop.permute.xlu0 %1767
      %1769 = vrot.lane.b32.xlu0 %v1746, 118
      %v1770 = vpop.permute.xlu0 %1769
      %v1779 = vadd.f32 %v1699, %v1756
      %v1780 = vadd.f32 %v1700, %v1758
      %v1781 = vadd.f32 %v1701, %v1760
      %v1782 = vadd.f32 %v1702, %v1762
      %v1783 = vadd.f32 %v1703, %v1764
      %v1784 = vadd.f32 %v1704, %v1766
      %v1785 = vadd.f32 %v1705, %v1768
      %v1786 = vadd.f32 %v1706, %v1770
      %1787 = vset.pattern.permute.xlu0 11
      %1788 = vperm.xlu0 %1787, %v915
      %v1789 = vpop.permute.xlu0 %1788
      %1791 = vset.pattern.permute.xlu0 11
      %1792 = vperm.xlu0 %1791, %v916
      %v1793 = vpop.permute.xlu0 %1792
      %1795 = vset.pattern.permute.xlu0 11
      %1796 = vperm.xlu0 %1795, %v917
      %v1797 = vpop.permute.xlu0 %1796
      %1799 = vset.pattern.permute.xlu0 11
      %1800 = vperm.xlu0 %1799, %v918
      %v1801 = vpop.permute.xlu0 %1800
      %1803 = vset.pattern.permute.xlu0 11
      %1804 = vperm.xlu0 %1803, %v919
      %v1805 = vpop.permute.xlu0 %1804
      %1807 = vset.pattern.permute.xlu0 11
      %1808 = vperm.xlu0 %1807, %v920
      %v1809 = vpop.permute.xlu0 %1808
      %1811 = vset.pattern.permute.xlu0 11
      %1812 = vperm.xlu0 %1811, %v921
      %v1813 = vpop.permute.xlu0 %1812
      %1815 = vset.pattern.permute.xlu0 11
      %1816 = vperm.xlu0 %1815, %v922
      %v1817 = vpop.permute.xlu0 %1816
      %v1819 = vmul.f32 %v923, %v1789
      %v1820 = vmul.f32 %v924, %v1793
      %v1821 = vmul.f32 %v925, %v1797
      %v1822 = vmul.f32 %v926, %v1801
      %v1823 = vmul.f32 %v927, %v1805
      %v1824 = vmul.f32 %v928, %v1809
      %v1825 = vmul.f32 %v929, %v1813
      %v1826 = vmul.f32 %v930, %v1817
      %1835 = vrot.lane.b32.xlu0 %v1819, 117
      %v1836 = vpop.permute.xlu0 %1835
      %1837 = vrot.lane.b32.xlu0 %v1820, 117
      %v1838 = vpop.permute.xlu0 %1837
      %1839 = vrot.lane.b32.xlu0 %v1821, 117
      %v1840 = vpop.permute.xlu0 %1839
      %1841 = vrot.lane.b32.xlu0 %v1822, 117
      %v1842 = vpop.permute.xlu0 %1841
      %1843 = vrot.lane.b32.xlu0 %v1823, 117
      %v1844 = vpop.permute.xlu0 %1843
      %1845 = vrot.lane.b32.xlu0 %v1824, 117
      %v1846 = vpop.permute.xlu0 %1845
      %1847 = vrot.lane.b32.xlu0 %v1825, 117
      %v1848 = vpop.permute.xlu0 %1847
      %1849 = vrot.lane.b32.xlu0 %v1826, 117
      %v1850 = vpop.permute.xlu0 %1849
      %v1859 = vadd.f32 %v1779, %v1836
      %v1860 = vadd.f32 %v1780, %v1838
      %v1861 = vadd.f32 %v1781, %v1840
      %v1862 = vadd.f32 %v1782, %v1842
      %v1863 = vadd.f32 %v1783, %v1844
      %v1864 = vadd.f32 %v1784, %v1846
      %v1865 = vadd.f32 %v1785, %v1848
      %v1866 = vadd.f32 %v1786, %v1850
      %1867 = vset.pattern.permute.xlu0 12
      %1868 = vperm.xlu0 %1867, %v915
      %v1869 = vpop.permute.xlu0 %1868
      %1871 = vset.pattern.permute.xlu0 12
      %1872 = vperm.xlu0 %1871, %v916
      %v1873 = vpop.permute.xlu0 %1872
      %1875 = vset.pattern.permute.xlu0 12
      %1876 = vperm.xlu0 %1875, %v917
      %v1877 = vpop.permute.xlu0 %1876
      %1879 = vset.pattern.permute.xlu0 12
      %1880 = vperm.xlu0 %1879, %v918
      %v1881 = vpop.permute.xlu0 %1880
      %1883 = vset.pattern.permute.xlu0 12
      %1884 = vperm.xlu0 %1883, %v919
      %v1885 = vpop.permute.xlu0 %1884
      %1887 = vset.pattern.permute.xlu0 12
      %1888 = vperm.xlu0 %1887, %v920
      %v1889 = vpop.permute.xlu0 %1888
      %1891 = vset.pattern.permute.xlu0 12
      %1892 = vperm.xlu0 %1891, %v921
      %v1893 = vpop.permute.xlu0 %1892
      %1895 = vset.pattern.permute.xlu0 12
      %1896 = vperm.xlu0 %1895, %v922
      %v1897 = vpop.permute.xlu0 %1896
      %v1899 = vmul.f32 %v923, %v1869
      %v1900 = vmul.f32 %v924, %v1873
      %v1901 = vmul.f32 %v925, %v1877
      %v1902 = vmul.f32 %v926, %v1881
      %v1903 = vmul.f32 %v927, %v1885
      %v1904 = vmul.f32 %v928, %v1889
      %v1905 = vmul.f32 %v929, %v1893
      %v1906 = vmul.f32 %v930, %v1897
      %1915 = vrot.lane.b32.xlu0 %v1899, 116
      %v1916 = vpop.permute.xlu0 %1915
      %1917 = vrot.lane.b32.xlu0 %v1900, 116
      %v1918 = vpop.permute.xlu0 %1917
      %1919 = vrot.lane.b32.xlu0 %v1901, 116
      %v1920 = vpop.permute.xlu0 %1919
      %1921 = vrot.lane.b32.xlu0 %v1902, 116
      %v1922 = vpop.permute.xlu0 %1921
      %1923 = vrot.lane.b32.xlu0 %v1903, 116
      %v1924 = vpop.permute.xlu0 %1923
      %1925 = vrot.lane.b32.xlu0 %v1904, 116
      %v1926 = vpop.permute.xlu0 %1925
      %1927 = vrot.lane.b32.xlu0 %v1905, 116
      %v1928 = vpop.permute.xlu0 %1927
      %1929 = vrot.lane.b32.xlu0 %v1906, 116
      %v1930 = vpop.permute.xlu0 %1929
      %v1939 = vadd.f32 %v1859, %v1916
      %v1940 = vadd.f32 %v1860, %v1918
      %v1941 = vadd.f32 %v1861, %v1920
      %v1942 = vadd.f32 %v1862, %v1922
      %v1943 = vadd.f32 %v1863, %v1924
      %v1944 = vadd.f32 %v1864, %v1926
      %v1945 = vadd.f32 %v1865, %v1928
      %v1946 = vadd.f32 %v1866, %v1930
      %1947 = vset.pattern.permute.xlu0 13
      %1948 = vperm.xlu0 %1947, %v915
      %v1949 = vpop.permute.xlu0 %1948
      %1951 = vset.pattern.permute.xlu0 13
      %1952 = vperm.xlu0 %1951, %v916
      %v1953 = vpop.permute.xlu0 %1952
      %1955 = vset.pattern.permute.xlu0 13
      %1956 = vperm.xlu0 %1955, %v917
      %v1957 = vpop.permute.xlu0 %1956
      %1959 = vset.pattern.permute.xlu0 13
      %1960 = vperm.xlu0 %1959, %v918
      %v1961 = vpop.permute.xlu0 %1960
      %1963 = vset.pattern.permute.xlu0 13
      %1964 = vperm.xlu0 %1963, %v919
      %v1965 = vpop.permute.xlu0 %1964
      %1967 = vset.pattern.permute.xlu0 13
      %1968 = vperm.xlu0 %1967, %v920
      %v1969 = vpop.permute.xlu0 %1968
      %1971 = vset.pattern.permute.xlu0 13
      %1972 = vperm.xlu0 %1971, %v921
      %v1973 = vpop.permute.xlu0 %1972
      %1975 = vset.pattern.permute.xlu0 13
      %1976 = vperm.xlu0 %1975, %v922
      %v1977 = vpop.permute.xlu0 %1976
      %v1979 = vmul.f32 %v923, %v1949
      %v1980 = vmul.f32 %v924, %v1953
      %v1981 = vmul.f32 %v925, %v1957
      %v1982 = vmul.f32 %v926, %v1961
      %v1983 = vmul.f32 %v927, %v1965
      %v1984 = vmul.f32 %v928, %v1969
      %v1985 = vmul.f32 %v929, %v1973
      %v1986 = vmul.f32 %v930, %v1977
      %1995 = vrot.lane.b32.xlu0 %v1979, 115
      %v1996 = vpop.permute.xlu0 %1995
      %1997 = vrot.lane.b32.xlu0 %v1980, 115
      %v1998 = vpop.permute.xlu0 %1997
      %1999 = vrot.lane.b32.xlu0 %v1981, 115
      %v2000 = vpop.permute.xlu0 %1999
      %2001 = vrot.lane.b32.xlu0 %v1982, 115
      %v2002 = vpop.permute.xlu0 %2001
      %2003 = vrot.lane.b32.xlu0 %v1983, 115
      %v2004 = vpop.permute.xlu0 %2003
      %2005 = vrot.lane.b32.xlu0 %v1984, 115
      %v2006 = vpop.permute.xlu0 %2005
      %2007 = vrot.lane.b32.xlu0 %v1985, 115
      %v2008 = vpop.permute.xlu0 %2007
      %2009 = vrot.lane.b32.xlu0 %v1986, 115
      %v2010 = vpop.permute.xlu0 %2009
      %v2019 = vadd.f32 %v1939, %v1996
      %v2020 = vadd.f32 %v1940, %v1998
      %v2021 = vadd.f32 %v1941, %v2000
      %v2022 = vadd.f32 %v1942, %v2002
      %v2023 = vadd.f32 %v1943, %v2004
      %v2024 = vadd.f32 %v1944, %v2006
      %v2025 = vadd.f32 %v1945, %v2008
      %v2026 = vadd.f32 %v1946, %v2010
      %2027 = vset.pattern.permute.xlu0 14
      %2028 = vperm.xlu0 %2027, %v915
      %v2029 = vpop.permute.xlu0 %2028
      %2031 = vset.pattern.permute.xlu0 14
      %2032 = vperm.xlu0 %2031, %v916
      %v2033 = vpop.permute.xlu0 %2032
      %2035 = vset.pattern.permute.xlu0 14
      %2036 = vperm.xlu0 %2035, %v917
      %v2037 = vpop.permute.xlu0 %2036
      %2039 = vset.pattern.permute.xlu0 14
      %2040 = vperm.xlu0 %2039, %v918
      %v2041 = vpop.permute.xlu0 %2040
      %2043 = vset.pattern.permute.xlu0 14
      %2044 = vperm.xlu0 %2043, %v919
      %v2045 = vpop.permute.xlu0 %2044
      %2047 = vset.pattern.permute.xlu0 14
      %2048 = vperm.xlu0 %2047, %v920
      %v2049 = vpop.permute.xlu0 %2048
      %2051 = vset.pattern.permute.xlu0 14
      %2052 = vperm.xlu0 %2051, %v921
      %v2053 = vpop.permute.xlu0 %2052
      %2055 = vset.pattern.permute.xlu0 14
      %2056 = vperm.xlu0 %2055, %v922
      %v2057 = vpop.permute.xlu0 %2056
      %v2059 = vmul.f32 %v923, %v2029
      %v2060 = vmul.f32 %v924, %v2033
      %v2061 = vmul.f32 %v925, %v2037
      %v2062 = vmul.f32 %v926, %v2041
      %v2063 = vmul.f32 %v927, %v2045
      %v2064 = vmul.f32 %v928, %v2049
      %v2065 = vmul.f32 %v929, %v2053
      %v2066 = vmul.f32 %v930, %v2057
      %2075 = vrot.lane.b32.xlu0 %v2059, 114
      %v2076 = vpop.permute.xlu0 %2075
      %2077 = vrot.lane.b32.xlu0 %v2060, 114
      %v2078 = vpop.permute.xlu0 %2077
      %2079 = vrot.lane.b32.xlu0 %v2061, 114
      %v2080 = vpop.permute.xlu0 %2079
      %2081 = vrot.lane.b32.xlu0 %v2062, 114
      %v2082 = vpop.permute.xlu0 %2081
      %2083 = vrot.lane.b32.xlu0 %v2063, 114
      %v2084 = vpop.permute.xlu0 %2083
      %2085 = vrot.lane.b32.xlu0 %v2064, 114
      %v2086 = vpop.permute.xlu0 %2085
      %2087 = vrot.lane.b32.xlu0 %v2065, 114
      %v2088 = vpop.permute.xlu0 %2087
      %2089 = vrot.lane.b32.xlu0 %v2066, 114
      %v2090 = vpop.permute.xlu0 %2089
      %v2099 = vadd.f32 %v2019, %v2076
      %v2100 = vadd.f32 %v2020, %v2078
      %v2101 = vadd.f32 %v2021, %v2080
      %v2102 = vadd.f32 %v2022, %v2082
      %v2103 = vadd.f32 %v2023, %v2084
      %v2104 = vadd.f32 %v2024, %v2086
      %v2105 = vadd.f32 %v2025, %v2088
      %v2106 = vadd.f32 %v2026, %v2090
      %2107 = vset.pattern.permute.xlu0 15
      %2108 = vperm.xlu0 %2107, %v915
      %v2109 = vpop.permute.xlu0 %2108
      %2111 = vset.pattern.permute.xlu0 15
      %2112 = vperm.xlu0 %2111, %v916
      %v2113 = vpop.permute.xlu0 %2112
      %2115 = vset.pattern.permute.xlu0 15
      %2116 = vperm.xlu0 %2115, %v917
      %v2117 = vpop.permute.xlu0 %2116
      %2119 = vset.pattern.permute.xlu0 15
      %2120 = vperm.xlu0 %2119, %v918
      %v2121 = vpop.permute.xlu0 %2120
      %2123 = vset.pattern.permute.xlu0 15
      %2124 = vperm.xlu0 %2123, %v919
      %v2125 = vpop.permute.xlu0 %2124
      %2127 = vset.pattern.permute.xlu0 15
      %2128 = vperm.xlu0 %2127, %v920
      %v2129 = vpop.permute.xlu0 %2128
      %2131 = vset.pattern.permute.xlu0 15
      %2132 = vperm.xlu0 %2131, %v921
      %v2133 = vpop.permute.xlu0 %2132
      %2135 = vset.pattern.permute.xlu0 15
      %2136 = vperm.xlu0 %2135, %v922
      %v2137 = vpop.permute.xlu0 %2136
      %v2139 = vmul.f32 %v923, %v2109
      %v2140 = vmul.f32 %v924, %v2113
      %v2141 = vmul.f32 %v925, %v2117
      %v2142 = vmul.f32 %v926, %v2121
      %v2143 = vmul.f32 %v927, %v2125
      %v2144 = vmul.f32 %v928, %v2129
      %v2145 = vmul.f32 %v929, %v2133
      %v2146 = vmul.f32 %v930, %v2137
      %2155 = vrot.lane.b32.xlu0 %v2139, 113
      %v2156 = vpop.permute.xlu0 %2155
      %2157 = vrot.lane.b32.xlu0 %v2140, 113
      %v2158 = vpop.permute.xlu0 %2157
      %2159 = vrot.lane.b32.xlu0 %v2141, 113
      %v2160 = vpop.permute.xlu0 %2159
      %2161 = vrot.lane.b32.xlu0 %v2142, 113
      %v2162 = vpop.permute.xlu0 %2161
      %2163 = vrot.lane.b32.xlu0 %v2143, 113
      %v2164 = vpop.permute.xlu0 %2163
      %2165 = vrot.lane.b32.xlu0 %v2144, 113
      %v2166 = vpop.permute.xlu0 %2165
      %2167 = vrot.lane.b32.xlu0 %v2145, 113
      %v2168 = vpop.permute.xlu0 %2167
      %2169 = vrot.lane.b32.xlu0 %v2146, 113
      %v2170 = vpop.permute.xlu0 %2169
      %v2179 = vadd.f32 %v2099, %v2156
      %v2180 = vadd.f32 %v2100, %v2158
      %v2181 = vadd.f32 %v2101, %v2160
      %v2182 = vadd.f32 %v2102, %v2162
      %v2183 = vadd.f32 %v2103, %v2164
      %v2184 = vadd.f32 %v2104, %v2166
      %v2185 = vadd.f32 %v2105, %v2168
      %v2186 = vadd.f32 %v2106, %v2170
      %2187 = vset.pattern.permute.xlu0 16
      %2188 = vperm.xlu0 %2187, %v915
      %v2189 = vpop.permute.xlu0 %2188
      %2191 = vset.pattern.permute.xlu0 16
      %2192 = vperm.xlu0 %2191, %v916
      %v2193 = vpop.permute.xlu0 %2192
      %2195 = vset.pattern.permute.xlu0 16
      %2196 = vperm.xlu0 %2195, %v917
      %v2197 = vpop.permute.xlu0 %2196
      %2199 = vset.pattern.permute.xlu0 16
      %2200 = vperm.xlu0 %2199, %v918
      %v2201 = vpop.permute.xlu0 %2200
      %2203 = vset.pattern.permute.xlu0 16
      %2204 = vperm.xlu0 %2203, %v919
      %v2205 = vpop.permute.xlu0 %2204
      %2207 = vset.pattern.permute.xlu0 16
      %2208 = vperm.xlu0 %2207, %v920
      %v2209 = vpop.permute.xlu0 %2208
      %2211 = vset.pattern.permute.xlu0 16
      %2212 = vperm.xlu0 %2211, %v921
      %v2213 = vpop.permute.xlu0 %2212
      %2215 = vset.pattern.permute.xlu0 16
      %2216 = vperm.xlu0 %2215, %v922
      %v2217 = vpop.permute.xlu0 %2216
      %v2219 = vmul.f32 %v923, %v2189
      %v2220 = vmul.f32 %v924, %v2193
      %v2221 = vmul.f32 %v925, %v2197
      %v2222 = vmul.f32 %v926, %v2201
      %v2223 = vmul.f32 %v927, %v2205
      %v2224 = vmul.f32 %v928, %v2209
      %v2225 = vmul.f32 %v929, %v2213
      %v2226 = vmul.f32 %v930, %v2217
      %2235 = vrot.lane.b32.xlu0 %v2219, 112
      %v2236 = vpop.permute.xlu0 %2235
      %2237 = vrot.lane.b32.xlu0 %v2220, 112
      %v2238 = vpop.permute.xlu0 %2237
      %2239 = vrot.lane.b32.xlu0 %v2221, 112
      %v2240 = vpop.permute.xlu0 %2239
      %2241 = vrot.lane.b32.xlu0 %v2222, 112
      %v2242 = vpop.permute.xlu0 %2241
      %2243 = vrot.lane.b32.xlu0 %v2223, 112
      %v2244 = vpop.permute.xlu0 %2243
      %2245 = vrot.lane.b32.xlu0 %v2224, 112
      %v2246 = vpop.permute.xlu0 %2245
      %2247 = vrot.lane.b32.xlu0 %v2225, 112
      %v2248 = vpop.permute.xlu0 %2247
      %2249 = vrot.lane.b32.xlu0 %v2226, 112
      %v2250 = vpop.permute.xlu0 %2249
      %v2259 = vadd.f32 %v2179, %v2236
      %v2260 = vadd.f32 %v2180, %v2238
      %v2261 = vadd.f32 %v2181, %v2240
      %v2262 = vadd.f32 %v2182, %v2242
      %v2263 = vadd.f32 %v2183, %v2244
      %v2264 = vadd.f32 %v2184, %v2246
      %v2265 = vadd.f32 %v2185, %v2248
      %v2266 = vadd.f32 %v2186, %v2250
      %2267 = vset.pattern.permute.xlu0 17
      %2268 = vperm.xlu0 %2267, %v915
      %v2269 = vpop.permute.xlu0 %2268
      %2271 = vset.pattern.permute.xlu0 17
      %2272 = vperm.xlu0 %2271, %v916
      %v2273 = vpop.permute.xlu0 %2272
      %2275 = vset.pattern.permute.xlu0 17
      %2276 = vperm.xlu0 %2275, %v917
      %v2277 = vpop.permute.xlu0 %2276
      %2279 = vset.pattern.permute.xlu0 17
      %2280 = vperm.xlu0 %2279, %v918
      %v2281 = vpop.permute.xlu0 %2280
      %2283 = vset.pattern.permute.xlu0 17
      %2284 = vperm.xlu0 %2283, %v919
      %v2285 = vpop.permute.xlu0 %2284
      %2287 = vset.pattern.permute.xlu0 17
      %2288 = vperm.xlu0 %2287, %v920
      %v2289 = vpop.permute.xlu0 %2288
      %2291 = vset.pattern.permute.xlu0 17
      %2292 = vperm.xlu0 %2291, %v921
      %v2293 = vpop.permute.xlu0 %2292
      %2295 = vset.pattern.permute.xlu0 17
      %2296 = vperm.xlu0 %2295, %v922
      %v2297 = vpop.permute.xlu0 %2296
      %v2299 = vmul.f32 %v923, %v2269
      %v2300 = vmul.f32 %v924, %v2273
      %v2301 = vmul.f32 %v925, %v2277
      %v2302 = vmul.f32 %v926, %v2281
      %v2303 = vmul.f32 %v927, %v2285
      %v2304 = vmul.f32 %v928, %v2289
      %v2305 = vmul.f32 %v929, %v2293
      %v2306 = vmul.f32 %v930, %v2297
      %2315 = vrot.lane.b32.xlu0 %v2299, 111
      %v2316 = vpop.permute.xlu0 %2315
      %2317 = vrot.lane.b32.xlu0 %v2300, 111
      %v2318 = vpop.permute.xlu0 %2317
      %2319 = vrot.lane.b32.xlu0 %v2301, 111
      %v2320 = vpop.permute.xlu0 %2319
      %2321 = vrot.lane.b32.xlu0 %v2302, 111
      %v2322 = vpop.permute.xlu0 %2321
      %2323 = vrot.lane.b32.xlu0 %v2303, 111
      %v2324 = vpop.permute.xlu0 %2323
      %2325 = vrot.lane.b32.xlu0 %v2304, 111
      %v2326 = vpop.permute.xlu0 %2325
      %2327 = vrot.lane.b32.xlu0 %v2305, 111
      %v2328 = vpop.permute.xlu0 %2327
      %2329 = vrot.lane.b32.xlu0 %v2306, 111
      %v2330 = vpop.permute.xlu0 %2329
      %v2339 = vadd.f32 %v2259, %v2316
      %v2340 = vadd.f32 %v2260, %v2318
      %v2341 = vadd.f32 %v2261, %v2320
      %v2342 = vadd.f32 %v2262, %v2322
      %v2343 = vadd.f32 %v2263, %v2324
      %v2344 = vadd.f32 %v2264, %v2326
      %v2345 = vadd.f32 %v2265, %v2328
      %v2346 = vadd.f32 %v2266, %v2330
      %2347 = vset.pattern.permute.xlu0 18
      %2348 = vperm.xlu0 %2347, %v915
      %v2349 = vpop.permute.xlu0 %2348
      %2351 = vset.pattern.permute.xlu0 18
      %2352 = vperm.xlu0 %2351, %v916
      %v2353 = vpop.permute.xlu0 %2352
      %2355 = vset.pattern.permute.xlu0 18
      %2356 = vperm.xlu0 %2355, %v917
      %v2357 = vpop.permute.xlu0 %2356
      %2359 = vset.pattern.permute.xlu0 18
      %2360 = vperm.xlu0 %2359, %v918
      %v2361 = vpop.permute.xlu0 %2360
      %2363 = vset.pattern.permute.xlu0 18
      %2364 = vperm.xlu0 %2363, %v919
      %v2365 = vpop.permute.xlu0 %2364
      %2367 = vset.pattern.permute.xlu0 18
      %2368 = vperm.xlu0 %2367, %v920
      %v2369 = vpop.permute.xlu0 %2368
      %2371 = vset.pattern.permute.xlu0 18
      %2372 = vperm.xlu0 %2371, %v921
      %v2373 = vpop.permute.xlu0 %2372
      %2375 = vset.pattern.permute.xlu0 18
      %2376 = vperm.xlu0 %2375, %v922
      %v2377 = vpop.permute.xlu0 %2376
      %v2379 = vmul.f32 %v923, %v2349
      %v2380 = vmul.f32 %v924, %v2353
      %v2381 = vmul.f32 %v925, %v2357
      %v2382 = vmul.f32 %v926, %v2361
      %v2383 = vmul.f32 %v927, %v2365
      %v2384 = vmul.f32 %v928, %v2369
      %v2385 = vmul.f32 %v929, %v2373
      %v2386 = vmul.f32 %v930, %v2377
      %2395 = vrot.lane.b32.xlu0 %v2379, 110
      %v2396 = vpop.permute.xlu0 %2395
      %2397 = vrot.lane.b32.xlu0 %v2380, 110
      %v2398 = vpop.permute.xlu0 %2397
      %2399 = vrot.lane.b32.xlu0 %v2381, 110
      %v2400 = vpop.permute.xlu0 %2399
      %2401 = vrot.lane.b32.xlu0 %v2382, 110
      %v2402 = vpop.permute.xlu0 %2401
      %2403 = vrot.lane.b32.xlu0 %v2383, 110
      %v2404 = vpop.permute.xlu0 %2403
      %2405 = vrot.lane.b32.xlu0 %v2384, 110
      %v2406 = vpop.permute.xlu0 %2405
      %2407 = vrot.lane.b32.xlu0 %v2385, 110
      %v2408 = vpop.permute.xlu0 %2407
      %2409 = vrot.lane.b32.xlu0 %v2386, 110
      %v2410 = vpop.permute.xlu0 %2409
      %v2419 = vadd.f32 %v2339, %v2396
      %v2420 = vadd.f32 %v2340, %v2398
      %v2421 = vadd.f32 %v2341, %v2400
      %v2422 = vadd.f32 %v2342, %v2402
      %v2423 = vadd.f32 %v2343, %v2404
      %v2424 = vadd.f32 %v2344, %v2406
      %v2425 = vadd.f32 %v2345, %v2408
      %v2426 = vadd.f32 %v2346, %v2410
      %2427 = vset.pattern.permute.xlu0 19
      %2428 = vperm.xlu0 %2427, %v915
      %v2429 = vpop.permute.xlu0 %2428
      %2431 = vset.pattern.permute.xlu0 19
      %2432 = vperm.xlu0 %2431, %v916
      %v2433 = vpop.permute.xlu0 %2432
      %2435 = vset.pattern.permute.xlu0 19
      %2436 = vperm.xlu0 %2435, %v917
      %v2437 = vpop.permute.xlu0 %2436
      %2439 = vset.pattern.permute.xlu0 19
      %2440 = vperm.xlu0 %2439, %v918
      %v2441 = vpop.permute.xlu0 %2440
      %2443 = vset.pattern.permute.xlu0 19
      %2444 = vperm.xlu0 %2443, %v919
      %v2445 = vpop.permute.xlu0 %2444
      %2447 = vset.pattern.permute.xlu0 19
      %2448 = vperm.xlu0 %2447, %v920
      %v2449 = vpop.permute.xlu0 %2448
      %2451 = vset.pattern.permute.xlu0 19
      %2452 = vperm.xlu0 %2451, %v921
      %v2453 = vpop.permute.xlu0 %2452
      %2455 = vset.pattern.permute.xlu0 19
      %2456 = vperm.xlu0 %2455, %v922
      %v2457 = vpop.permute.xlu0 %2456
      %v2459 = vmul.f32 %v923, %v2429
      %v2460 = vmul.f32 %v924, %v2433
      %v2461 = vmul.f32 %v925, %v2437
      %v2462 = vmul.f32 %v926, %v2441
      %v2463 = vmul.f32 %v927, %v2445
      %v2464 = vmul.f32 %v928, %v2449
      %v2465 = vmul.f32 %v929, %v2453
      %v2466 = vmul.f32 %v930, %v2457
      %2475 = vrot.lane.b32.xlu0 %v2459, 109
      %v2476 = vpop.permute.xlu0 %2475
      %2477 = vrot.lane.b32.xlu0 %v2460, 109
      %v2478 = vpop.permute.xlu0 %2477
      %2479 = vrot.lane.b32.xlu0 %v2461, 109
      %v2480 = vpop.permute.xlu0 %2479
      %2481 = vrot.lane.b32.xlu0 %v2462, 109
      %v2482 = vpop.permute.xlu0 %2481
      %2483 = vrot.lane.b32.xlu0 %v2463, 109
      %v2484 = vpop.permute.xlu0 %2483
      %2485 = vrot.lane.b32.xlu0 %v2464, 109
      %v2486 = vpop.permute.xlu0 %2485
      %2487 = vrot.lane.b32.xlu0 %v2465, 109
      %v2488 = vpop.permute.xlu0 %2487
      %2489 = vrot.lane.b32.xlu0 %v2466, 109
      %v2490 = vpop.permute.xlu0 %2489
      %v2499 = vadd.f32 %v2419, %v2476
      %v2500 = vadd.f32 %v2420, %v2478
      %v2501 = vadd.f32 %v2421, %v2480
      %v2502 = vadd.f32 %v2422, %v2482
      %v2503 = vadd.f32 %v2423, %v2484
      %v2504 = vadd.f32 %v2424, %v2486
      %v2505 = vadd.f32 %v2425, %v2488
      %v2506 = vadd.f32 %v2426, %v2490
      %2507 = vset.pattern.permute.xlu0 20
      %2508 = vperm.xlu0 %2507, %v915
      %v2509 = vpop.permute.xlu0 %2508
      %2511 = vset.pattern.permute.xlu0 20
      %2512 = vperm.xlu0 %2511, %v916
      %v2513 = vpop.permute.xlu0 %2512
      %2515 = vset.pattern.permute.xlu0 20
      %2516 = vperm.xlu0 %2515, %v917
      %v2517 = vpop.permute.xlu0 %2516
      %2519 = vset.pattern.permute.xlu0 20
      %2520 = vperm.xlu0 %2519, %v918
      %v2521 = vpop.permute.xlu0 %2520
      %2523 = vset.pattern.permute.xlu0 20
      %2524 = vperm.xlu0 %2523, %v919
      %v2525 = vpop.permute.xlu0 %2524
      %2527 = vset.pattern.permute.xlu0 20
      %2528 = vperm.xlu0 %2527, %v920
      %v2529 = vpop.permute.xlu0 %2528
      %2531 = vset.pattern.permute.xlu0 20
      %2532 = vperm.xlu0 %2531, %v921
      %v2533 = vpop.permute.xlu0 %2532
      %2535 = vset.pattern.permute.xlu0 20
      %2536 = vperm.xlu0 %2535, %v922
      %v2537 = vpop.permute.xlu0 %2536
      %v2539 = vmul.f32 %v923, %v2509
      %v2540 = vmul.f32 %v924, %v2513
      %v2541 = vmul.f32 %v925, %v2517
      %v2542 = vmul.f32 %v926, %v2521
      %v2543 = vmul.f32 %v927, %v2525
      %v2544 = vmul.f32 %v928, %v2529
      %v2545 = vmul.f32 %v929, %v2533
      %v2546 = vmul.f32 %v930, %v2537
      %2555 = vrot.lane.b32.xlu0 %v2539, 108
      %v2556 = vpop.permute.xlu0 %2555
      %2557 = vrot.lane.b32.xlu0 %v2540, 108
      %v2558 = vpop.permute.xlu0 %2557
      %2559 = vrot.lane.b32.xlu0 %v2541, 108
      %v2560 = vpop.permute.xlu0 %2559
      %2561 = vrot.lane.b32.xlu0 %v2542, 108
      %v2562 = vpop.permute.xlu0 %2561
      %2563 = vrot.lane.b32.xlu0 %v2543, 108
      %v2564 = vpop.permute.xlu0 %2563
      %2565 = vrot.lane.b32.xlu0 %v2544, 108
      %v2566 = vpop.permute.xlu0 %2565
      %2567 = vrot.lane.b32.xlu0 %v2545, 108
      %v2568 = vpop.permute.xlu0 %2567
      %2569 = vrot.lane.b32.xlu0 %v2546, 108
      %v2570 = vpop.permute.xlu0 %2569
      %v2579 = vadd.f32 %v2499, %v2556
      %v2580 = vadd.f32 %v2500, %v2558
      %v2581 = vadd.f32 %v2501, %v2560
      %v2582 = vadd.f32 %v2502, %v2562
      %v2583 = vadd.f32 %v2503, %v2564
      %v2584 = vadd.f32 %v2504, %v2566
      %v2585 = vadd.f32 %v2505, %v2568
      %v2586 = vadd.f32 %v2506, %v2570
      %2587 = vset.pattern.permute.xlu0 21
      %2588 = vperm.xlu0 %2587, %v915
      %v2589 = vpop.permute.xlu0 %2588
      %2591 = vset.pattern.permute.xlu0 21
      %2592 = vperm.xlu0 %2591, %v916
      %v2593 = vpop.permute.xlu0 %2592
      %2595 = vset.pattern.permute.xlu0 21
      %2596 = vperm.xlu0 %2595, %v917
      %v2597 = vpop.permute.xlu0 %2596
      %2599 = vset.pattern.permute.xlu0 21
      %2600 = vperm.xlu0 %2599, %v918
      %v2601 = vpop.permute.xlu0 %2600
      %2603 = vset.pattern.permute.xlu0 21
      %2604 = vperm.xlu0 %2603, %v919
      %v2605 = vpop.permute.xlu0 %2604
      %2607 = vset.pattern.permute.xlu0 21
      %2608 = vperm.xlu0 %2607, %v920
      %v2609 = vpop.permute.xlu0 %2608
      %2611 = vset.pattern.permute.xlu0 21
      %2612 = vperm.xlu0 %2611, %v921
      %v2613 = vpop.permute.xlu0 %2612
      %2615 = vset.pattern.permute.xlu0 21
      %2616 = vperm.xlu0 %2615, %v922
      %v2617 = vpop.permute.xlu0 %2616
      %v2619 = vmul.f32 %v923, %v2589
      %v2620 = vmul.f32 %v924, %v2593
      %v2621 = vmul.f32 %v925, %v2597
      %v2622 = vmul.f32 %v926, %v2601
      %v2623 = vmul.f32 %v927, %v2605
      %v2624 = vmul.f32 %v928, %v2609
      %v2625 = vmul.f32 %v929, %v2613
      %v2626 = vmul.f32 %v930, %v2617
      %2635 = vrot.lane.b32.xlu0 %v2619, 107
      %v2636 = vpop.permute.xlu0 %2635
      %2637 = vrot.lane.b32.xlu0 %v2620, 107
      %v2638 = vpop.permute.xlu0 %2637
      %2639 = vrot.lane.b32.xlu0 %v2621, 107
      %v2640 = vpop.permute.xlu0 %2639
      %2641 = vrot.lane.b32.xlu0 %v2622, 107
      %v2642 = vpop.permute.xlu0 %2641
      %2643 = vrot.lane.b32.xlu0 %v2623, 107
      %v2644 = vpop.permute.xlu0 %2643
      %2645 = vrot.lane.b32.xlu0 %v2624, 107
      %v2646 = vpop.permute.xlu0 %2645
      %2647 = vrot.lane.b32.xlu0 %v2625, 107
      %v2648 = vpop.permute.xlu0 %2647
      %2649 = vrot.lane.b32.xlu0 %v2626, 107
      %v2650 = vpop.permute.xlu0 %2649
      %v2659 = vadd.f32 %v2579, %v2636
      %v2660 = vadd.f32 %v2580, %v2638
      %v2661 = vadd.f32 %v2581, %v2640
      %v2662 = vadd.f32 %v2582, %v2642
      %v2663 = vadd.f32 %v2583, %v2644
      %v2664 = vadd.f32 %v2584, %v2646
      %v2665 = vadd.f32 %v2585, %v2648
      %v2666 = vadd.f32 %v2586, %v2650
      %2667 = vset.pattern.permute.xlu0 22
      %2668 = vperm.xlu0 %2667, %v915
      %v2669 = vpop.permute.xlu0 %2668
      %2671 = vset.pattern.permute.xlu0 22
      %2672 = vperm.xlu0 %2671, %v916
      %v2673 = vpop.permute.xlu0 %2672
      %2675 = vset.pattern.permute.xlu0 22
      %2676 = vperm.xlu0 %2675, %v917
      %v2677 = vpop.permute.xlu0 %2676
      %2679 = vset.pattern.permute.xlu0 22
      %2680 = vperm.xlu0 %2679, %v918
      %v2681 = vpop.permute.xlu0 %2680
      %2683 = vset.pattern.permute.xlu0 22
      %2684 = vperm.xlu0 %2683, %v919
      %v2685 = vpop.permute.xlu0 %2684
      %2687 = vset.pattern.permute.xlu0 22
      %2688 = vperm.xlu0 %2687, %v920
      %v2689 = vpop.permute.xlu0 %2688
      %2691 = vset.pattern.permute.xlu0 22
      %2692 = vperm.xlu0 %2691, %v921
      %v2693 = vpop.permute.xlu0 %2692
      %2695 = vset.pattern.permute.xlu0 22
      %2696 = vperm.xlu0 %2695, %v922
      %v2697 = vpop.permute.xlu0 %2696
      %v2699 = vmul.f32 %v923, %v2669
      %v2700 = vmul.f32 %v924, %v2673
      %v2701 = vmul.f32 %v925, %v2677
      %v2702 = vmul.f32 %v926, %v2681
      %v2703 = vmul.f32 %v927, %v2685
      %v2704 = vmul.f32 %v928, %v2689
      %v2705 = vmul.f32 %v929, %v2693
      %v2706 = vmul.f32 %v930, %v2697
      %2715 = vrot.lane.b32.xlu0 %v2699, 106
      %v2716 = vpop.permute.xlu0 %2715
      %2717 = vrot.lane.b32.xlu0 %v2700, 106
      %v2718 = vpop.permute.xlu0 %2717
      %2719 = vrot.lane.b32.xlu0 %v2701, 106
      %v2720 = vpop.permute.xlu0 %2719
      %2721 = vrot.lane.b32.xlu0 %v2702, 106
      %v2722 = vpop.permute.xlu0 %2721
      %2723 = vrot.lane.b32.xlu0 %v2703, 106
      %v2724 = vpop.permute.xlu0 %2723
      %2725 = vrot.lane.b32.xlu0 %v2704, 106
      %v2726 = vpop.permute.xlu0 %2725
      %2727 = vrot.lane.b32.xlu0 %v2705, 106
      %v2728 = vpop.permute.xlu0 %2727
      %2729 = vrot.lane.b32.xlu0 %v2706, 106
      %v2730 = vpop.permute.xlu0 %2729
      %v2739 = vadd.f32 %v2659, %v2716
      %v2740 = vadd.f32 %v2660, %v2718
      %v2741 = vadd.f32 %v2661, %v2720
      %v2742 = vadd.f32 %v2662, %v2722
      %v2743 = vadd.f32 %v2663, %v2724
      %v2744 = vadd.f32 %v2664, %v2726
      %v2745 = vadd.f32 %v2665, %v2728
      %v2746 = vadd.f32 %v2666, %v2730
      %2747 = vset.pattern.permute.xlu0 23
      %2748 = vperm.xlu0 %2747, %v915
      %v2749 = vpop.permute.xlu0 %2748
      %2751 = vset.pattern.permute.xlu0 23
      %2752 = vperm.xlu0 %2751, %v916
      %v2753 = vpop.permute.xlu0 %2752
      %2755 = vset.pattern.permute.xlu0 23
      %2756 = vperm.xlu0 %2755, %v917
      %v2757 = vpop.permute.xlu0 %2756
      %2759 = vset.pattern.permute.xlu0 23
      %2760 = vperm.xlu0 %2759, %v918
      %v2761 = vpop.permute.xlu0 %2760
      %2763 = vset.pattern.permute.xlu0 23
      %2764 = vperm.xlu0 %2763, %v919
      %v2765 = vpop.permute.xlu0 %2764
      %2767 = vset.pattern.permute.xlu0 23
      %2768 = vperm.xlu0 %2767, %v920
      %v2769 = vpop.permute.xlu0 %2768
      %2771 = vset.pattern.permute.xlu0 23
      %2772 = vperm.xlu0 %2771, %v921
      %v2773 = vpop.permute.xlu0 %2772
      %2775 = vset.pattern.permute.xlu0 23
      %2776 = vperm.xlu0 %2775, %v922
      %v2777 = vpop.permute.xlu0 %2776
      %v2779 = vmul.f32 %v923, %v2749
      %v2780 = vmul.f32 %v924, %v2753
      %v2781 = vmul.f32 %v925, %v2757
      %v2782 = vmul.f32 %v926, %v2761
      %v2783 = vmul.f32 %v927, %v2765
      %v2784 = vmul.f32 %v928, %v2769
      %v2785 = vmul.f32 %v929, %v2773
      %v2786 = vmul.f32 %v930, %v2777
      %2795 = vrot.lane.b32.xlu0 %v2779, 105
      %v2796 = vpop.permute.xlu0 %2795
      %2797 = vrot.lane.b32.xlu0 %v2780, 105
      %v2798 = vpop.permute.xlu0 %2797
      %2799 = vrot.lane.b32.xlu0 %v2781, 105
      %v2800 = vpop.permute.xlu0 %2799
      %2801 = vrot.lane.b32.xlu0 %v2782, 105
      %v2802 = vpop.permute.xlu0 %2801
      %2803 = vrot.lane.b32.xlu0 %v2783, 105
      %v2804 = vpop.permute.xlu0 %2803
      %2805 = vrot.lane.b32.xlu0 %v2784, 105
      %v2806 = vpop.permute.xlu0 %2805
      %2807 = vrot.lane.b32.xlu0 %v2785, 105
      %v2808 = vpop.permute.xlu0 %2807
      %2809 = vrot.lane.b32.xlu0 %v2786, 105
      %v2810 = vpop.permute.xlu0 %2809
      %v2819 = vadd.f32 %v2739, %v2796
      %v2820 = vadd.f32 %v2740, %v2798
      %v2821 = vadd.f32 %v2741, %v2800
      %v2822 = vadd.f32 %v2742, %v2802
      %v2823 = vadd.f32 %v2743, %v2804
      %v2824 = vadd.f32 %v2744, %v2806
      %v2825 = vadd.f32 %v2745, %v2808
      %v2826 = vadd.f32 %v2746, %v2810
      %2827 = vset.pattern.permute.xlu0 24
      %2828 = vperm.xlu0 %2827, %v915
      %v2829 = vpop.permute.xlu0 %2828
      %2831 = vset.pattern.permute.xlu0 24
      %2832 = vperm.xlu0 %2831, %v916
      %v2833 = vpop.permute.xlu0 %2832
      %2835 = vset.pattern.permute.xlu0 24
      %2836 = vperm.xlu0 %2835, %v917
      %v2837 = vpop.permute.xlu0 %2836
      %2839 = vset.pattern.permute.xlu0 24
      %2840 = vperm.xlu0 %2839, %v918
      %v2841 = vpop.permute.xlu0 %2840
      %2843 = vset.pattern.permute.xlu0 24
      %2844 = vperm.xlu0 %2843, %v919
      %v2845 = vpop.permute.xlu0 %2844
      %2847 = vset.pattern.permute.xlu0 24
      %2848 = vperm.xlu0 %2847, %v920
      %v2849 = vpop.permute.xlu0 %2848
      %2851 = vset.pattern.permute.xlu0 24
      %2852 = vperm.xlu0 %2851, %v921
      %v2853 = vpop.permute.xlu0 %2852
      %2855 = vset.pattern.permute.xlu0 24
      %2856 = vperm.xlu0 %2855, %v922
      %v2857 = vpop.permute.xlu0 %2856
      %v2859 = vmul.f32 %v923, %v2829
      %v2860 = vmul.f32 %v924, %v2833
      %v2861 = vmul.f32 %v925, %v2837
      %v2862 = vmul.f32 %v926, %v2841
      %v2863 = vmul.f32 %v927, %v2845
      %v2864 = vmul.f32 %v928, %v2849
      %v2865 = vmul.f32 %v929, %v2853
      %v2866 = vmul.f32 %v930, %v2857
      %2875 = vrot.lane.b32.xlu0 %v2859, 104
      %v2876 = vpop.permute.xlu0 %2875
      %2877 = vrot.lane.b32.xlu0 %v2860, 104
      %v2878 = vpop.permute.xlu0 %2877
      %2879 = vrot.lane.b32.xlu0 %v2861, 104
      %v2880 = vpop.permute.xlu0 %2879
      %2881 = vrot.lane.b32.xlu0 %v2862, 104
      %v2882 = vpop.permute.xlu0 %2881
      %2883 = vrot.lane.b32.xlu0 %v2863, 104
      %v2884 = vpop.permute.xlu0 %2883
      %2885 = vrot.lane.b32.xlu0 %v2864, 104
      %v2886 = vpop.permute.xlu0 %2885
      %2887 = vrot.lane.b32.xlu0 %v2865, 104
      %v2888 = vpop.permute.xlu0 %2887
      %2889 = vrot.lane.b32.xlu0 %v2866, 104
      %v2890 = vpop.permute.xlu0 %2889
      %v2899 = vadd.f32 %v2819, %v2876
      %v2900 = vadd.f32 %v2820, %v2878
      %v2901 = vadd.f32 %v2821, %v2880
      %v2902 = vadd.f32 %v2822, %v2882
      %v2903 = vadd.f32 %v2823, %v2884
      %v2904 = vadd.f32 %v2824, %v2886
      %v2905 = vadd.f32 %v2825, %v2888
      %v2906 = vadd.f32 %v2826, %v2890
      %2907 = vset.pattern.permute.xlu0 25
      %2908 = vperm.xlu0 %2907, %v915
      %v2909 = vpop.permute.xlu0 %2908
      %2911 = vset.pattern.permute.xlu0 25
      %2912 = vperm.xlu0 %2911, %v916
      %v2913 = vpop.permute.xlu0 %2912
      %2915 = vset.pattern.permute.xlu0 25
      %2916 = vperm.xlu0 %2915, %v917
      %v2917 = vpop.permute.xlu0 %2916
      %2919 = vset.pattern.permute.xlu0 25
      %2920 = vperm.xlu0 %2919, %v918
      %v2921 = vpop.permute.xlu0 %2920
      %2923 = vset.pattern.permute.xlu0 25
      %2924 = vperm.xlu0 %2923, %v919
      %v2925 = vpop.permute.xlu0 %2924
      %2927 = vset.pattern.permute.xlu0 25
      %2928 = vperm.xlu0 %2927, %v920
      %v2929 = vpop.permute.xlu0 %2928
      %2931 = vset.pattern.permute.xlu0 25
      %2932 = vperm.xlu0 %2931, %v921
      %v2933 = vpop.permute.xlu0 %2932
      %2935 = vset.pattern.permute.xlu0 25
      %2936 = vperm.xlu0 %2935, %v922
      %v2937 = vpop.permute.xlu0 %2936
      %v2939 = vmul.f32 %v923, %v2909
      %v2940 = vmul.f32 %v924, %v2913
      %v2941 = vmul.f32 %v925, %v2917
      %v2942 = vmul.f32 %v926, %v2921
      %v2943 = vmul.f32 %v927, %v2925
      %v2944 = vmul.f32 %v928, %v2929
      %v2945 = vmul.f32 %v929, %v2933
      %v2946 = vmul.f32 %v930, %v2937
      %2955 = vrot.lane.b32.xlu0 %v2939, 103
      %v2956 = vpop.permute.xlu0 %2955
      %2957 = vrot.lane.b32.xlu0 %v2940, 103
      %v2958 = vpop.permute.xlu0 %2957
      %2959 = vrot.lane.b32.xlu0 %v2941, 103
      %v2960 = vpop.permute.xlu0 %2959
      %2961 = vrot.lane.b32.xlu0 %v2942, 103
      %v2962 = vpop.permute.xlu0 %2961
      %2963 = vrot.lane.b32.xlu0 %v2943, 103
      %v2964 = vpop.permute.xlu0 %2963
      %2965 = vrot.lane.b32.xlu0 %v2944, 103
      %v2966 = vpop.permute.xlu0 %2965
      %2967 = vrot.lane.b32.xlu0 %v2945, 103
      %v2968 = vpop.permute.xlu0 %2967
      %2969 = vrot.lane.b32.xlu0 %v2946, 103
      %v2970 = vpop.permute.xlu0 %2969
      %v2979 = vadd.f32 %v2899, %v2956
      %v2980 = vadd.f32 %v2900, %v2958
      %v2981 = vadd.f32 %v2901, %v2960
      %v2982 = vadd.f32 %v2902, %v2962
      %v2983 = vadd.f32 %v2903, %v2964
      %v2984 = vadd.f32 %v2904, %v2966
      %v2985 = vadd.f32 %v2905, %v2968
      %v2986 = vadd.f32 %v2906, %v2970
      %2987 = vset.pattern.permute.xlu0 26
      %2988 = vperm.xlu0 %2987, %v915
      %v2989 = vpop.permute.xlu0 %2988
      %2991 = vset.pattern.permute.xlu0 26
      %2992 = vperm.xlu0 %2991, %v916
      %v2993 = vpop.permute.xlu0 %2992
      %2995 = vset.pattern.permute.xlu0 26
      %2996 = vperm.xlu0 %2995, %v917
      %v2997 = vpop.permute.xlu0 %2996
      %2999 = vset.pattern.permute.xlu0 26
      %3000 = vperm.xlu0 %2999, %v918
      %v3001 = vpop.permute.xlu0 %3000
      %3003 = vset.pattern.permute.xlu0 26
      %3004 = vperm.xlu0 %3003, %v919
      %v3005 = vpop.permute.xlu0 %3004
      %3007 = vset.pattern.permute.xlu0 26
      %3008 = vperm.xlu0 %3007, %v920
      %v3009 = vpop.permute.xlu0 %3008
      %3011 = vset.pattern.permute.xlu0 26
      %3012 = vperm.xlu0 %3011, %v921
      %v3013 = vpop.permute.xlu0 %3012
      %3015 = vset.pattern.permute.xlu0 26
      %3016 = vperm.xlu0 %3015, %v922
      %v3017 = vpop.permute.xlu0 %3016
      %v3019 = vmul.f32 %v923, %v2989
      %v3020 = vmul.f32 %v924, %v2993
      %v3021 = vmul.f32 %v925, %v2997
      %v3022 = vmul.f32 %v926, %v3001
      %v3023 = vmul.f32 %v927, %v3005
      %v3024 = vmul.f32 %v928, %v3009
      %v3025 = vmul.f32 %v929, %v3013
      %v3026 = vmul.f32 %v930, %v3017
      %3035 = vrot.lane.b32.xlu0 %v3019, 102
      %v3036 = vpop.permute.xlu0 %3035
      %3037 = vrot.lane.b32.xlu0 %v3020, 102
      %v3038 = vpop.permute.xlu0 %3037
      %3039 = vrot.lane.b32.xlu0 %v3021, 102
      %v3040 = vpop.permute.xlu0 %3039
      %3041 = vrot.lane.b32.xlu0 %v3022, 102
      %v3042 = vpop.permute.xlu0 %3041
      %3043 = vrot.lane.b32.xlu0 %v3023, 102
      %v3044 = vpop.permute.xlu0 %3043
      %3045 = vrot.lane.b32.xlu0 %v3024, 102
      %v3046 = vpop.permute.xlu0 %3045
      %3047 = vrot.lane.b32.xlu0 %v3025, 102
      %v3048 = vpop.permute.xlu0 %3047
      %3049 = vrot.lane.b32.xlu0 %v3026, 102
      %v3050 = vpop.permute.xlu0 %3049
      %v3059 = vadd.f32 %v2979, %v3036
      %v3060 = vadd.f32 %v2980, %v3038
      %v3061 = vadd.f32 %v2981, %v3040
      %v3062 = vadd.f32 %v2982, %v3042
      %v3063 = vadd.f32 %v2983, %v3044
      %v3064 = vadd.f32 %v2984, %v3046
      %v3065 = vadd.f32 %v2985, %v3048
      %v3066 = vadd.f32 %v2986, %v3050
      %3067 = vset.pattern.permute.xlu0 27
      %3068 = vperm.xlu0 %3067, %v915
      %v3069 = vpop.permute.xlu0 %3068
      %3071 = vset.pattern.permute.xlu0 27
      %3072 = vperm.xlu0 %3071, %v916
      %v3073 = vpop.permute.xlu0 %3072
      %3075 = vset.pattern.permute.xlu0 27
      %3076 = vperm.xlu0 %3075, %v917
      %v3077 = vpop.permute.xlu0 %3076
      %3079 = vset.pattern.permute.xlu0 27
      %3080 = vperm.xlu0 %3079, %v918
      %v3081 = vpop.permute.xlu0 %3080
      %3083 = vset.pattern.permute.xlu0 27
      %3084 = vperm.xlu0 %3083, %v919
      %v3085 = vpop.permute.xlu0 %3084
      %3087 = vset.pattern.permute.xlu0 27
      %3088 = vperm.xlu0 %3087, %v920
      %v3089 = vpop.permute.xlu0 %3088
      %3091 = vset.pattern.permute.xlu0 27
      %3092 = vperm.xlu0 %3091, %v921
      %v3093 = vpop.permute.xlu0 %3092
      %3095 = vset.pattern.permute.xlu0 27
      %3096 = vperm.xlu0 %3095, %v922
      %v3097 = vpop.permute.xlu0 %3096
      %v3099 = vmul.f32 %v923, %v3069
      %v3100 = vmul.f32 %v924, %v3073
      %v3101 = vmul.f32 %v925, %v3077
      %v3102 = vmul.f32 %v926, %v3081
      %v3103 = vmul.f32 %v927, %v3085
      %v3104 = vmul.f32 %v928, %v3089
      %v3105 = vmul.f32 %v929, %v3093
      %v3106 = vmul.f32 %v930, %v3097
      %3115 = vrot.lane.b32.xlu0 %v3099, 101
      %v3116 = vpop.permute.xlu0 %3115
      %3117 = vrot.lane.b32.xlu0 %v3100, 101
      %v3118 = vpop.permute.xlu0 %3117
      %3119 = vrot.lane.b32.xlu0 %v3101, 101
      %v3120 = vpop.permute.xlu0 %3119
      %3121 = vrot.lane.b32.xlu0 %v3102, 101
      %v3122 = vpop.permute.xlu0 %3121
      %3123 = vrot.lane.b32.xlu0 %v3103, 101
      %v3124 = vpop.permute.xlu0 %3123
      %3125 = vrot.lane.b32.xlu0 %v3104, 101
      %v3126 = vpop.permute.xlu0 %3125
      %3127 = vrot.lane.b32.xlu0 %v3105, 101
      %v3128 = vpop.permute.xlu0 %3127
      %3129 = vrot.lane.b32.xlu0 %v3106, 101
      %v3130 = vpop.permute.xlu0 %3129
      %v3139 = vadd.f32 %v3059, %v3116
      %v3140 = vadd.f32 %v3060, %v3118
      %v3141 = vadd.f32 %v3061, %v3120
      %v3142 = vadd.f32 %v3062, %v3122
      %v3143 = vadd.f32 %v3063, %v3124
      %v3144 = vadd.f32 %v3064, %v3126
      %v3145 = vadd.f32 %v3065, %v3128
      %v3146 = vadd.f32 %v3066, %v3130
      %3147 = vset.pattern.permute.xlu0 28
      %3148 = vperm.xlu0 %3147, %v915
      %v3149 = vpop.permute.xlu0 %3148
      %3151 = vset.pattern.permute.xlu0 28
      %3152 = vperm.xlu0 %3151, %v916
      %v3153 = vpop.permute.xlu0 %3152
      %3155 = vset.pattern.permute.xlu0 28
      %3156 = vperm.xlu0 %3155, %v917
      %v3157 = vpop.permute.xlu0 %3156
      %3159 = vset.pattern.permute.xlu0 28
      %3160 = vperm.xlu0 %3159, %v918
      %v3161 = vpop.permute.xlu0 %3160
      %3163 = vset.pattern.permute.xlu0 28
      %3164 = vperm.xlu0 %3163, %v919
      %v3165 = vpop.permute.xlu0 %3164
      %3167 = vset.pattern.permute.xlu0 28
      %3168 = vperm.xlu0 %3167, %v920
      %v3169 = vpop.permute.xlu0 %3168
      %3171 = vset.pattern.permute.xlu0 28
      %3172 = vperm.xlu0 %3171, %v921
      %v3173 = vpop.permute.xlu0 %3172
      %3175 = vset.pattern.permute.xlu0 28
      %3176 = vperm.xlu0 %3175, %v922
      %v3177 = vpop.permute.xlu0 %3176
      %v3179 = vmul.f32 %v923, %v3149
      %v3180 = vmul.f32 %v924, %v3153
      %v3181 = vmul.f32 %v925, %v3157
      %v3182 = vmul.f32 %v926, %v3161
      %v3183 = vmul.f32 %v927, %v3165
      %v3184 = vmul.f32 %v928, %v3169
      %v3185 = vmul.f32 %v929, %v3173
      %v3186 = vmul.f32 %v930, %v3177
      %3195 = vrot.lane.b32.xlu0 %v3179, 100
      %v3196 = vpop.permute.xlu0 %3195
      %3197 = vrot.lane.b32.xlu0 %v3180, 100
      %v3198 = vpop.permute.xlu0 %3197
      %3199 = vrot.lane.b32.xlu0 %v3181, 100
      %v3200 = vpop.permute.xlu0 %3199
      %3201 = vrot.lane.b32.xlu0 %v3182, 100
      %v3202 = vpop.permute.xlu0 %3201
      %3203 = vrot.lane.b32.xlu0 %v3183, 100
      %v3204 = vpop.permute.xlu0 %3203
      %3205 = vrot.lane.b32.xlu0 %v3184, 100
      %v3206 = vpop.permute.xlu0 %3205
      %3207 = vrot.lane.b32.xlu0 %v3185, 100
      %v3208 = vpop.permute.xlu0 %3207
      %3209 = vrot.lane.b32.xlu0 %v3186, 100
      %v3210 = vpop.permute.xlu0 %3209
      %v3219 = vadd.f32 %v3139, %v3196
      %v3220 = vadd.f32 %v3140, %v3198
      %v3221 = vadd.f32 %v3141, %v3200
      %v3222 = vadd.f32 %v3142, %v3202
      %v3223 = vadd.f32 %v3143, %v3204
      %v3224 = vadd.f32 %v3144, %v3206
      %v3225 = vadd.f32 %v3145, %v3208
      %v3226 = vadd.f32 %v3146, %v3210
      %3227 = vset.pattern.permute.xlu0 29
      %3228 = vperm.xlu0 %3227, %v915
      %v3229 = vpop.permute.xlu0 %3228
      %3231 = vset.pattern.permute.xlu0 29
      %3232 = vperm.xlu0 %3231, %v916
      %v3233 = vpop.permute.xlu0 %3232
      %3235 = vset.pattern.permute.xlu0 29
      %3236 = vperm.xlu0 %3235, %v917
      %v3237 = vpop.permute.xlu0 %3236
      %3239 = vset.pattern.permute.xlu0 29
      %3240 = vperm.xlu0 %3239, %v918
      %v3241 = vpop.permute.xlu0 %3240
      %3243 = vset.pattern.permute.xlu0 29
      %3244 = vperm.xlu0 %3243, %v919
      %v3245 = vpop.permute.xlu0 %3244
      %3247 = vset.pattern.permute.xlu0 29
      %3248 = vperm.xlu0 %3247, %v920
      %v3249 = vpop.permute.xlu0 %3248
      %3251 = vset.pattern.permute.xlu0 29
      %3252 = vperm.xlu0 %3251, %v921
      %v3253 = vpop.permute.xlu0 %3252
      %3255 = vset.pattern.permute.xlu0 29
      %3256 = vperm.xlu0 %3255, %v922
      %v3257 = vpop.permute.xlu0 %3256
      %v3259 = vmul.f32 %v923, %v3229
      %v3260 = vmul.f32 %v924, %v3233
      %v3261 = vmul.f32 %v925, %v3237
      %v3262 = vmul.f32 %v926, %v3241
      %v3263 = vmul.f32 %v927, %v3245
      %v3264 = vmul.f32 %v928, %v3249
      %v3265 = vmul.f32 %v929, %v3253
      %v3266 = vmul.f32 %v930, %v3257
      %3275 = vrot.lane.b32.xlu0 %v3259, 99
      %v3276 = vpop.permute.xlu0 %3275
      %3277 = vrot.lane.b32.xlu0 %v3260, 99
      %v3278 = vpop.permute.xlu0 %3277
      %3279 = vrot.lane.b32.xlu0 %v3261, 99
      %v3280 = vpop.permute.xlu0 %3279
      %3281 = vrot.lane.b32.xlu0 %v3262, 99
      %v3282 = vpop.permute.xlu0 %3281
      %3283 = vrot.lane.b32.xlu0 %v3263, 99
      %v3284 = vpop.permute.xlu0 %3283
      %3285 = vrot.lane.b32.xlu0 %v3264, 99
      %v3286 = vpop.permute.xlu0 %3285
      %3287 = vrot.lane.b32.xlu0 %v3265, 99
      %v3288 = vpop.permute.xlu0 %3287
      %3289 = vrot.lane.b32.xlu0 %v3266, 99
      %v3290 = vpop.permute.xlu0 %3289
      %v3299 = vadd.f32 %v3219, %v3276
      %v3300 = vadd.f32 %v3220, %v3278
      %v3301 = vadd.f32 %v3221, %v3280
      %v3302 = vadd.f32 %v3222, %v3282
      %v3303 = vadd.f32 %v3223, %v3284
      %v3304 = vadd.f32 %v3224, %v3286
      %v3305 = vadd.f32 %v3225, %v3288
      %v3306 = vadd.f32 %v3226, %v3290
      %3307 = vset.pattern.permute.xlu0 30
      %3308 = vperm.xlu0 %3307, %v915
      %v3309 = vpop.permute.xlu0 %3308
      %3311 = vset.pattern.permute.xlu0 30
      %3312 = vperm.xlu0 %3311, %v916
      %v3313 = vpop.permute.xlu0 %3312
      %3315 = vset.pattern.permute.xlu0 30
      %3316 = vperm.xlu0 %3315, %v917
      %v3317 = vpop.permute.xlu0 %3316
      %3319 = vset.pattern.permute.xlu0 30
      %3320 = vperm.xlu0 %3319, %v918
      %v3321 = vpop.permute.xlu0 %3320
      %3323 = vset.pattern.permute.xlu0 30
      %3324 = vperm.xlu0 %3323, %v919
      %v3325 = vpop.permute.xlu0 %3324
      %3327 = vset.pattern.permute.xlu0 30
      %3328 = vperm.xlu0 %3327, %v920
      %v3329 = vpop.permute.xlu0 %3328
      %3331 = vset.pattern.permute.xlu0 30
      %3332 = vperm.xlu0 %3331, %v921
      %v3333 = vpop.permute.xlu0 %3332
      %3335 = vset.pattern.permute.xlu0 30
      %3336 = vperm.xlu0 %3335, %v922
      %v3337 = vpop.permute.xlu0 %3336
      %v3339 = vmul.f32 %v923, %v3309
      %v3340 = vmul.f32 %v924, %v3313
      %v3341 = vmul.f32 %v925, %v3317
      %v3342 = vmul.f32 %v926, %v3321
      %v3343 = vmul.f32 %v927, %v3325
      %v3344 = vmul.f32 %v928, %v3329
      %v3345 = vmul.f32 %v929, %v3333
      %v3346 = vmul.f32 %v930, %v3337
      %3355 = vrot.lane.b32.xlu0 %v3339, 98
      %v3356 = vpop.permute.xlu0 %3355
      %3357 = vrot.lane.b32.xlu0 %v3340, 98
      %v3358 = vpop.permute.xlu0 %3357
      %3359 = vrot.lane.b32.xlu0 %v3341, 98
      %v3360 = vpop.permute.xlu0 %3359
      %3361 = vrot.lane.b32.xlu0 %v3342, 98
      %v3362 = vpop.permute.xlu0 %3361
      %3363 = vrot.lane.b32.xlu0 %v3343, 98
      %v3364 = vpop.permute.xlu0 %3363
      %3365 = vrot.lane.b32.xlu0 %v3344, 98
      %v3366 = vpop.permute.xlu0 %3365
      %3367 = vrot.lane.b32.xlu0 %v3345, 98
      %v3368 = vpop.permute.xlu0 %3367
      %3369 = vrot.lane.b32.xlu0 %v3346, 98
      %v3370 = vpop.permute.xlu0 %3369
      %v3379 = vadd.f32 %v3299, %v3356
      %v3380 = vadd.f32 %v3300, %v3358
      %v3381 = vadd.f32 %v3301, %v3360
      %v3382 = vadd.f32 %v3302, %v3362
      %v3383 = vadd.f32 %v3303, %v3364
      %v3384 = vadd.f32 %v3304, %v3366
      %v3385 = vadd.f32 %v3305, %v3368
      %v3386 = vadd.f32 %v3306, %v3370
      %v3387 = vld [vmem:[%s6] sm:$0xff]
      %v3388 = vld [vmem:[%s6 + $0x8] sm:$0xff]
      %v3389 = vld [vmem:[%s6 + $0x10] sm:$0xff]
      %v3390 = vld [vmem:[%s6 + $0x18] sm:$0xff]
      %v3391 = vld [vmem:[%s6 + $0x20] sm:$0xff]
      %v3392 = vld [vmem:[%s6 + $0x28] sm:$0xff]
      %v3393 = vld [vmem:[%s6 + $0x30] sm:$0xff]
      %v3394 = vld [vmem:[%s6 + $0x38] sm:$0xff]
      %3396 = vset.pattern.permute.xlu0 0
      %3397 = vperm.xlu0 %3396, %v3387
      %v3398 = vpop.permute.xlu0 %3397
      %3401 = vset.pattern.permute.xlu0 0
      %3402 = vperm.xlu0 %3401, %v3388
      %v3403 = vpop.permute.xlu0 %3402
      %3406 = vset.pattern.permute.xlu0 0
      %3407 = vperm.xlu0 %3406, %v3389
      %v3408 = vpop.permute.xlu0 %3407
      %3411 = vset.pattern.permute.xlu0 0
      %3412 = vperm.xlu0 %3411, %v3390
      %v3413 = vpop.permute.xlu0 %3412
      %3416 = vset.pattern.permute.xlu0 0
      %3417 = vperm.xlu0 %3416, %v3391
      %v3418 = vpop.permute.xlu0 %3417
      %3421 = vset.pattern.permute.xlu0 0
      %3422 = vperm.xlu0 %3421, %v3392
      %v3423 = vpop.permute.xlu0 %3422
      %3426 = vset.pattern.permute.xlu0 0
      %3427 = vperm.xlu0 %3426, %v3393
      %v3428 = vpop.permute.xlu0 %3427
      %3431 = vset.pattern.permute.xlu0 0
      %3432 = vperm.xlu0 %3431, %v3394
      %v3433 = vpop.permute.xlu0 %3432
      %v3435 = vadd.f32 %v3379, %v3398
      %v3436 = vadd.f32 %v3380, %v3403
      %v3437 = vadd.f32 %v3381, %v3408
      %v3438 = vadd.f32 %v3382, %v3413
      %v3439 = vadd.f32 %v3383, %v3418
      %v3440 = vadd.f32 %v3384, %v3423
      %v3441 = vadd.f32 %v3385, %v3428
      %v3442 = vadd.f32 %v3386, %v3433
      %v3443 = vld [vmem:[%s7] sm:$0xff]
      %v3444 = vld [vmem:[%s7 + $0x8] sm:$0xff]
      %v3445 = vld [vmem:[%s7 + $0x10] sm:$0xff]
      %v3446 = vld [vmem:[%s7 + $0x18] sm:$0xff]
      %v3447 = vld [vmem:[%s7 + $0x20] sm:$0xff]
      %v3448 = vld [vmem:[%s7 + $0x28] sm:$0xff]
      %v3449 = vld [vmem:[%s7 + $0x30] sm:$0xff]
      %v3450 = vld [vmem:[%s7 + $0x38] sm:$0xff]
      %3452 = vset.pattern.permute.xlu0 0
      %3453 = vperm.xlu0 %3452, %v3443
      %v3454 = vpop.permute.xlu0 %3453
      %3457 = vset.pattern.permute.xlu0 0
      %3458 = vperm.xlu0 %3457, %v3444
      %v3459 = vpop.permute.xlu0 %3458
      %3462 = vset.pattern.permute.xlu0 0
      %3463 = vperm.xlu0 %3462, %v3445
      %v3464 = vpop.permute.xlu0 %3463
      %3467 = vset.pattern.permute.xlu0 0
      %3468 = vperm.xlu0 %3467, %v3446
      %v3469 = vpop.permute.xlu0 %3468
      %3472 = vset.pattern.permute.xlu0 0
      %3473 = vperm.xlu0 %3472, %v3447
      %v3474 = vpop.permute.xlu0 %3473
      %3477 = vset.pattern.permute.xlu0 0
      %3478 = vperm.xlu0 %3477, %v3448
      %v3479 = vpop.permute.xlu0 %3478
      %3482 = vset.pattern.permute.xlu0 0
      %3483 = vperm.xlu0 %3482, %v3449
      %v3484 = vpop.permute.xlu0 %3483
      %3487 = vset.pattern.permute.xlu0 0
      %3488 = vperm.xlu0 %3487, %v3450
      %v3489 = vpop.permute.xlu0 %3488
      %v3491 = vmul.f32 %v3435, %v3454
      %v3492 = vmul.f32 %v3436, %v3459
      %v3493 = vmul.f32 %v3437, %v3464
      %v3494 = vmul.f32 %v3438, %v3469
      %v3495 = vmul.f32 %v3439, %v3474
      %v3496 = vmul.f32 %v3440, %v3479
      %v3497 = vmul.f32 %v3441, %v3484
      %v3498 = vmul.f32 %v3442, %v3489
      %v3499 = vld [vmem:[%s8] sm:$0xff]
      %v3500 = vld [vmem:[%s8 + $0x8] sm:$0xff]
      %v3501 = vld [vmem:[%s8 + $0x10] sm:$0xff]
      %v3502 = vld [vmem:[%s8 + $0x18] sm:$0xff]
      %v3503 = vld [vmem:[%s8 + $0x20] sm:$0xff]
      %v3504 = vld [vmem:[%s8 + $0x28] sm:$0xff]
      %v3505 = vld [vmem:[%s8 + $0x30] sm:$0xff]
      %v3506 = vld [vmem:[%s8 + $0x38] sm:$0xff]
      %3508 = vset.pattern.permute.xlu0 0
      %3509 = vperm.xlu0 %3508, %v3499
      %v3510 = vpop.permute.xlu0 %3509
      %3513 = vset.pattern.permute.xlu0 0
      %3514 = vperm.xlu0 %3513, %v3500
      %v3515 = vpop.permute.xlu0 %3514
      %3518 = vset.pattern.permute.xlu0 0
      %3519 = vperm.xlu0 %3518, %v3501
      %v3520 = vpop.permute.xlu0 %3519
      %3523 = vset.pattern.permute.xlu0 0
      %3524 = vperm.xlu0 %3523, %v3502
      %v3525 = vpop.permute.xlu0 %3524
      %3528 = vset.pattern.permute.xlu0 0
      %3529 = vperm.xlu0 %3528, %v3503
      %v3530 = vpop.permute.xlu0 %3529
      %3533 = vset.pattern.permute.xlu0 0
      %3534 = vperm.xlu0 %3533, %v3504
      %v3535 = vpop.permute.xlu0 %3534
      %3538 = vset.pattern.permute.xlu0 0
      %3539 = vperm.xlu0 %3538, %v3505
      %v3540 = vpop.permute.xlu0 %3539
      %3543 = vset.pattern.permute.xlu0 0
      %3544 = vperm.xlu0 %3543, %v3506
      %v3545 = vpop.permute.xlu0 %3544
      %v3547 = vadd.f32 %v3491, %v3510
      %v3548 = vadd.f32 %v3492, %v3515
      %v3549 = vadd.f32 %v3493, %v3520
      %v3550 = vadd.f32 %v3494, %v3525
      %v3551 = vadd.f32 %v3495, %v3530
      %v3552 = vadd.f32 %v3496, %v3535
      %v3553 = vadd.f32 %v3497, %v3540
      %v3554 = vadd.f32 %v3498, %v3545
      %v3555 = vxor.u32 %v3547, 2147483648
      %v3556 = vxor.u32 %v3548, 2147483648
      %v3557 = vxor.u32 %v3549, 2147483648
      %v3558 = vxor.u32 %v3550, 2147483648
      %v3559 = vxor.u32 %v3551, 2147483648
      %v3560 = vxor.u32 %v3552, 2147483648
      %v3561 = vxor.u32 %v3553, 2147483648
      %v3562 = vxor.u32 %v3554, 2147483648
      %v3563 = vmul.f32 %v3555, 1.442695
      %v3564 = vpow.pop %v3563
      %v3565 = vmul.f32 %v3556, 1.442695
      %v3566 = vpow.pop %v3565
      %v3567 = vmul.f32 %v3557, 1.442695
      %v3568 = vpow.pop %v3567
      %v3569 = vmul.f32 %v3558, 1.442695
      %v3570 = vpow.pop %v3569
      %v3571 = vmul.f32 %v3559, 1.442695
      %v3572 = vpow.pop %v3571
      %v3573 = vmul.f32 %v3560, 1.442695
      %v3574 = vpow.pop %v3573
      %v3575 = vmul.f32 %v3561, 1.442695
      %v3576 = vpow.pop %v3575
      %v3577 = vmul.f32 %v3562, 1.442695
      %v3578 = vpow.pop %v3577
      %v3579 = vadd.f32 %v3564, 1.0
      %v3580 = vadd.f32 %v3566, 1.0
      %v3581 = vadd.f32 %v3568, 1.0
      %v3582 = vadd.f32 %v3570, 1.0
      %v3583 = vadd.f32 %v3572, 1.0
      %v3584 = vadd.f32 %v3574, 1.0
      %v3585 = vadd.f32 %v3576, 1.0
      %v3586 = vadd.f32 %v3578, 1.0
      %v3587 = vrcp.pop %v3579
      %v3588 = vmul.f32 1.0, %v3587
      %v3589 = vrcp.pop %v3580
      %v3590 = vmul.f32 1.0, %v3589
      %v3591 = vrcp.pop %v3581
      %v3592 = vmul.f32 1.0, %v3591
      %v3593 = vrcp.pop %v3582
      %v3594 = vmul.f32 1.0, %v3593
      %v3595 = vrcp.pop %v3583
      %v3596 = vmul.f32 1.0, %v3595
      %v3597 = vrcp.pop %v3584
      %v3598 = vmul.f32 1.0, %v3597
      %v3599 = vrcp.pop %v3585
      %v3600 = vmul.f32 1.0, %v3599
      %v3601 = vrcp.pop %v3586
      %v3602 = vmul.f32 1.0, %v3601
      %v3603 = vmul.f32 %v3547, %v3588
      %v3604 = vmul.f32 %v3548, %v3590
      %v3605 = vmul.f32 %v3549, %v3592
      %v3606 = vmul.f32 %v3550, %v3594
      %v3607 = vmul.f32 %v3551, %v3596
      %v3608 = vmul.f32 %v3552, %v3598
      %v3609 = vmul.f32 %v3553, %v3600
      %v3610 = vmul.f32 %v3554, %v3602
      %v3611 = vld [vmem:[%s9] sm:$0xff]
      %v3612 = vld [vmem:[%s9 + $0x8] sm:$0xff]
      %v3613 = vld [vmem:[%s9 + $0x10] sm:$0xff]
      %v3614 = vld [vmem:[%s9 + $0x18] sm:$0xff]
      %v3615 = vld [vmem:[%s10] sm:$0xff]
      %v3616 = vld [vmem:[%s10 + $0x8] sm:$0xff]
      %v3617 = vld [vmem:[%s10 + $0x10] sm:$0xff]
      %v3618 = vld [vmem:[%s10 + $0x18] sm:$0xff]
      %3620 = vset.pattern.permute.xlu0 0
      %3621 = vperm.xlu0 %3620, %v3615
      %v3622 = vpop.permute.xlu0 %3621
      %3625 = vset.pattern.permute.xlu0 0
      %3626 = vperm.xlu0 %3625, %v3616
      %v3627 = vpop.permute.xlu0 %3626
      %3630 = vset.pattern.permute.xlu0 0
      %3631 = vperm.xlu0 %3630, %v3617
      %v3632 = vpop.permute.xlu0 %3631
      %3635 = vset.pattern.permute.xlu0 0
      %3636 = vperm.xlu0 %3635, %v3618
      %v3637 = vpop.permute.xlu0 %3636
      %vm3639 = vcmask 523264
      %v3641 = vsel %vm3639, %v3611, 0
      %v3644 = vsel %vm3639, %v3612, 0
      %v3647 = vsel %vm3639, %v3613, 0
      %v3650 = vsel %vm3639, %v3614, 0
      %3652 = vmatprep.subr.mxu0 0.0
      %3653 = vmatpush1.msra.mxu0 %v3603
      %3654 = vmatprep.subr.mxu0 0.0
      %3655 = vmatpush1.msra.mxu0 %v3604
      %3656 = vmatprep.subr.mxu0 0.0
      %3657 = vmatpush1.msra.mxu0 %v3605
      %3658 = vmatprep.subr.mxu0 0.0
      %3659 = vmatpush1.msra.mxu0 %v3606
      %3660 = vmatprep.subr.mxu0 0.0
      %3661 = vmatpush1.msra.mxu0 %v3607
      %3662 = vmatprep.subr.mxu0 0.0
      %3663 = vmatpush1.msra.mxu0 %v3608
      %3664 = vmatprep.subr.mxu0 0.0
      %3665 = vmatpush1.msra.mxu0 %v3609
      %3666 = vmatprep.subr.mxu0 0.0
      %3667 = vmatpush1.msra.mxu0 %v3610
      %3668 = vmatprep.subr.mxu0 0.0
      %3669 = vmatpush1.msra.mxu0 0.0
      %3670 = vmatprep.subr.mxu0 0.0
      %3671 = vmatpush1.msra.mxu0 0.0
      %3672 = vmatprep.subr.mxu0 0.0
      %3673 = vmatpush1.msra.mxu0 0.0
      %3674 = vmatprep.subr.mxu0 0.0
      %3675 = vmatpush1.msra.mxu0 0.0
      %3676 = vmatprep.subr.mxu0 0.0
      %3677 = vmatpush1.msra.mxu0 0.0
      %3678 = vmatprep.subr.mxu0 0.0
      %3679 = vmatpush1.msra.mxu0 0.0
      %3680 = vmatprep.subr.mxu0 0.0
      %3681 = vmatpush1.msra.mxu0 0.0
      %3682 = vmatprep.subr.mxu0 0.0
      %3683 = vmatpush1.msra.mxu0 0.0
      %3684 = vmatprep.subr.mxu0 0.0
      %3685 = vmatpush1.msra.mxu0 0.0
      %3686 = vmatprep.subr.mxu0 0.0
      %3687 = vmatpush1.msra.mxu0 0.0
      %3688 = vmatprep.subr.mxu0 0.0
      %3689 = vmatpush1.msra.mxu0 0.0
      %3690 = vmatprep.subr.mxu0 0.0
      %3691 = vmatpush1.msra.mxu0 0.0
      %3692 = vmatprep.subr.mxu0 0.0
      %3693 = vmatpush1.msra.mxu0 0.0
      %3694 = vmatprep.subr.mxu0 0.0
      %3695 = vmatpush1.msra.mxu0 0.0
      %3696 = vmatprep.subr.mxu0 0.0
      %3697 = vmatpush1.msra.mxu0 0.0
      %3698 = vmatprep.subr.mxu0 0.0
      %3699 = vmatpush1.msra.mxu0 0.0
      %3700 = vmatprep.subr.mxu0 0.0
      %3701 = vmatpush1.msra.mxu0 0.0
      %3702 = vmatprep.subr.mxu0 0.0
      %3703 = vmatpush1.msra.mxu0 0.0
      %3704 = vmatprep.subr.mxu0 0.0
      %3705 = vmatpush1.msra.mxu0 0.0
      %3706 = vmatprep.subr.mxu0 0.0
      %3707 = vmatpush1.msra.mxu0 0.0
      %3708 = vmatprep.subr.mxu0 0.0
      %3709 = vmatpush1.msra.mxu0 0.0
      %3710 = vmatprep.subr.mxu0 0.0
      %3711 = vmatpush1.msra.mxu0 0.0
      %3712 = vmatprep.subr.mxu0 0.0
      %3713 = vmatpush1.msra.mxu0 0.0
      %3714 = vmatprep.subr.mxu0 0.0
      %3715 = vmatpush1.msra.mxu0 0.0
      %3716 = vmatprep.mubr.f32.mxu0 0.0
      %3717 = vmatmul.mubr.f32.gmra.mrb[0].mxu0 %v3641
      %v3718 = vpop.f32.mrb[0].mxu0
      %v3719 = vadd.f32 %v3622, %v3718
      %v3720 = vpop.f32.mrb[0].mxu0
      %3721 = vmatprep.mubr.f32.mxu0 0.0
      %3722 = vmatmul.mubr.f32.gmra.mrb[0].mxu0 %v3644
      %v3723 = vpop.f32.mrb[0].mxu0
      %v3724 = vadd.f32 %v3627, %v3723
      %v3725 = vpop.f32.mrb[0].mxu0
      %3726 = vmatprep.mubr.f32.mxu0 0.0
      %3727 = vmatmul.mubr.f32.gmra.mrb[0].mxu0 %v3647
      %v3728 = vpop.f32.mrb[0].mxu0
      %v3729 = vadd.f32 %v3632, %v3728
      %v3730 = vpop.f32.mrb[0].mxu0
      %3731 = vmatprep.mubr.f32.mxu0 0.0
      %3732 = vmatmul.mubr.f32.gmra.mrb[0].mxu0 %v3650
      %v3733 = vpop.f32.mrb[0].mxu0
      %v3734 = vadd.f32 %v3637, %v3733
      %v3735 = vpop.f32.mrb[0].mxu0
      %3736 = vdwg.mxu0
      %3737 = vst.msk [vmem:[%s388] sm:$0xff] %vm394, %v3719
      %3738 = vst.msk [vmem:[%s388 + $0x8] sm:$0xff] %vm394, %v3724
      %3739 = vst.msk [vmem:[%s388 + $0x10] sm:$0xff] %vm394, %v3729
      %3740 = vst.msk [vmem:[%s388 + $0x18] sm:$0xff] %vm394, %v3734
      %s3741 = smul.u32 4, %s22
      %p3742 = scmp.lt.s32.totalorder %s3741, 7
      %s3743 = scalar_select %p3742, %s3741, 7
      %s3744 = smul.addr %s3743, 8
      %s3745 = scalar_lea.vmem %s11, %s3744
      // Predicated region
      $region65: #{tpu_custom_call.1} parent=63 // pred_check
        %p3746 = pneg %p276
      $region66: #{tpu_custom_call.1} parent=63 // pred_check_branch
        %3748 = sbr.rel (%p3746) target = $region68
      $region67: #{tpu_custom_call.1} parent=63 // pred_region
        %s3749 = smul.u32 4, %s22
      $region68: #{tpu_custom_call.1} parent=63 // pred_fallthru
        _
    $region64: #{tpu_custom_call.1} parent=5 // pred_fallthru
      _
    %p3750 = scmp.le.s32.totalorder 2, %s17
    // Predicated region
    $region69: #{tpu_custom_call.1} parent=5 // pred_check
      %p3751 = pneg %p3750
    $region70: #{tpu_custom_call.1} parent=5 // pred_check_branch
      %3753 = sbr.rel (%p3751) target = $region72
    $region71: #{tpu_custom_call.1} parent=5 // pred_region
      %s3754 = ssub.s32 %s17, 2
      // Predicated region
      $region73: #{tpu_custom_call.1} parent=71 // pred_check
        %p3755 = pneg %p282
      $region74: #{tpu_custom_call.1} parent=71 // pred_check_branch
        %3757 = sbr.rel (%p3755) target = $region76
      $region75: #{tpu_custom_call.1} parent=71 // pred_region
        %s3758 = smul.u32 4, %s23
        %p3759 = scmp.lt.s32.totalorder %s3758, 7
        %s3760 = scalar_select %p3759, %s3758, 7
        %s3761 = smul.addr %s3760, 8
        %s3762 = scalar_lea.vmem %s11, %s3761
      $region76: #{tpu_custom_call.1} parent=71 // pred_fallthru
        _
    $region72: #{tpu_custom_call.1} parent=5 // pred_fallthru
      _
  $region6: #{tpu_custom_call.1} parent=0 // loop_footer
    %s21 = sadd.s32 1, %s17
  $region7: #{tpu_custom_call.1} parent=0 // loop_footer_branch
    %16 = sbr.rel target = $region3
  $region8: #{tpu_custom_call.1} parent=0 // loop_exit
    _

</llo_original>
